<compile_context>
chip_gen: v5e
topology: v5e:2x2
jax: 0.10.0
libtpu: 0.0.40
codegen_flags: <defaults>
</compile_context>

<pallas_src>
import jax
import jax.numpy as jnp
from jax.experimental import pallas as pl
from jax.experimental.pallas import tpu as pltpu


def _round_up(x, m):
    return ((x + m - 1) // m) * m


def _mlp_kernel(x_ref, w1_ref, b1_ref, w2_ref, b2_ref, w3_ref, b3_ref, o_ref):
    # x / weights arrive as bf16 (halved HBM traffic, native MXU dtype); every
    # dot accumulates in f32. Bias-add + ReLU run in f32 vregs and cast back to
    # bf16 only at the next MXU input.
    h = jnp.dot(x_ref[...], w1_ref[...], preferred_element_type=jnp.float32)
    h = jnp.maximum(h + b1_ref[...], 0.0).astype(jnp.bfloat16)
    h = jnp.dot(h, w2_ref[...], preferred_element_type=jnp.float32)
    h = jnp.maximum(h + b2_ref[...], 0.0).astype(jnp.bfloat16)
    o_ref[...] = (
        jnp.dot(h, w3_ref[...], preferred_element_type=jnp.float32) + b3_ref[...]
    ).astype(o_ref.dtype)


# Flipped to False on the first call if this JAX build rejects pl.Buffered(1)
# as a pipeline_mode for pallas_call BlockSpecs.
_SINGLE_BUFFER_OK = True


def _const_spec(shape, single_buffer):
    # Weights/biases have a constant index_map (same block every grid step):
    # single-buffer them so they stay resident without a useless second copy.
    if single_buffer:
        return pl.BlockSpec(shape, lambda i: (0, 0), pipeline_mode=pl.Buffered(1))
    return pl.BlockSpec(shape, lambda i: (0, 0))


def _build_call(batch_tile, in_dim_p, E_p, n_tiles, single_buffer):
    in_specs = [
        pl.BlockSpec((batch_tile, in_dim_p), lambda i: (i, 0)),  # x (pipelined)
        _const_spec((in_dim_p, E_p), single_buffer),             # w1
        _const_spec((1, E_p), single_buffer),                    # b1
        _const_spec((E_p, E_p), single_buffer),                  # w2
        _const_spec((1, E_p), single_buffer),                    # b2
        _const_spec((E_p, E_p), single_buffer),                  # w3
        _const_spec((1, E_p), single_buffer),                    # b3
    ]
    out_spec = pl.BlockSpec((batch_tile, E_p), lambda i: (i, 0))

    B_p = n_tiles * batch_tile
    flops = 2 * B_p * (in_dim_p * E_p + 2 * E_p * E_p)
    bytes_accessed = (
        2 * B_p * in_dim_p                          # x (bf16)
        + 2 * (in_dim_p * E_p + 2 * E_p * E_p)      # weights (bf16)
        + 4 * 3 * E_p                               # biases (f32)
        + 4 * B_p * E_p                             # output (f32)
    )

    # VMEM budget: activations double-buffered, weights single/double-buffered,
    # plus headroom for the f32 intermediates.
    wbuf = 1 if single_buffer else 2
    vmem_bytes = (
        2 * (batch_tile * in_dim_p * 2)
        + 2 * (batch_tile * E_p * 4)
        + wbuf * ((in_dim_p * E_p + 2 * E_p * E_p) * 2 + 3 * E_p * 4)
        + 4 * batch_tile * E_p * 4
    )
    # Keep the scoped limit comfortably under v7x's 64 MiB physical VMEM.
    vmem_limit = int(min(max(2 * vmem_bytes, 32 << 20), 48 << 20))

    return pl.pallas_call(
        _mlp_kernel,
        out_shape=jax.ShapeDtypeStruct((B_p, E_p), jnp.float32),
        grid_spec=pltpu.PrefetchScalarGridSpec(
            num_scalar_prefetch=0,
            grid=(n_tiles,),
            in_specs=in_specs,
            out_specs=out_spec,
        ),
        compiler_params=pltpu.CompilerParams(
            dimension_semantics=("parallel",),   # batch tiles shard across TCs
            vmem_limit_bytes=vmem_limit,
        ),
        cost_estimate=pl.CostEstimate(
            flops=int(flops),
            transcendentals=0,
            bytes_accessed=int(bytes_accessed),
        ),
    )


def fc_representation_forward(obs, params, *, batch_tile=None):
    """Forward pass of FullyConnectedRepresentationModel.

    obs: (B, in_dim) float32.
    params: f32 weights in (in, out) layout (transpose of torch Linear.weight)
            and (1, out) biases.
    Returns (B, embedding_size) float32.
    """
    global _SINGLE_BUFFER_OK

    B, in_dim = obs.shape
    E = params["w1"].shape[1]

    # Lane-dense padding: last dims to multiples of 128 so MXU tiles are filled
    # and output stores are full (unmasked) vector stores.
    in_dim_p = _round_up(in_dim, 128)
    E_p = _round_up(E, 128)

    # Batch tiling: 8-row aligned, target <=512-row tiles with >=2 grid steps
    # whenever the batch allows, so DMAs pipeline and both v7x cores get work.
    if batch_tile is None:
        b8 = _round_up(B, 8)
        half = max(8, ((b8 // 2) // 8) * 8)
        batch_tile = min(512, half) if b8 >= 16 else b8
    batch_tile = _round_up(batch_tile, 8)
    n_tiles = max(1, pl.cdiv(B, batch_tile))
    B_p = n_tiles * batch_tile

    f32, bf16 = jnp.float32, jnp.bfloat16

    # Zero-pad + cast at the pallas_call boundary. Padded rows/columns
    # contribute exactly zero through the MLP and are sliced away below.
    x_p = jnp.zeros((B_p, in_dim_p), bf16).at[:B, :in_dim].set(obs.astype(bf16))
    w1 = jnp.zeros((in_dim_p, E_p), bf16).at[:in_dim, :E].set(params["w1"].astype(bf16))
    w2 = jnp.zeros((E_p, E_p), bf16).at[:E, :E].set(params["w2"].astype(bf16))
    w3 = jnp.zeros((E_p, E_p), bf16).at[:E, :E].set(params["w3"].astype(bf16))
    b1 = jnp.zeros((1, E_p), f32).at[:, :E].set(params["b1"].astype(f32))
    b2 = jnp.zeros((1, E_p), f32).at[:, :E].set(params["b2"].astype(f32))
    b3 = jnp.zeros((1, E_p), f32).at[:, :E].set(params["b3"].astype(f32))

    args = (x_p, w1, b1, w2, b2, w3, b3)

    if _SINGLE_BUFFER_OK:
        try:
            out_p = _build_call(batch_tile, in_dim_p, E_p, n_tiles, True)(*args)
        except Exception:
            # Compatibility fallback: this JAX build does not support
            # pipeline_mode=pl.Buffered(1) on pallas_call BlockSpecs.
            _SINGLE_BUFFER_OK = False
            out_p = _build_call(batch_tile, in_dim_p, E_p, n_tiles, False)(*args)
    else:
        out_p = _build_call(batch_tile, in_dim_p, E_p, n_tiles, False)(*args)

    return out_p[:B, :E]


def init_params(key, in_dim, embedding_size):
    """Deterministic synthetic init matching torch.nn.Linear shapes.

    PyTorch stores Linear weight as (out, in); we store the transpose (in, out)
    so the kernel does x @ W directly. Biases are (1, out) for 2D VMEM tiles.
    """
    k1, k2, k3, k4, k5, k6 = jax.random.split(key, 6)
    E = embedding_size

    def uinit(k, shape, fan_in):
        bound = 1.0 / jnp.sqrt(fan_in)
        return jax.random.uniform(k, shape, jnp.float32, -bound, bound)

    return {
        "w1": uinit(k1, (in_dim, E), in_dim),
        "b1": uinit(k2, (1, E), in_dim),
        "w2": uinit(k3, (E, E), E),
        "b2": uinit(k4, (1, E), E),
        "w3": uinit(k5, (E, E), E),
        "b3": uinit(k6, (1, E), E),
    }


def reference_forward(obs, params, *, matmul_dtype=jnp.float32):
    def lin(x, w, b):
        y = jnp.dot(
            x.astype(matmul_dtype),
            w.astype(matmul_dtype),
            preferred_element_type=jnp.float32,
        )
        return y + b

    h = jnp.maximum(lin(obs, params["w1"], params["b1"]), 0.0)
    h = jnp.maximum(lin(h, params["w2"], params["b2"]), 0.0)
    return lin(h, params["w3"], params["b3"])


if __name__ == "__main__":
    # Small shapes consistent with the module: low-dim observation space (16,),
    # embedding_size=32; batch large enough for a multi-step "parallel" grid
    # (2048 rows -> 4 grid steps of 512 rows).
    batch = 2048
    in_dim = 16
    embedding_size = 32

    key = jax.random.PRNGKey(0)
    k_obs, k_params = jax.random.split(key)

    obs = jax.random.normal(k_obs, (batch, in_dim), dtype=jnp.float32)
    params = init_params(k_params, in_dim, embedding_size)

    out = fc_representation_forward(obs, params)
    out = jax.block_until_ready(out)
    assert out.shape == (batch, embedding_size)

    # Precision-matched reference (bf16 dot inputs, f32 accumulation).
    ref_bf16 = reference_forward(obs, params, matmul_dtype=jnp.bfloat16)
    assert jnp.allclose(out, ref_bf16, atol=2e-3, rtol=2e-3)

    # Loose sanity check against pure-f32 math.
    ref_f32 = reference_forward(obs, params, matmul_dtype=jnp.float32)
    assert jnp.allclose(out, ref_f32, atol=5e-2, rtol=5e-2)

    print("KERNEL_OK")
</pallas_src>

<mosaic_0001>
module attributes {stable_mosaic.version = 11 : i64} {
  func.func @_mlp_kernel(%arg0: i32, %arg1: memref<512x128xbf16, #tpu.memory_space<vmem>>, %arg2: memref<128x128xbf16, #tpu.memory_space<vmem>>, %arg3: memref<1x128xf32, #tpu.memory_space<vmem>>, %arg4: memref<128x128xbf16, #tpu.memory_space<vmem>>, %arg5: memref<1x128xf32, #tpu.memory_space<vmem>>, %arg6: memref<128x128xbf16, #tpu.memory_space<vmem>>, %arg7: memref<1x128xf32, #tpu.memory_space<vmem>>, %arg8: memref<512x128xf32, #tpu.memory_space<vmem>>) attributes {dimension_semantics = [#tpu.dimension_semantics<parallel>], iteration_bounds = array<i64: 4>, scalar_prefetch = 0 : i64, scratch_operands = 0 : i64, tpu.core_type = #tpu.core_type<tc>, window_params = [{transform_indices = @transform_0, window_bounds = array<i64: 512, 128>}, {pipeline_mode = #tpu.pipeline_mode<synchronous>, transform_indices = @transform_1, window_bounds = array<i64: 128, 128>}, {pipeline_mode = #tpu.pipeline_mode<synchronous>, transform_indices = @transform_2, window_bounds = array<i64: 1, 128>}, {pipeline_mode = #tpu.pipeline_mode<synchronous>, transform_indices = @transform_3, window_bounds = array<i64: 128, 128>}, {pipeline_mode = #tpu.pipeline_mode<synchronous>, transform_indices = @transform_4, window_bounds = array<i64: 1, 128>}, {pipeline_mode = #tpu.pipeline_mode<synchronous>, transform_indices = @transform_5, window_bounds = array<i64: 128, 128>}, {pipeline_mode = #tpu.pipeline_mode<synchronous>, transform_indices = @transform_6, window_bounds = array<i64: 1, 128>}, {transform_indices = @transform_7, window_bounds = array<i64: 512, 128>}]} {
    %c0 = arith.constant 0 : index
    %c0_0 = arith.constant 0 : index
    %0 = vector.load %arg1[%c0, %c0_0] : memref<512x128xbf16, #tpu.memory_space<vmem>>, vector<512x128xbf16>
    %c0_1 = arith.constant 0 : index
    %c0_2 = arith.constant 0 : index
    %1 = vector.load %arg2[%c0_1, %c0_2] : memref<128x128xbf16, #tpu.memory_space<vmem>>, vector<128x128xbf16>
    %cst = arith.constant dense<0.000000e+00> : vector<512x128xf32>
    %2 = tpu.matmul %0, %1, %cst {dimension_numbers = #tpu.dot_dimension_numbers<[1], [0], [0], [1], [0, 0, 1, 1], [], []>} : vector<512x128xbf16>, vector<128x128xbf16>, vector<512x128xf32> -> vector<512x128xf32>
    %c0_3 = arith.constant 0 : index
    %c0_4 = arith.constant 0 : index
    %3 = vector.load %arg3[%c0_3, %c0_4] : memref<1x128xf32, #tpu.memory_space<vmem>>, vector<1x128xf32>
    %4 = vector.broadcast %3 : vector<1x128xf32> to vector<512x128xf32>
    %5 = arith.addf %2, %4 : vector<512x128xf32>
    %cst_5 = arith.constant 0.000000e+00 : f32
    %6 = vector.broadcast %cst_5 : f32 to vector<512x128xf32>
    %7 = arith.maximumf %5, %6 : vector<512x128xf32>
    %8 = arith.truncf %7 : vector<512x128xf32> to vector<512x128xbf16>
    %c0_6 = arith.constant 0 : index
    %c0_7 = arith.constant 0 : index
    %9 = vector.load %arg4[%c0_6, %c0_7] : memref<128x128xbf16, #tpu.memory_space<vmem>>, vector<128x128xbf16>
    %cst_8 = arith.constant dense<0.000000e+00> : vector<512x128xf32>
    %10 = tpu.matmul %8, %9, %cst_8 {dimension_numbers = #tpu.dot_dimension_numbers<[1], [0], [0], [1], [0, 0, 1, 1], [], []>} : vector<512x128xbf16>, vector<128x128xbf16>, vector<512x128xf32> -> vector<512x128xf32>
    %c0_9 = arith.constant 0 : index
    %c0_10 = arith.constant 0 : index
    %11 = vector.load %arg5[%c0_9, %c0_10] : memref<1x128xf32, #tpu.memory_space<vmem>>, vector<1x128xf32>
    %12 = vector.broadcast %11 : vector<1x128xf32> to vector<512x128xf32>
    %13 = arith.addf %10, %12 : vector<512x128xf32>
    %cst_11 = arith.constant 0.000000e+00 : f32
    %14 = vector.broadcast %cst_11 : f32 to vector<512x128xf32>
    %15 = arith.maximumf %13, %14 : vector<512x128xf32>
    %16 = arith.truncf %15 : vector<512x128xf32> to vector<512x128xbf16>
    %c0_12 = arith.constant 0 : index
    %c0_13 = arith.constant 0 : index
    %17 = vector.load %arg6[%c0_12, %c0_13] : memref<128x128xbf16, #tpu.memory_space<vmem>>, vector<128x128xbf16>
    %cst_14 = arith.constant dense<0.000000e+00> : vector<512x128xf32>
    %18 = tpu.matmul %16, %17, %cst_14 {dimension_numbers = #tpu.dot_dimension_numbers<[1], [0], [0], [1], [0, 0, 1, 1], [], []>} : vector<512x128xbf16>, vector<128x128xbf16>, vector<512x128xf32> -> vector<512x128xf32>
    %c0_15 = arith.constant 0 : index
    %c0_16 = arith.constant 0 : index
    %19 = vector.load %arg7[%c0_15, %c0_16] : memref<1x128xf32, #tpu.memory_space<vmem>>, vector<1x128xf32>
    %20 = vector.broadcast %19 : vector<1x128xf32> to vector<512x128xf32>
    %21 = arith.addf %18, %20 : vector<512x128xf32>
    %c0_17 = arith.constant 0 : index
    %c0_18 = arith.constant 0 : index
    %22 = vector.load %arg8[%c0_17, %c0_18] : memref<512x128xf32, #tpu.memory_space<vmem>>, vector<512x128xf32>
    tpu.vector_store %arg8[%c0_17, %c0_18], %21 {strides = array<i32>} : memref<512x128xf32, #tpu.memory_space<vmem>>, vector<512x128xf32>,
    return
  }
  func.func @transform_0(%arg0: i32) -> (i32, i32) {
    %c0_i32 = arith.constant 0 : i32
    %c0_i32_0 = arith.constant 0 : i32
    return %arg0, %c0_i32 : i32, i32
  }
  func.func @transform_1(%arg0: i32) -> (i32, i32) {
    %c0_i32 = arith.constant 0 : i32
    %c0_i32_0 = arith.constant 0 : i32
    %c0_i32_1 = arith.constant 0 : i32
    return %c0_i32, %c0_i32_0 : i32, i32
  }
  func.func @transform_2(%arg0: i32) -> (i32, i32) {
    %c0_i32 = arith.constant 0 : i32
    %c0_i32_0 = arith.constant 0 : i32
    %c0_i32_1 = arith.constant 0 : i32
    return %c0_i32, %c0_i32_0 : i32, i32
  }
  func.func @transform_3(%arg0: i32) -> (i32, i32) {
    %c0_i32 = arith.constant 0 : i32
    %c0_i32_0 = arith.constant 0 : i32
    %c0_i32_1 = arith.constant 0 : i32
    return %c0_i32, %c0_i32_0 : i32, i32
  }
  func.func @transform_4(%arg0: i32) -> (i32, i32) {
    %c0_i32 = arith.constant 0 : i32
    %c0_i32_0 = arith.constant 0 : i32
    %c0_i32_1 = arith.constant 0 : i32
    return %c0_i32, %c0_i32_0 : i32, i32
  }
  func.func @transform_5(%arg0: i32) -> (i32, i32) {
    %c0_i32 = arith.constant 0 : i32
    %c0_i32_0 = arith.constant 0 : i32
    %c0_i32_1 = arith.constant 0 : i32
    return %c0_i32, %c0_i32_0 : i32, i32
  }
  func.func @transform_6(%arg0: i32) -> (i32, i32) {
    %c0_i32 = arith.constant 0 : i32
    %c0_i32_0 = arith.constant 0 : i32
    %c0_i32_1 = arith.constant 0 : i32
    return %c0_i32, %c0_i32_0 : i32, i32
  }
  func.func @transform_7(%arg0: i32) -> (i32, i32) {
    %c0_i32 = arith.constant 0 : i32
    %c0_i32_0 = arith.constant 0 : i32
    return %arg0, %c0_i32 : i32, i32
  }
}

module attributes {stable_mosaic.version = 11 : i64} {
  func.func @_mlp_kernel(%arg0: i32, %arg1: memref<512x128xbf16, #tpu.memory_space<vmem>>, %arg2: memref<128x128xbf16, #tpu.memory_space<vmem>>, %arg3: memref<1x128xf32, #tpu.memory_space<vmem>>, %arg4: memref<128x128xbf16, #tpu.memory_space<vmem>>, %arg5: memref<1x128xf32, #tpu.memory_space<vmem>>, %arg6: memref<128x128xbf16, #tpu.memory_space<vmem>>, %arg7: memref<1x128xf32, #tpu.memory_space<vmem>>, %arg8: memref<512x128xf32, #tpu.memory_space<vmem>>) attributes {dimension_semantics = [#tpu.dimension_semantics<parallel>], iteration_bounds = array<i64: 4>, scalar_prefetch = 0 : i64, scratch_operands = 0 : i64, tpu.core_type = #tpu.core_type<tc>, window_params = [{transform_indices = @transform_0, window_bounds = array<i64: 512, 128>}, {pipeline_mode = #tpu.pipeline_mode<synchronous>, transform_indices = @transform_1, window_bounds = array<i64: 128, 128>}, {pipeline_mode = #tpu.pipeline_mode<synchronous>, transform_indices = @transform_2, window_bounds = array<i64: 1, 128>}, {pipeline_mode = #tpu.pipeline_mode<synchronous>, transform_indices = @transform_3, window_bounds = array<i64: 128, 128>}, {pipeline_mode = #tpu.pipeline_mode<synchronous>, transform_indices = @transform_4, window_bounds = array<i64: 1, 128>}, {pipeline_mode = #tpu.pipeline_mode<synchronous>, transform_indices = @transform_5, window_bounds = array<i64: 128, 128>}, {pipeline_mode = #tpu.pipeline_mode<synchronous>, transform_indices = @transform_6, window_bounds = array<i64: 1, 128>}, {transform_indices = @transform_7, window_bounds = array<i64: 512, 128>}]} {
    %c0 = arith.constant 0 : index
    %c0_0 = arith.constant 0 : index
    %0 = vector.load %arg1[%c0, %c0_0] : memref<512x128xbf16, #tpu.memory_space<vmem>>, vector<512x128xbf16>
    %c0_1 = arith.constant 0 : index
    %c0_2 = arith.constant 0 : index
    %1 = vector.load %arg2[%c0_1, %c0_2] : memref<128x128xbf16, #tpu.memory_space<vmem>>, vector<128x128xbf16>
    %cst = arith.constant dense<0.000000e+00> : vector<512x128xf32>
    %2 = tpu.matmul %0, %1, %cst {dimension_numbers = #tpu.dot_dimension_numbers<[1], [0], [0], [1], [0, 0, 1, 1], [], []>} : vector<512x128xbf16>, vector<128x128xbf16>, vector<512x128xf32> -> vector<512x128xf32>
    %c0_3 = arith.constant 0 : index
    %c0_4 = arith.constant 0 : index
    %3 = vector.load %arg3[%c0_3, %c0_4] : memref<1x128xf32, #tpu.memory_space<vmem>>, vector<1x128xf32>
    %4 = vector.broadcast %3 : vector<1x128xf32> to vector<512x128xf32>
    %5 = arith.addf %2, %4 : vector<512x128xf32>
    %cst_5 = arith.constant 0.000000e+00 : f32
    %6 = vector.broadcast %cst_5 : f32 to vector<512x128xf32>
    %7 = arith.maximumf %5, %6 : vector<512x128xf32>
    %8 = arith.truncf %7 : vector<512x128xf32> to vector<512x128xbf16>
    %c0_6 = arith.constant 0 : index
    %c0_7 = arith.constant 0 : index
    %9 = vector.load %arg4[%c0_6, %c0_7] : memref<128x128xbf16, #tpu.memory_space<vmem>>, vector<128x128xbf16>
    %cst_8 = arith.constant dense<0.000000e+00> : vector<512x128xf32>
    %10 = tpu.matmul %8, %9, %cst_8 {dimension_numbers = #tpu.dot_dimension_numbers<[1], [0], [0], [1], [0, 0, 1, 1], [], []>} : vector<512x128xbf16>, vector<128x128xbf16>, vector<512x128xf32> -> vector<512x128xf32>
    %c0_9 = arith.constant 0 : index
    %c0_10 = arith.constant 0 : index
    %11 = vector.load %arg5[%c0_9, %c0_10] : memref<1x128xf32, #tpu.memory_space<vmem>>, vector<1x128xf32>
    %12 = vector.broadcast %11 : vector<1x128xf32> to vector<512x128xf32>
    %13 = arith.addf %10, %12 : vector<512x128xf32>
    %cst_11 = arith.constant 0.000000e+00 : f32
    %14 = vector.broadcast %cst_11 : f32 to vector<512x128xf32>
    %15 = arith.maximumf %13, %14 : vector<512x128xf32>
    %16 = arith.truncf %15 : vector<512x128xf32> to vector<512x128xbf16>
    %c0_12 = arith.constant 0 : index
    %c0_13 = arith.constant 0 : index
    %17 = vector.load %arg6[%c0_12, %c0_13] : memref<128x128xbf16, #tpu.memory_space<vmem>>, vector<128x128xbf16>
    %cst_14 = arith.constant dense<0.000000e+00> : vector<512x128xf32>
    %18 = tpu.matmul %16, %17, %cst_14 {dimension_numbers = #tpu.dot_dimension_numbers<[1], [0], [0], [1], [0, 0, 1, 1], [], []>} : vector<512x128xbf16>, vector<128x128xbf16>, vector<512x128xf32> -> vector<512x128xf32>
    %c0_15 = arith.constant 0 : index
    %c0_16 = arith.constant 0 : index
    %19 = vector.load %arg7[%c0_15, %c0_16] : memref<1x128xf32, #tpu.memory_space<vmem>>, vector<1x128xf32>
    %20 = vector.broadcast %19 : vector<1x128xf32> to vector<512x128xf32>
    %21 = arith.addf %18, %20 : vector<512x128xf32>
    %c0_17 = arith.constant 0 : index
    %c0_18 = arith.constant 0 : index
    %22 = vector.load %arg8[%c0_17, %c0_18] : memref<512x128xf32, #tpu.memory_space<vmem>>, vector<512x128xf32>
    tpu.vector_store %arg8[%c0_17, %c0_18], %21 {strides = array<i32>} : memref<512x128xf32, #tpu.memory_space<vmem>>, vector<512x128xf32>,
    return
  }
  func.func @transform_0(%arg0: i32) -> (i32, i32) {
    %c0_i32 = arith.constant 0 : i32
    %c0_i32_0 = arith.constant 0 : i32
    return %arg0, %c0_i32 : i32, i32
  }
  func.func @transform_1(%arg0: i32) -> (i32, i32) {
    %c0_i32 = arith.constant 0 : i32
    %c0_i32_0 = arith.constant 0 : i32
    %c0_i32_1 = arith.constant 0 : i32
    return %c0_i32, %c0_i32_0 : i32, i32
  }
  func.func @transform_2(%arg0: i32) -> (i32, i32) {
    %c0_i32 = arith.constant 0 : i32
    %c0_i32_0 = arith.constant 0 : i32
    %c0_i32_1 = arith.constant 0 : i32
    return %c0_i32, %c0_i32_0 : i32, i32
  }
  func.func @transform_3(%arg0: i32) -> (i32, i32) {
    %c0_i32 = arith.constant 0 : i32
    %c0_i32_0 = arith.constant 0 : i32
    %c0_i32_1 = arith.constant 0 : i32
    return %c0_i32, %c0_i32_0 : i32, i32
  }
  func.func @transform_4(%arg0: i32) -> (i32, i32) {
    %c0_i32 = arith.constant 0 : i32
    %c0_i32_0 = arith.constant 0 : i32
    %c0_i32_1 = arith.constant 0 : i32
    return %c0_i32, %c0_i32_0 : i32, i32
  }
  func.func @transform_5(%arg0: i32) -> (i32, i32) {
    %c0_i32 = arith.constant 0 : i32
    %c0_i32_0 = arith.constant 0 : i32
    %c0_i32_1 = arith.constant 0 : i32
    return %c0_i32, %c0_i32_0 : i32, i32
  }
  func.func @transform_6(%arg0: i32) -> (i32, i32) {
    %c0_i32 = arith.constant 0 : i32
    %c0_i32_0 = arith.constant 0 : i32
    %c0_i32_1 = arith.constant 0 : i32
    return %c0_i32, %c0_i32_0 : i32, i32
  }
  func.func @transform_7(%arg0: i32) -> (i32, i32) {
    %c0_i32 = arith.constant 0 : i32
    %c0_i32_0 = arith.constant 0 : i32
    return %arg0, %c0_i32 : i32, i32
  }
}

</mosaic_0001>

<llo_original>
// kernel: tpu_custom_call.1
$region0: #{tpu_custom_call.1}
  #allocation0 [shape = 'u32[]', space=smem, size = 0x4, offset = 0x4, fixed_abs, tag = 'smem constant byte address 0x4 - core index']
  #allocation1 [shape = 'u32[72,128]{1,0:T(1,128)}', space=vmem, size = 0x9000, scoped, tag = 'internal scratch']
  %s0 = inlined_call_operand.hbm [shape: bf16[2048,128], index: 0, kind: input, shape index: {}]
  %s1 = inlined_call_operand.hbm [shape: bf16[128,128], index: 1, kind: input, shape index: {}]
  %s2 = inlined_call_operand.vmem [shape: f32[1,128], index: 2, kind: input, shape index: {}]
  %s3 = inlined_call_operand.hbm [shape: bf16[128,128], index: 3, kind: input, shape index: {}]
  %s4 = inlined_call_operand.vmem [shape: f32[1,128], index: 4, kind: input, shape index: {}]
  %s5 = inlined_call_operand.hbm [shape: bf16[128,128], index: 5, kind: input, shape index: {}]
  %s6 = inlined_call_operand.vmem [shape: f32[1,128], index: 6, kind: input, shape index: {}]
  %s7 = inlined_call_operand.hbm [shape: f32[2048,128], index: 7, kind: output, shape index: {}]
  %s8 = sld [smem:[#allocation0]]
  $region77: #{tpu_custom_call.1} parent=0
    _
  %s10 = ssub.s32 1, %s8
  %s11 = scalar_select 0, %s10, %s8
  $region1: #{tpu_custom_call.1} parent=0
    #allocation2 [shape = 'u8[262144]{0}', space=vmem, size = 0x40000, scoped, tag = 'input window, operand 0']
    #allocation3 [shape = 's32[2]{0}', space=sflag, size = 0x8, scoped, tag = 'scoped memory for tpu_custom_call.1']
    #allocation4 [shape = 's32[2]{0}', space=sflag, size = 0x8, scoped, tag = 'scoped memory for tpu_custom_call.1']
    #allocation5 [shape = 'u8[32768]{0}', space=vmem, size = 0x8000, scoped, tag = 'input window, operand 1, single buffered']
    #allocation6 [shape = 's32[1]{0}', space=sflag, size = 0x4, scoped, tag = 'scoped memory for tpu_custom_call.1']
    #allocation7 [shape = 'u8[32768]{0}', space=vmem, size = 0x8000, scoped, tag = 'input window, operand 3, single buffered']
    #allocation8 [shape = 'u8[32768]{0}', space=vmem, size = 0x8000, scoped, tag = 'input window, operand 5, single buffered']
    #allocation9 [shape = 's32[1]{0}', space=sflag, size = 0x4, scoped, tag = 'scoped memory for tpu_custom_call.1']
    #allocation10 [shape = 'u8[524288]{0}', space=vmem, size = 0x80000, scoped, tag = 'output window, operand 0']
    %12 = vsyncpa [#allocation3], 0
    %s13 = scalar_lea.sflag [#allocation3], 1
    %14 = vsyncpa %s13, 0
    %15 = vsyncpa [#allocation6], 0
    %16 = vsyncpa [#allocation9], 0
    %17 = vsyncpa [#allocation4], 0
    %s18 = scalar_lea.sflag [#allocation4], 1
    %19 = vsyncpa %s18, 0
    loop: start=0, step=1, limit=6
    $region2: #{tpu_custom_call.1} parent=1 // loop_pre_header
      _
    $region3: #{tpu_custom_call.1} parent=1 // loop_header
      %s21 = sphi 0, %s25
      %p22 = scmp.ge.s32.totalorder %s21, 6
      %s31 = sphi 0, %s33
      %s34 = sphi 0, %s31
      %s35 = sphi 0, %s34
      %s51 = sphi 0, %s35
      %s55 = sphi 0, %s55
      %s57 = sphi 0, %s55
      %s58 = sphi 0, %s57
      %s72 = sphi 0, %s58
      %s76 = sphi 0, %s76
      %s78 = sphi 0, %s76
      %s79 = sphi 0, %s78
      %s93 = sphi 0, %s79
      %s97 = sphi 0, %s97
      %s99 = sphi 0, %s97
      %s100 = sphi 0, %s99
      %s114 = sphi 0, %s100
      %s118 = sphi 0, %s118
      %s120 = sphi 0, %s118
      %s121 = sphi 0, %s120
      %s135 = sphi 0, %s121
      %s139 = sphi 0, %s139
      %s141 = sphi 0, %s139
      %s142 = sphi 0, %s141
      %s156 = sphi 0, %s142
      %s160 = sphi 0, %s160
      %s162 = sphi 0, %s160
      %s163 = sphi 0, %s162
      %s177 = sphi 0, %s163
      %s183 = sphi 0, %s185
      %s186 = sphi 0, %s183
      %s187 = sphi 0, %s186
      %s203 = sphi 0, %s187
    $region4: #{tpu_custom_call.1} parent=1 // loop_header_branch
      %24 = sbr.rel (%p22) target = $region8
    $region5: #{tpu_custom_call.1} parent=1 // loop_body
      %s26 = ssub.s32 %s21, 1
      %s27 = ssub.s32 %s21, 2
      %s28 = sadd.s32 %s21, 1
      %s29 = ssub.s32 %s21, %s28
      %p30 = scmp.eq.s32.totalorder %s29, 0
      %s32 = sadd.s32 %s31, 1
      %s33 = scalar_select %p30, %s31, %s32
      %p36 = pneg %p30
      %p37 = scmp.eq.s32.totalorder %s21, 3
      %p38 = por %p36, %p37
      %p39 = scmp.ne.s32.totalorder %s31, %s34
      %p40 = scmp.eq.s32.totalorder %s21, 0
      %p41 = por %p39, %p40
      %p42 = scmp.ne.s32.totalorder %s31, %s34
      %p43 = scmp.eq.s32.totalorder %s26, 3
      %p44 = por %p42, %p43
      %p45 = scmp.ne.s32.totalorder %s34, %s35
      %p46 = scmp.eq.s32.totalorder %s26, 0
      %p47 = por %p45, %p46
      %p48 = scmp.ne.s32.totalorder %s34, %s35
      %p49 = scmp.eq.s32.totalorder %s27, 3
      %p50 = por %p48, %p49
      %p52 = scmp.ne.s32.totalorder %s35, %s51
      %p53 = scmp.eq.s32.totalorder %s27, 0
      %p54 = por %p52, %p53
      %s56 = sadd.s32 %s55, 1
      %p59 = scmp.eq.s32.totalorder %s21, 3
      %p60 = scmp.ne.s32.totalorder %s55, %s57
      %p61 = scmp.eq.s32.totalorder %s21, 0
      %p62 = por %p60, %p61
      %p63 = scmp.ne.s32.totalorder %s55, %s57
      %p64 = scmp.eq.s32.totalorder %s26, 3
      %p65 = por %p63, %p64
      %p66 = scmp.ne.s32.totalorder %s57, %s58
      %p67 = scmp.eq.s32.totalorder %s26, 0
      %p68 = por %p66, %p67
      %p69 = scmp.ne.s32.totalorder %s57, %s58
      %p70 = scmp.eq.s32.totalorder %s27, 3
      %p71 = por %p69, %p70
      %p73 = scmp.ne.s32.totalorder %s58, %s72
      %p74 = scmp.eq.s32.totalorder %s27, 0
      %p75 = por %p73, %p74
      %s77 = sadd.s32 %s76, 1
      %p80 = scmp.eq.s32.totalorder %s21, 3
      %p81 = scmp.ne.s32.totalorder %s76, %s78
      %p82 = scmp.eq.s32.totalorder %s21, 0
      %p83 = por %p81, %p82
      %p84 = scmp.ne.s32.totalorder %s76, %s78
      %p85 = scmp.eq.s32.totalorder %s26, 3
      %p86 = por %p84, %p85
      %p87 = scmp.ne.s32.totalorder %s78, %s79
      %p88 = scmp.eq.s32.totalorder %s26, 0
      %p89 = por %p87, %p88
      %p90 = scmp.ne.s32.totalorder %s78, %s79
      %p91 = scmp.eq.s32.totalorder %s27, 3
      %p92 = por %p90, %p91
      %p94 = scmp.ne.s32.totalorder %s79, %s93
      %p95 = scmp.eq.s32.totalorder %s27, 0
      %p96 = por %p94, %p95
      %s98 = sadd.s32 %s97, 1
      %p101 = scmp.eq.s32.totalorder %s21, 3
      %p102 = scmp.ne.s32.totalorder %s97, %s99
      %p103 = scmp.eq.s32.totalorder %s21, 0
      %p104 = por %p102, %p103
      %p105 = scmp.ne.s32.totalorder %s97, %s99
      %p106 = scmp.eq.s32.totalorder %s26, 3
      %p107 = por %p105, %p106
      %p108 = scmp.ne.s32.totalorder %s99, %s100
      %p109 = scmp.eq.s32.totalorder %s26, 0
      %p110 = por %p108, %p109
      %p111 = scmp.ne.s32.totalorder %s99, %s100
      %p112 = scmp.eq.s32.totalorder %s27, 3
      %p113 = por %p111, %p112
      %p115 = scmp.ne.s32.totalorder %s100, %s114
      %p116 = scmp.eq.s32.totalorder %s27, 0
      %p117 = por %p115, %p116
      %s119 = sadd.s32 %s118, 1
      %p122 = scmp.eq.s32.totalorder %s21, 3
      %p123 = scmp.ne.s32.totalorder %s118, %s120
      %p124 = scmp.eq.s32.totalorder %s21, 0
      %p125 = por %p123, %p124
      %p126 = scmp.ne.s32.totalorder %s118, %s120
      %p127 = scmp.eq.s32.totalorder %s26, 3
      %p128 = por %p126, %p127
      %p129 = scmp.ne.s32.totalorder %s120, %s121
      %p130 = scmp.eq.s32.totalorder %s26, 0
      %p131 = por %p129, %p130
      %p132 = scmp.ne.s32.totalorder %s120, %s121
      %p133 = scmp.eq.s32.totalorder %s27, 3
      %p134 = por %p132, %p133
      %p136 = scmp.ne.s32.totalorder %s121, %s135
      %p137 = scmp.eq.s32.totalorder %s27, 0
      %p138 = por %p136, %p137
      %s140 = sadd.s32 %s139, 1
      %p143 = scmp.eq.s32.totalorder %s21, 3
      %p144 = scmp.ne.s32.totalorder %s139, %s141
      %p145 = scmp.eq.s32.totalorder %s21, 0
      %p146 = por %p144, %p145
      %p147 = scmp.ne.s32.totalorder %s139, %s141
      %p148 = scmp.eq.s32.totalorder %s26, 3
      %p149 = por %p147, %p148
      %p150 = scmp.ne.s32.totalorder %s141, %s142
      %p151 = scmp.eq.s32.totalorder %s26, 0
      %p152 = por %p150, %p151
      %p153 = scmp.ne.s32.totalorder %s141, %s142
      %p154 = scmp.eq.s32.totalorder %s27, 3
      %p155 = por %p153, %p154
      %p157 = scmp.ne.s32.totalorder %s142, %s156
      %p158 = scmp.eq.s32.totalorder %s27, 0
      %p159 = por %p157, %p158
      %s161 = sadd.s32 %s160, 1
      %p164 = scmp.eq.s32.totalorder %s21, 3
      %p165 = scmp.ne.s32.totalorder %s160, %s162
      %p166 = scmp.eq.s32.totalorder %s21, 0
      %p167 = por %p165, %p166
      %p168 = scmp.ne.s32.totalorder %s160, %s162
      %p169 = scmp.eq.s32.totalorder %s26, 3
      %p170 = por %p168, %p169
      %p171 = scmp.ne.s32.totalorder %s162, %s163
      %p172 = scmp.eq.s32.totalorder %s26, 0
      %p173 = por %p171, %p172
      %p174 = scmp.ne.s32.totalorder %s162, %s163
      %p175 = scmp.eq.s32.totalorder %s27, 3
      %p176 = por %p174, %p175
      %p178 = scmp.ne.s32.totalorder %s163, %s177
      %p179 = scmp.eq.s32.totalorder %s27, 0
      %p180 = por %p178, %p179
      %s181 = ssub.s32 %s21, %s28
      %p182 = scmp.eq.s32.totalorder %s181, 0
      %s184 = sadd.s32 %s183, 1
      %s185 = scalar_select %p182, %s183, %s184
      %p188 = pneg %p182
      %p189 = scmp.eq.s32.totalorder %s21, 3
      %p190 = por %p188, %p189
      %p191 = scmp.ne.s32.totalorder %s183, %s186
      %p192 = scmp.eq.s32.totalorder %s21, 0
      %p193 = por %p191, %p192
      %p194 = scmp.ne.s32.totalorder %s183, %s186
      %p195 = scmp.eq.s32.totalorder %s26, 3
      %p196 = por %p194, %p195
      %p197 = scmp.ne.s32.totalorder %s186, %s187
      %p198 = scmp.eq.s32.totalorder %s26, 0
      %p199 = por %p197, %p198
      %p200 = scmp.ne.s32.totalorder %s186, %s187
      %p201 = scmp.eq.s32.totalorder %s27, 3
      %p202 = por %p200, %p201
      %p204 = scmp.ne.s32.totalorder %s187, %s203
      %p205 = scmp.eq.s32.totalorder %s27, 0
      %p206 = por %p204, %p205
      %p207 = scmp.le.s32.totalorder 1, %s21
      %p208 = scmp.lt.s32.totalorder %s21, 5
      %p209 = pnand %p207, %p208
      %p210 = pneg %p209
      // Predicated region
      $region9: #{tpu_custom_call.1} parent=5 // pred_check
        _
      $region10: #{tpu_custom_call.1} parent=5 // pred_check_branch
        %212 = sbr.rel (%p209) target = $region12
      $region11: #{tpu_custom_call.1} parent=5 // pred_region
        %s213 = ssub.s32 %s21, 1
        // Predicated region
        $region13: #{tpu_custom_call.1} parent=11 // pred_check
          %p214 = pneg %p68
        $region14: #{tpu_custom_call.1} parent=11 // pred_check_branch
          %216 = sbr.rel (%p214) target = $region16
        $region15: #{tpu_custom_call.1} parent=11 // pred_region
          %218 = vsyncadd [#allocation6], 0
          %s219 = sshll.u32 %s1, 4
          %s220 = int_to_ptr.hbm [resolvable:$true] %s219
          %s221 = sshll.u32 [#allocation5], 4
          %s222 = int_to_ptr.vmem [resolvable:$true] %s221
          %227 = dma.hbm_to_vmem [thread:$0]  %s220, 1024, %s222, [#allocation6], 64, 64, 4
        $region16: #{tpu_custom_call.1} parent=11 // pred_fallthru
          _
        // Predicated region
        $region17: #{tpu_custom_call.1} parent=11 // pred_check
          %p228 = pneg %p89
        $region18: #{tpu_custom_call.1} parent=11 // pred_check_branch
          %230 = sbr.rel (%p228) target = $region20
        $region19: #{tpu_custom_call.1} parent=11 // pred_region
          _
        $region20: #{tpu_custom_call.1} parent=11 // pred_fallthru
          _
        // Predicated region
        $region21: #{tpu_custom_call.1} parent=11 // pred_check
          %p231 = pneg %p110
        $region22: #{tpu_custom_call.1} parent=11 // pred_check_branch
          %233 = sbr.rel (%p231) target = $region24
        $region23: #{tpu_custom_call.1} parent=11 // pred_region
          %235 = vsyncadd [#allocation6], 0
          %s236 = sshll.u32 %s3, 4
          %s237 = int_to_ptr.hbm [resolvable:$true] %s236
          %s238 = sshll.u32 [#allocation7], 4
          %s239 = int_to_ptr.vmem [resolvable:$true] %s238
          %244 = dma.hbm_to_vmem [thread:$0]  %s237, 1024, %s239, [#allocation6], 64, 64, 4
        $region24: #{tpu_custom_call.1} parent=11 // pred_fallthru
          _
        // Predicated region
        $region25: #{tpu_custom_call.1} parent=11 // pred_check
          %p245 = pneg %p131
        $region26: #{tpu_custom_call.1} parent=11 // pred_check_branch
          %247 = sbr.rel (%p245) target = $region28
        $region27: #{tpu_custom_call.1} parent=11 // pred_region
          _
        $region28: #{tpu_custom_call.1} parent=11 // pred_fallthru
          _
        // Predicated region
        $region29: #{tpu_custom_call.1} parent=11 // pred_check
          %p248 = pneg %p152
        $region30: #{tpu_custom_call.1} parent=11 // pred_check_branch
          %250 = sbr.rel (%p248) target = $region32
        $region31: #{tpu_custom_call.1} parent=11 // pred_region
          %252 = vsyncadd [#allocation9], 0
          %s253 = sshll.u32 %s5, 4
          %s254 = int_to_ptr.hbm [resolvable:$true] %s253
          %s255 = sshll.u32 [#allocation8], 4
          %s256 = int_to_ptr.vmem [resolvable:$true] %s255
          %261 = dma.hbm_to_vmem [thread:$0]  %s254, 1024, %s256, [#allocation9], 64, 64, 4
        $region32: #{tpu_custom_call.1} parent=11 // pred_fallthru
          _
        // Predicated region
        $region33: #{tpu_custom_call.1} parent=11 // pred_check
          %p262 = pneg %p173
        $region34: #{tpu_custom_call.1} parent=11 // pred_check_branch
          %264 = sbr.rel (%p262) target = $region36
        $region35: #{tpu_custom_call.1} parent=11 // pred_region
          _
        $region36: #{tpu_custom_call.1} parent=11 // pred_fallthru
          _
      $region12: #{tpu_custom_call.1} parent=5 // pred_fallthru
        _
      %p265 = scmp.lt.s32.totalorder %s21, 4
      // Predicated region
      $region37: #{tpu_custom_call.1} parent=5 // pred_check
        %p266 = pneg %p265
      $region38: #{tpu_custom_call.1} parent=5 // pred_check_branch
        %268 = sbr.rel (%p266) target = $region40
      $region39: #{tpu_custom_call.1} parent=5 // pred_region
        // Predicated region
        $region41: #{tpu_custom_call.1} parent=39 // pred_check
          %p269 = pneg %p41
        $region42: #{tpu_custom_call.1} parent=39 // pred_check_branch
          %271 = sbr.rel (%p269) target = $region44
        $region43: #{tpu_custom_call.1} parent=39 // pred_region
          %s272 = sand.u32 %s31, 1
          %s273 = scalar_lea.sflag [#allocation3], %s272
          %s274 = sand.u32 %s31, 1
          %s275 = smul.addr %s274, 256
          %s276 = scalar_lea.vmem [#allocation2], %s275
          %s277 = smul.u32 64, %s21
          %279 = vsyncadd %s273, 0
          %s280 = smul.addr %s277, 4
          %s281 = scalar_lea.hbm %s0, %s280
          %s282 = sshll.u32 %s281, 4
          %s283 = int_to_ptr.hbm [resolvable:$true] %s282
          %s284 = sshll.u32 %s276, 4
          %s285 = int_to_ptr.vmem [resolvable:$true] %s284
          %290 = dma.hbm_to_vmem [thread:$0]  %s283, 4096, %s285, %s273, 64, 64, 4
        $region44: #{tpu_custom_call.1} parent=39 // pred_fallthru
          _
      $region40: #{tpu_custom_call.1} parent=5 // pred_fallthru
        _
      %p291 = scmp.le.s32.totalorder 1, %s21
      %p292 = scmp.lt.s32.totalorder %s21, 5
      %p293 = pnand %p291, %p292
      %p294 = pneg %p293
      // Predicated region
      $region45: #{tpu_custom_call.1} parent=5 // pred_check
        _
      $region46: #{tpu_custom_call.1} parent=5 // pred_check_branch
        %296 = sbr.rel (%p293) target = $region48
      $region47: #{tpu_custom_call.1} parent=5 // pred_region
        %s297 = ssub.s32 %s21, 1
        %s298 = sand.u32 %s34, 1
        %s299 = scalar_lea.sflag [#allocation3], %s298
        %s300 = sand.u32 %s34, 1
        %s301 = smul.addr %s300, 256
        %s302 = scalar_lea.vmem [#allocation2], %s301
        // Predicated region
        $region49: #{tpu_custom_call.1} parent=47 // pred_check
          %p303 = pneg %p47
        $region50: #{tpu_custom_call.1} parent=47 // pred_check_branch
          %305 = sbr.rel (%p303) target = $region52
        $region51: #{tpu_custom_call.1} parent=47 // pred_region
          %307 = dma.done %s299, 4096
        $region52: #{tpu_custom_call.1} parent=47 // pred_fallthru
          _
        // Predicated region
        $region53: #{tpu_custom_call.1} parent=47 // pred_check
          %p308 = pneg %p68
        $region54: #{tpu_custom_call.1} parent=47 // pred_check_branch
          %310 = sbr.rel (%p308) target = $region56
        $region55: #{tpu_custom_call.1} parent=47 // pred_region
          %312 = dma.done [#allocation6], 1024
        $region56: #{tpu_custom_call.1} parent=47 // pred_fallthru
          _
        // Predicated region
        $region57: #{tpu_custom_call.1} parent=47 // pred_check
          %p313 = pneg %p110
        $region58: #{tpu_custom_call.1} parent=47 // pred_check_branch
          %315 = sbr.rel (%p313) target = $region60
        $region59: #{tpu_custom_call.1} parent=47 // pred_region
          %317 = dma.done [#allocation6], 1024
        $region60: #{tpu_custom_call.1} parent=47 // pred_fallthru
          _
        // Predicated region
        $region61: #{tpu_custom_call.1} parent=47 // pred_check
          %p318 = pneg %p152
        $region62: #{tpu_custom_call.1} parent=47 // pred_check_branch
          %320 = sbr.rel (%p318) target = $region64
        $region63: #{tpu_custom_call.1} parent=47 // pred_region
          %322 = dma.done [#allocation9], 1024
        $region64: #{tpu_custom_call.1} parent=47 // pred_fallthru
          _
        %s323 = sand.u32 %s34, 1
        %s324 = scalar_lea.sflag [#allocation3], %s323
        %s325 = sand.u32 %s34, 1
        %s326 = smul.addr %s325, 256
        %s327 = scalar_lea.vmem [#allocation2], %s326
        %p328 = pneg %p47
        %p329 = pneg %p44
        %p330 = pneg %p68
        %p331 = pneg %p65
        %p332 = pneg %p89
        %p333 = pneg %p86
        %p334 = pneg %p110
        %p335 = pneg %p107
        %p336 = pneg %p131
        %p337 = pneg %p128
        %p338 = pneg %p152
        %p339 = pneg %p149
        %p340 = pneg %p173
        %p341 = pneg %p170
        %p342 = pneg %p199
        %p343 = pneg %p196
        %s344 = sand.u32 %s186, 1
        %s345 = scalar_lea.sflag [#allocation4], %s344
        %s346 = sand.u32 %s186, 1
        %s347 = smul.addr %s346, 512
        %s348 = scalar_lea.vmem [#allocation10], %s347
        %s349 = smul.u32 64, %s26
        %s350 = smul.u32 64, %s26
        %v351 = vld [vmem:[%s302] sm:$0xf]
        %v352 = vld [vmem:[%s302 + $0x4] sm:$0xf]
        %v353 = vld [vmem:[%s302 + $0x8] sm:$0xf]
        %v354 = vld [vmem:[%s302 + $0xc] sm:$0xf]
        %v355 = vld [vmem:[%s302 + $0x10] sm:$0xf]
        %v356 = vld [vmem:[%s302 + $0x14] sm:$0xf]
        %v357 = vld [vmem:[%s302 + $0x18] sm:$0xf]
        %v358 = vld [vmem:[%s302 + $0x1c] sm:$0xf]
        %v359 = vld [vmem:[%s302 + $0x20] sm:$0xf]
        %v360 = vld [vmem:[%s302 + $0x24] sm:$0xf]
        %v361 = vld [vmem:[%s302 + $0x28] sm:$0xf]
        %v362 = vld [vmem:[%s302 + $0x2c] sm:$0xf]
        %v363 = vld [vmem:[%s302 + $0x30] sm:$0xf]
        %v364 = vld [vmem:[%s302 + $0x34] sm:$0xf]
        %v365 = vld [vmem:[%s302 + $0x38] sm:$0xf]
        %v366 = vld [vmem:[%s302 + $0x3c] sm:$0xf]
        %v367 = vld [vmem:[%s302 + $0x40] sm:$0xf]
        %v368 = vld [vmem:[%s302 + $0x44] sm:$0xf]
        %v369 = vld [vmem:[%s302 + $0x48] sm:$0xf]
        %v370 = vld [vmem:[%s302 + $0x4c] sm:$0xf]
        %v371 = vld [vmem:[%s302 + $0x50] sm:$0xf]
        %v372 = vld [vmem:[%s302 + $0x54] sm:$0xf]
        %v373 = vld [vmem:[%s302 + $0x58] sm:$0xf]
        %v374 = vld [vmem:[%s302 + $0x5c] sm:$0xf]
        %v375 = vld [vmem:[%s302 + $0x60] sm:$0xf]
        %v376 = vld [vmem:[%s302 + $0x64] sm:$0xf]
        %v377 = vld [vmem:[%s302 + $0x68] sm:$0xf]
        %v378 = vld [vmem:[%s302 + $0x6c] sm:$0xf]
        %v379 = vld [vmem:[%s302 + $0x70] sm:$0xf]
        %v380 = vld [vmem:[%s302 + $0x74] sm:$0xf]
        %v381 = vld [vmem:[%s302 + $0x78] sm:$0xf]
        %v382 = vld [vmem:[%s302 + $0x7c] sm:$0xf]
        %v383 = vld [vmem:[%s302 + $0x80] sm:$0xf]
        %v384 = vld [vmem:[%s302 + $0x84] sm:$0xf]
        %v385 = vld [vmem:[%s302 + $0x88] sm:$0xf]
        %v386 = vld [vmem:[%s302 + $0x8c] sm:$0xf]
        %v387 = vld [vmem:[%s302 + $0x90] sm:$0xf]
        %v388 = vld [vmem:[%s302 + $0x94] sm:$0xf]
        %v389 = vld [vmem:[%s302 + $0x98] sm:$0xf]
        %v390 = vld [vmem:[%s302 + $0x9c] sm:$0xf]
        %v391 = vld [vmem:[%s302 + $0xa0] sm:$0xf]
        %v392 = vld [vmem:[%s302 + $0xa4] sm:$0xf]
        %v393 = vld [vmem:[%s302 + $0xa8] sm:$0xf]
        %v394 = vld [vmem:[%s302 + $0xac] sm:$0xf]
        %v395 = vld [vmem:[%s302 + $0xb0] sm:$0xf]
        %v396 = vld [vmem:[%s302 + $0xb4] sm:$0xf]
        %v397 = vld [vmem:[%s302 + $0xb8] sm:$0xf]
        %v398 = vld [vmem:[%s302 + $0xbc] sm:$0xf]
        %v399 = vld [vmem:[%s302 + $0xc0] sm:$0xf]
        %v400 = vld [vmem:[%s302 + $0xc4] sm:$0xf]
        %v401 = vld [vmem:[%s302 + $0xc8] sm:$0xf]
        %v402 = vld [vmem:[%s302 + $0xcc] sm:$0xf]
        %v403 = vld [vmem:[%s302 + $0xd0] sm:$0xf]
        %v404 = vld [vmem:[%s302 + $0xd4] sm:$0xf]
        %v405 = vld [vmem:[%s302 + $0xd8] sm:$0xf]
        %v406 = vld [vmem:[%s302 + $0xdc] sm:$0xf]
        %v407 = vld [vmem:[%s302 + $0xe0] sm:$0xf]
        %v408 = vld [vmem:[%s302 + $0xe4] sm:$0xf]
        %v409 = vld [vmem:[%s302 + $0xe8] sm:$0xf]
        %v410 = vld [vmem:[%s302 + $0xec] sm:$0xf]
        %v411 = vld [vmem:[%s302 + $0xf0] sm:$0xf]
        %v412 = vld [vmem:[%s302 + $0xf4] sm:$0xf]
        %v413 = vld [vmem:[%s302 + $0xf8] sm:$0xf]
        %v414 = vld [vmem:[%s302 + $0xfc] sm:$0xf]
        %v415 = vld [vmem:[#allocation5] sm:$0xf]
        %v416 = vld [vmem:[#allocation5 + $0x4] sm:$0xf]
        %v417 = vld [vmem:[#allocation5 + $0x8] sm:$0xf]
        %v418 = vld [vmem:[#allocation5 + $0xc] sm:$0xf]
        %v419 = vld [vmem:[#allocation5 + $0x10] sm:$0xf]
        %v420 = vld [vmem:[#allocation5 + $0x14] sm:$0xf]
        %v421 = vld [vmem:[#allocation5 + $0x18] sm:$0xf]
        %v422 = vld [vmem:[#allocation5 + $0x1c] sm:$0xf]
        %v423 = vld [vmem:[#allocation5 + $0x20] sm:$0xf]
        %v424 = vld [vmem:[#allocation5 + $0x24] sm:$0xf]
        %v425 = vld [vmem:[#allocation5 + $0x28] sm:$0xf]
        %v426 = vld [vmem:[#allocation5 + $0x2c] sm:$0xf]
        %v427 = vld [vmem:[#allocation5 + $0x30] sm:$0xf]
        %v428 = vld [vmem:[#allocation5 + $0x34] sm:$0xf]
        %v429 = vld [vmem:[#allocation5 + $0x38] sm:$0xf]
        %v430 = vld [vmem:[#allocation5 + $0x3c] sm:$0xf]
        %v431 = vld [vmem:[%s2] sm:$0x1]
        %v433 = vperm.slane %v431, 0
        %v499 = vunpack.c.l.b16 %v351
        %v500 = vunpack.c.l.b16 %v352
        %v501 = vunpack.c.l.b16 %v353
        %v502 = vunpack.c.l.b16 %v354
        %v503 = vunpack.c.l.b16 %v355
        %v504 = vunpack.c.l.b16 %v356
        %v505 = vunpack.c.l.b16 %v357
        %v506 = vunpack.c.l.b16 %v358
        %v507 = vunpack.c.l.b16 %v359
        %v508 = vunpack.c.l.b16 %v360
        %v509 = vunpack.c.l.b16 %v361
        %v510 = vunpack.c.l.b16 %v362
        %v511 = vunpack.c.l.b16 %v363
        %v512 = vunpack.c.l.b16 %v364
        %v513 = vunpack.c.l.b16 %v365
        %v514 = vunpack.c.l.b16 %v366
        %v515 = vunpack.c.l.b16 %v367
        %v516 = vunpack.c.l.b16 %v368
        %v517 = vunpack.c.l.b16 %v369
        %v518 = vunpack.c.l.b16 %v370
        %v519 = vunpack.c.l.b16 %v371
        %v520 = vunpack.c.l.b16 %v372
        %v521 = vunpack.c.l.b16 %v373
        %v522 = vunpack.c.l.b16 %v374
        %v523 = vunpack.c.l.b16 %v375
        %v524 = vunpack.c.l.b16 %v376
        %v525 = vunpack.c.l.b16 %v377
        %v526 = vunpack.c.l.b16 %v378
        %v527 = vunpack.c.l.b16 %v379
        %v528 = vunpack.c.l.b16 %v380
        %v529 = vunpack.c.l.b16 %v381
        %v530 = vunpack.c.l.b16 %v382
        %v531 = vunpack.c.l.b16 %v383
        %v532 = vunpack.c.l.b16 %v384
        %v533 = vunpack.c.l.b16 %v385
        %v534 = vunpack.c.l.b16 %v386
        %v535 = vunpack.c.l.b16 %v387
        %v536 = vunpack.c.l.b16 %v388
        %v537 = vunpack.c.l.b16 %v389
        %v538 = vunpack.c.l.b16 %v390
        %v539 = vunpack.c.l.b16 %v391
        %v540 = vunpack.c.l.b16 %v392
        %v541 = vunpack.c.l.b16 %v393
        %v542 = vunpack.c.l.b16 %v394
        %v543 = vunpack.c.l.b16 %v395
        %v544 = vunpack.c.l.b16 %v396
        %v545 = vunpack.c.l.b16 %v397
        %v546 = vunpack.c.l.b16 %v398
        %v547 = vunpack.c.l.b16 %v399
        %v548 = vunpack.c.l.b16 %v400
        %v549 = vunpack.c.l.b16 %v401
        %v550 = vunpack.c.l.b16 %v402
        %v551 = vunpack.c.l.b16 %v403
        %v552 = vunpack.c.l.b16 %v404
        %v553 = vunpack.c.l.b16 %v405
        %v554 = vunpack.c.l.b16 %v406
        %v555 = vunpack.c.l.b16 %v407
        %v556 = vunpack.c.l.b16 %v408
        %v557 = vunpack.c.l.b16 %v409
        %v558 = vunpack.c.l.b16 %v410
        %v559 = vunpack.c.l.b16 %v411
        %v560 = vunpack.c.l.b16 %v412
        %v561 = vunpack.c.l.b16 %v413
        %v562 = vunpack.c.l.b16 %v414
        %v563 = vpack.c.b16 %v500, %v499
        %v564 = vpack.c.b16 %v502, %v501
        %v565 = vpack.c.b16 %v504, %v503
        %v566 = vpack.c.b16 %v506, %v505
        %v567 = vpack.c.b16 %v508, %v507
        %v568 = vpack.c.b16 %v510, %v509
        %v569 = vpack.c.b16 %v512, %v511
        %v570 = vpack.c.b16 %v514, %v513
        %v571 = vpack.c.b16 %v516, %v515
        %v572 = vpack.c.b16 %v518, %v517
        %v573 = vpack.c.b16 %v520, %v519
        %v574 = vpack.c.b16 %v522, %v521
        %v575 = vpack.c.b16 %v524, %v523
        %v576 = vpack.c.b16 %v526, %v525
        %v577 = vpack.c.b16 %v528, %v527
        %v578 = vpack.c.b16 %v530, %v529
        %v579 = vpack.c.b16 %v532, %v531
        %v580 = vpack.c.b16 %v534, %v533
        %v581 = vpack.c.b16 %v536, %v535
        %v582 = vpack.c.b16 %v538, %v537
        %v583 = vpack.c.b16 %v540, %v539
        %v584 = vpack.c.b16 %v542, %v541
        %v585 = vpack.c.b16 %v544, %v543
        %v586 = vpack.c.b16 %v546, %v545
        %v587 = vpack.c.b16 %v548, %v547
        %v588 = vpack.c.b16 %v550, %v549
        %v589 = vpack.c.b16 %v552, %v551
        %v590 = vpack.c.b16 %v554, %v553
        %v591 = vpack.c.b16 %v556, %v555
        %v592 = vpack.c.b16 %v558, %v557
        %v593 = vpack.c.b16 %v560, %v559
        %v594 = vpack.c.b16 %v562, %v561
        %v643 = vunpack.c.l.b16 %v415
        %v644 = vunpack.c.l.b16 %v416
        %v645 = vunpack.c.l.b16 %v417
        %v646 = vunpack.c.l.b16 %v418
        %v647 = vunpack.c.l.b16 %v419
        %v648 = vunpack.c.l.b16 %v420
        %v649 = vunpack.c.l.b16 %v421
        %v650 = vunpack.c.l.b16 %v422
        %v651 = vunpack.c.l.b16 %v423
        %v652 = vunpack.c.l.b16 %v424
        %v653 = vunpack.c.l.b16 %v425
        %v654 = vunpack.c.l.b16 %v426
        %v655 = vunpack.c.l.b16 %v427
        %v656 = vunpack.c.l.b16 %v428
        %v657 = vunpack.c.l.b16 %v429
        %v658 = vunpack.c.l.b16 %v430
        %v659 = vpack.c.b16 %v644, %v643
        %v660 = vpack.c.b16 %v646, %v645
        %v661 = vpack.c.b16 %v648, %v647
        %v662 = vpack.c.b16 %v650, %v649
        %v663 = vpack.c.b16 %v652, %v651
        %v664 = vpack.c.b16 %v654, %v653
        %v665 = vpack.c.b16 %v656, %v655
        %v666 = vpack.c.b16 %v658, %v657
        %675 = vmatpush.bf16.msra.mxu0 %v666
        %676 = vmatpush.bf16.msra.mxu0 %v665
        %677 = vmatpush.bf16.msra.mxu0 %v664
        %678 = vmatpush.bf16.msra.mxu0 %v663
        %679 = vmatpush.bf16.msra.mxu0 %v662
        %680 = vmatpush.bf16.msra.mxu0 %v661
        %681 = vmatpush.bf16.msra.mxu0 %v660
        %682 = vmatpush.bf16.msra.mxu0 %v659
        %683 = vmatmul.bf16.gmra.mxu0 %v563
        %v684 = vpop.f32.mrf.mxu0
        %v685 = vadd.f32 %v433, %v684
        %v686 = vpop.f32.mrf.mxu0
        %v687 = vadd.f32 %v433, %v686
        %688 = vmatmul.bf16.gmra.mxu0 %v564
        %v689 = vpop.f32.mrf.mxu0
        %v690 = vadd.f32 %v433, %v689
        %v691 = vpop.f32.mrf.mxu0
        %v692 = vadd.f32 %v433, %v691
        %693 = vmatmul.bf16.gmra.mxu0 %v565
        %v694 = vpop.f32.mrf.mxu0
        %v695 = vadd.f32 %v433, %v694
        %v696 = vpop.f32.mrf.mxu0
        %v697 = vadd.f32 %v433, %v696
        %698 = vmatmul.bf16.gmra.mxu0 %v566
        %v699 = vpop.f32.mrf.mxu0
        %v700 = vadd.f32 %v433, %v699
        %v701 = vpop.f32.mrf.mxu0
        %v702 = vadd.f32 %v433, %v701
        %703 = vmatmul.bf16.gmra.mxu0 %v567
        %v704 = vpop.f32.mrf.mxu0
        %v705 = vadd.f32 %v433, %v704
        %v706 = vpop.f32.mrf.mxu0
        %v707 = vadd.f32 %v433, %v706
        %708 = vmatmul.bf16.gmra.mxu0 %v568
        %v709 = vpop.f32.mrf.mxu0
        %v710 = vadd.f32 %v433, %v709
        %v711 = vpop.f32.mrf.mxu0
        %v712 = vadd.f32 %v433, %v711
        %713 = vmatmul.bf16.gmra.mxu0 %v569
        %v714 = vpop.f32.mrf.mxu0
        %v715 = vadd.f32 %v433, %v714
        %v716 = vpop.f32.mrf.mxu0
        %v717 = vadd.f32 %v433, %v716
        %718 = vmatmul.bf16.gmra.mxu0 %v570
        %v719 = vpop.f32.mrf.mxu0
        %v720 = vadd.f32 %v433, %v719
        %v721 = vpop.f32.mrf.mxu0
        %v722 = vadd.f32 %v433, %v721
        %723 = vmatmul.bf16.gmra.mxu0 %v571
        %v724 = vpop.f32.mrf.mxu0
        %v725 = vadd.f32 %v433, %v724
        %v726 = vpop.f32.mrf.mxu0
        %v727 = vadd.f32 %v433, %v726
        %728 = vmatmul.bf16.gmra.mxu0 %v572
        %v729 = vpop.f32.mrf.mxu0
        %v730 = vadd.f32 %v433, %v729
        %v731 = vpop.f32.mrf.mxu0
        %v732 = vadd.f32 %v433, %v731
        %733 = vmatmul.bf16.gmra.mxu0 %v573
        %v734 = vpop.f32.mrf.mxu0
        %v735 = vadd.f32 %v433, %v734
        %v736 = vpop.f32.mrf.mxu0
        %v737 = vadd.f32 %v433, %v736
        %738 = vmatmul.bf16.gmra.mxu0 %v574
        %v739 = vpop.f32.mrf.mxu0
        %v740 = vadd.f32 %v433, %v739
        %v741 = vpop.f32.mrf.mxu0
        %v742 = vadd.f32 %v433, %v741
        %743 = vmatmul.bf16.gmra.mxu0 %v575
        %v744 = vpop.f32.mrf.mxu0
        %v745 = vadd.f32 %v433, %v744
        %v746 = vpop.f32.mrf.mxu0
        %v747 = vadd.f32 %v433, %v746
        %748 = vmatmul.bf16.gmra.mxu0 %v576
        %v749 = vpop.f32.mrf.mxu0
        %v750 = vadd.f32 %v433, %v749
        %v751 = vpop.f32.mrf.mxu0
        %v752 = vadd.f32 %v433, %v751
        %753 = vmatmul.bf16.gmra.mxu0 %v577
        %v754 = vpop.f32.mrf.mxu0
        %v755 = vadd.f32 %v433, %v754
        %v756 = vpop.f32.mrf.mxu0
        %v757 = vadd.f32 %v433, %v756
        %758 = vmatmul.bf16.gmra.mxu0 %v578
        %v759 = vpop.f32.mrf.mxu0
        %v760 = vadd.f32 %v433, %v759
        %v761 = vpop.f32.mrf.mxu0
        %v762 = vadd.f32 %v433, %v761
        %763 = vmatmul.bf16.gmra.mxu0 %v579
        %v764 = vpop.f32.mrf.mxu0
        %v765 = vadd.f32 %v433, %v764
        %v766 = vpop.f32.mrf.mxu0
        %v767 = vadd.f32 %v433, %v766
        %768 = vmatmul.bf16.gmra.mxu0 %v580
        %v769 = vpop.f32.mrf.mxu0
        %v770 = vadd.f32 %v433, %v769
        %v771 = vpop.f32.mrf.mxu0
        %v772 = vadd.f32 %v433, %v771
        %773 = vmatmul.bf16.gmra.mxu0 %v581
        %v774 = vpop.f32.mrf.mxu0
        %v775 = vadd.f32 %v433, %v774
        %v776 = vpop.f32.mrf.mxu0
        %v777 = vadd.f32 %v433, %v776
        %778 = vmatmul.bf16.gmra.mxu0 %v582
        %v779 = vpop.f32.mrf.mxu0
        %v780 = vadd.f32 %v433, %v779
        %v781 = vpop.f32.mrf.mxu0
        %v782 = vadd.f32 %v433, %v781
        %783 = vmatmul.bf16.gmra.mxu0 %v583
        %v784 = vpop.f32.mrf.mxu0
        %v785 = vadd.f32 %v433, %v784
        %v786 = vpop.f32.mrf.mxu0
        %v787 = vadd.f32 %v433, %v786
        %788 = vmatmul.bf16.gmra.mxu0 %v584
        %v789 = vpop.f32.mrf.mxu0
        %v790 = vadd.f32 %v433, %v789
        %v791 = vpop.f32.mrf.mxu0
        %v792 = vadd.f32 %v433, %v791
        %793 = vmatmul.bf16.gmra.mxu0 %v585
        %v794 = vpop.f32.mrf.mxu0
        %v795 = vadd.f32 %v433, %v794
        %v796 = vpop.f32.mrf.mxu0
        %v797 = vadd.f32 %v433, %v796
        %798 = vmatmul.bf16.gmra.mxu0 %v586
        %v799 = vpop.f32.mrf.mxu0
        %v800 = vadd.f32 %v433, %v799
        %v801 = vpop.f32.mrf.mxu0
        %v802 = vadd.f32 %v433, %v801
        %803 = vmatmul.bf16.gmra.mxu0 %v587
        %v804 = vpop.f32.mrf.mxu0
        %v805 = vadd.f32 %v433, %v804
        %v806 = vpop.f32.mrf.mxu0
        %v807 = vadd.f32 %v433, %v806
        %808 = vmatmul.bf16.gmra.mxu0 %v588
        %v809 = vpop.f32.mrf.mxu0
        %v810 = vadd.f32 %v433, %v809
        %v811 = vpop.f32.mrf.mxu0
        %v812 = vadd.f32 %v433, %v811
        %813 = vmatmul.bf16.gmra.mxu0 %v589
        %v814 = vpop.f32.mrf.mxu0
        %v815 = vadd.f32 %v433, %v814
        %v816 = vpop.f32.mrf.mxu0
        %v817 = vadd.f32 %v433, %v816
        %818 = vmatmul.bf16.gmra.mxu0 %v590
        %v819 = vpop.f32.mrf.mxu0
        %v820 = vadd.f32 %v433, %v819
        %v821 = vpop.f32.mrf.mxu0
        %v822 = vadd.f32 %v433, %v821
        %823 = vmatmul.bf16.gmra.mxu0 %v591
        %v824 = vpop.f32.mrf.mxu0
        %v825 = vadd.f32 %v433, %v824
        %v826 = vpop.f32.mrf.mxu0
        %v827 = vadd.f32 %v433, %v826
        %828 = vmatmul.bf16.gmra.mxu0 %v592
        %v829 = vpop.f32.mrf.mxu0
        %v830 = vadd.f32 %v433, %v829
        %v831 = vpop.f32.mrf.mxu0
        %v832 = vadd.f32 %v433, %v831
        %833 = vmatmul.bf16.gmra.mxu0 %v593
        %v834 = vpop.f32.mrf.mxu0
        %v835 = vadd.f32 %v433, %v834
        %v836 = vpop.f32.mrf.mxu0
        %v837 = vadd.f32 %v433, %v836
        %838 = vmatmul.bf16.gmra.mxu0 %v594
        %v839 = vpop.f32.mrf.mxu0
        %v840 = vadd.f32 %v433, %v839
        %v841 = vpop.f32.mrf.mxu0
        %v842 = vadd.f32 %v433, %v841
        %843 = vdwg.mxu0
        %v844 = vmax.f32 %v685, 0.0
        %v845 = vmax.f32 %v687, 0.0
        %v846 = vmax.f32 %v690, 0.0
        %v847 = vmax.f32 %v692, 0.0
        %v848 = vmax.f32 %v695, 0.0
        %v849 = vmax.f32 %v697, 0.0
        %v850 = vmax.f32 %v700, 0.0
        %v851 = vmax.f32 %v702, 0.0
        %v852 = vmax.f32 %v705, 0.0
        %v853 = vmax.f32 %v707, 0.0
        %v854 = vmax.f32 %v710, 0.0
        %v855 = vmax.f32 %v712, 0.0
        %v856 = vmax.f32 %v715, 0.0
        %v857 = vmax.f32 %v717, 0.0
        %v858 = vmax.f32 %v720, 0.0
        %v859 = vmax.f32 %v722, 0.0
        %v860 = vmax.f32 %v725, 0.0
        %v861 = vmax.f32 %v727, 0.0
        %v862 = vmax.f32 %v730, 0.0
        %v863 = vmax.f32 %v732, 0.0
        %v864 = vmax.f32 %v735, 0.0
        %v865 = vmax.f32 %v737, 0.0
        %v866 = vmax.f32 %v740, 0.0
        %v867 = vmax.f32 %v742, 0.0
        %v868 = vmax.f32 %v745, 0.0
        %v869 = vmax.f32 %v747, 0.0
        %v870 = vmax.f32 %v750, 0.0
        %v871 = vmax.f32 %v752, 0.0
        %v872 = vmax.f32 %v755, 0.0
        %v873 = vmax.f32 %v757, 0.0
        %v874 = vmax.f32 %v760, 0.0
        %v875 = vmax.f32 %v762, 0.0
        %v876 = vmax.f32 %v765, 0.0
        %v877 = vmax.f32 %v767, 0.0
        %v878 = vmax.f32 %v770, 0.0
        %v879 = vmax.f32 %v772, 0.0
        %v880 = vmax.f32 %v775, 0.0
        %v881 = vmax.f32 %v777, 0.0
        %v882 = vmax.f32 %v780, 0.0
        %v883 = vmax.f32 %v782, 0.0
        %v884 = vmax.f32 %v785, 0.0
        %v885 = vmax.f32 %v787, 0.0
        %v886 = vmax.f32 %v790, 0.0
        %v887 = vmax.f32 %v792, 0.0
        %v888 = vmax.f32 %v795, 0.0
        %v889 = vmax.f32 %v797, 0.0
        %v890 = vmax.f32 %v800, 0.0
        %v891 = vmax.f32 %v802, 0.0
        %v892 = vmax.f32 %v805, 0.0
        %v893 = vmax.f32 %v807, 0.0
        %v894 = vmax.f32 %v810, 0.0
        %v895 = vmax.f32 %v812, 0.0
        %v896 = vmax.f32 %v815, 0.0
        %v897 = vmax.f32 %v817, 0.0
        %v898 = vmax.f32 %v820, 0.0
        %v899 = vmax.f32 %v822, 0.0
        %v900 = vmax.f32 %v825, 0.0
        %v901 = vmax.f32 %v827, 0.0
        %v902 = vmax.f32 %v830, 0.0
        %v903 = vmax.f32 %v832, 0.0
        %v904 = vmax.f32 %v835, 0.0
        %v905 = vmax.f32 %v837, 0.0
        %v906 = vmax.f32 %v840, 0.0
        %v907 = vmax.f32 %v842, 0.0
        %v908 = vpack.c.bf16 %v845, %v844
        %v909 = vpack.c.bf16 %v847, %v846
        %v910 = vpack.c.bf16 %v849, %v848
        %v911 = vpack.c.bf16 %v851, %v850
        %v912 = vpack.c.bf16 %v853, %v852
        %v913 = vpack.c.bf16 %v855, %v854
        %v914 = vpack.c.bf16 %v857, %v856
        %v915 = vpack.c.bf16 %v859, %v858
        %v916 = vpack.c.bf16 %v861, %v860
        %v917 = vpack.c.bf16 %v863, %v862
        %v918 = vpack.c.bf16 %v865, %v864
        %v919 = vpack.c.bf16 %v867, %v866
        %v920 = vpack.c.bf16 %v869, %v868
        %v921 = vpack.c.bf16 %v871, %v870
        %v922 = vpack.c.bf16 %v873, %v872
        %v923 = vpack.c.bf16 %v875, %v874
        %v924 = vpack.c.bf16 %v877, %v876
        %v925 = vpack.c.bf16 %v879, %v878
        %v926 = vpack.c.bf16 %v881, %v880
        %v927 = vpack.c.bf16 %v883, %v882
        %v928 = vpack.c.bf16 %v885, %v884
        %v929 = vpack.c.bf16 %v887, %v886
        %v930 = vpack.c.bf16 %v889, %v888
        %v931 = vpack.c.bf16 %v891, %v890
        %v932 = vpack.c.bf16 %v893, %v892
        %v933 = vpack.c.bf16 %v895, %v894
        %v934 = vpack.c.bf16 %v897, %v896
        %v935 = vpack.c.bf16 %v899, %v898
        %v936 = vpack.c.bf16 %v901, %v900
        %v937 = vpack.c.bf16 %v903, %v902
        %v938 = vpack.c.bf16 %v905, %v904
        %v939 = vpack.c.bf16 %v907, %v906
        %v940 = vld [vmem:[#allocation7] sm:$0xf]
        %v941 = vld [vmem:[#allocation7 + $0x4] sm:$0xf]
        %v942 = vld [vmem:[#allocation7 + $0x8] sm:$0xf]
        %v943 = vld [vmem:[#allocation7 + $0xc] sm:$0xf]
        %v944 = vld [vmem:[#allocation7 + $0x10] sm:$0xf]
        %v945 = vld [vmem:[#allocation7 + $0x14] sm:$0xf]
        %v946 = vld [vmem:[#allocation7 + $0x18] sm:$0xf]
        %v947 = vld [vmem:[#allocation7 + $0x1c] sm:$0xf]
        %v948 = vld [vmem:[#allocation7 + $0x20] sm:$0xf]
        %v949 = vld [vmem:[#allocation7 + $0x24] sm:$0xf]
        %v950 = vld [vmem:[#allocation7 + $0x28] sm:$0xf]
        %v951 = vld [vmem:[#allocation7 + $0x2c] sm:$0xf]
        %v952 = vld [vmem:[#allocation7 + $0x30] sm:$0xf]
        %v953 = vld [vmem:[#allocation7 + $0x34] sm:$0xf]
        %v954 = vld [vmem:[#allocation7 + $0x38] sm:$0xf]
        %v955 = vld [vmem:[#allocation7 + $0x3c] sm:$0xf]
        %v956 = vld [vmem:[%s4] sm:$0x1]
        %v958 = vperm.slane %v956, 0
        %v976 = vunpack.c.l.b16 %v940
        %v977 = vunpack.c.l.b16 %v941
        %v978 = vunpack.c.l.b16 %v942
        %v979 = vunpack.c.l.b16 %v943
        %v980 = vunpack.c.l.b16 %v944
        %v981 = vunpack.c.l.b16 %v945
        %v982 = vunpack.c.l.b16 %v946
        %v983 = vunpack.c.l.b16 %v947
        %v984 = vunpack.c.l.b16 %v948
        %v985 = vunpack.c.l.b16 %v949
        %v986 = vunpack.c.l.b16 %v950
        %v987 = vunpack.c.l.b16 %v951
        %v988 = vunpack.c.l.b16 %v952
        %v989 = vunpack.c.l.b16 %v953
        %v990 = vunpack.c.l.b16 %v954
        %v991 = vunpack.c.l.b16 %v955
        %v992 = vpack.c.b16 %v977, %v976
        %v993 = vpack.c.b16 %v979, %v978
        %v994 = vpack.c.b16 %v981, %v980
        %v995 = vpack.c.b16 %v983, %v982
        %v996 = vpack.c.b16 %v985, %v984
        %v997 = vpack.c.b16 %v987, %v986
        %v998 = vpack.c.b16 %v989, %v988
        %v999 = vpack.c.b16 %v991, %v990
        %1008 = vmatpush.bf16.msra.mxu0 %v999
        %1009 = vmatpush.bf16.msra.mxu0 %v998
        %1010 = vmatpush.bf16.msra.mxu0 %v997
        %1011 = vmatpush.bf16.msra.mxu0 %v996
        %1012 = vmatpush.bf16.msra.mxu0 %v995
        %1013 = vmatpush.bf16.msra.mxu0 %v994
        %1014 = vmatpush.bf16.msra.mxu0 %v993
        %1015 = vmatpush.bf16.msra.mxu0 %v992
        %1016 = vmatmul.bf16.gmra.mxu0 %v908
        %v1017 = vpop.f32.mrf.mxu0
        %v1018 = vadd.f32 %v958, %v1017
        %v1019 = vpop.f32.mrf.mxu0
        %v1020 = vadd.f32 %v958, %v1019
        %1021 = vmatmul.bf16.gmra.mxu0 %v909
        %v1022 = vpop.f32.mrf.mxu0
        %v1023 = vadd.f32 %v958, %v1022
        %v1024 = vpop.f32.mrf.mxu0
        %v1025 = vadd.f32 %v958, %v1024
        %1026 = vmatmul.bf16.gmra.mxu0 %v910
        %v1027 = vpop.f32.mrf.mxu0
        %v1028 = vadd.f32 %v958, %v1027
        %v1029 = vpop.f32.mrf.mxu0
        %v1030 = vadd.f32 %v958, %v1029
        %1031 = vmatmul.bf16.gmra.mxu0 %v911
        %v1032 = vpop.f32.mrf.mxu0
        %v1033 = vadd.f32 %v958, %v1032
        %v1034 = vpop.f32.mrf.mxu0
        %v1035 = vadd.f32 %v958, %v1034
        %1036 = vmatmul.bf16.gmra.mxu0 %v912
        %v1037 = vpop.f32.mrf.mxu0
        %v1038 = vadd.f32 %v958, %v1037
        %v1039 = vpop.f32.mrf.mxu0
        %v1040 = vadd.f32 %v958, %v1039
        %1041 = vmatmul.bf16.gmra.mxu0 %v913
        %v1042 = vpop.f32.mrf.mxu0
        %v1043 = vadd.f32 %v958, %v1042
        %v1044 = vpop.f32.mrf.mxu0
        %v1045 = vadd.f32 %v958, %v1044
        %1046 = vmatmul.bf16.gmra.mxu0 %v914
        %v1047 = vpop.f32.mrf.mxu0
        %v1048 = vadd.f32 %v958, %v1047
        %v1049 = vpop.f32.mrf.mxu0
        %v1050 = vadd.f32 %v958, %v1049
        %1051 = vmatmul.bf16.gmra.mxu0 %v915
        %v1052 = vpop.f32.mrf.mxu0
        %v1053 = vadd.f32 %v958, %v1052
        %v1054 = vpop.f32.mrf.mxu0
        %v1055 = vadd.f32 %v958, %v1054
        %1056 = vmatmul.bf16.gmra.mxu0 %v916
        %v1057 = vpop.f32.mrf.mxu0
        %v1058 = vadd.f32 %v958, %v1057
        %v1059 = vpop.f32.mrf.mxu0
        %v1060 = vadd.f32 %v958, %v1059
        %1061 = vmatmul.bf16.gmra.mxu0 %v917
        %v1062 = vpop.f32.mrf.mxu0
        %v1063 = vadd.f32 %v958, %v1062
        %v1064 = vpop.f32.mrf.mxu0
        %v1065 = vadd.f32 %v958, %v1064
        %1066 = vmatmul.bf16.gmra.mxu0 %v918
        %v1067 = vpop.f32.mrf.mxu0
        %v1068 = vadd.f32 %v958, %v1067
        %v1069 = vpop.f32.mrf.mxu0
        %v1070 = vadd.f32 %v958, %v1069
        %1071 = vmatmul.bf16.gmra.mxu0 %v919
        %v1072 = vpop.f32.mrf.mxu0
        %v1073 = vadd.f32 %v958, %v1072
        %v1074 = vpop.f32.mrf.mxu0
        %v1075 = vadd.f32 %v958, %v1074
        %1076 = vmatmul.bf16.gmra.mxu0 %v920
        %v1077 = vpop.f32.mrf.mxu0
        %v1078 = vadd.f32 %v958, %v1077
        %v1079 = vpop.f32.mrf.mxu0
        %v1080 = vadd.f32 %v958, %v1079
        %1081 = vmatmul.bf16.gmra.mxu0 %v921
        %v1082 = vpop.f32.mrf.mxu0
        %v1083 = vadd.f32 %v958, %v1082
        %v1084 = vpop.f32.mrf.mxu0
        %v1085 = vadd.f32 %v958, %v1084
        %1086 = vmatmul.bf16.gmra.mxu0 %v922
        %v1087 = vpop.f32.mrf.mxu0
        %v1088 = vadd.f32 %v958, %v1087
        %v1089 = vpop.f32.mrf.mxu0
        %v1090 = vadd.f32 %v958, %v1089
        %1091 = vmatmul.bf16.gmra.mxu0 %v923
        %v1092 = vpop.f32.mrf.mxu0
        %v1093 = vadd.f32 %v958, %v1092
        %v1094 = vpop.f32.mrf.mxu0
        %v1095 = vadd.f32 %v958, %v1094
        %1096 = vmatmul.bf16.gmra.mxu0 %v924
        %v1097 = vpop.f32.mrf.mxu0
        %v1098 = vadd.f32 %v958, %v1097
        %v1099 = vpop.f32.mrf.mxu0
        %v1100 = vadd.f32 %v958, %v1099
        %1101 = vmatmul.bf16.gmra.mxu0 %v925
        %v1102 = vpop.f32.mrf.mxu0
        %v1103 = vadd.f32 %v958, %v1102
        %v1104 = vpop.f32.mrf.mxu0
        %v1105 = vadd.f32 %v958, %v1104
        %1106 = vmatmul.bf16.gmra.mxu0 %v926
        %v1107 = vpop.f32.mrf.mxu0
        %v1108 = vadd.f32 %v958, %v1107
        %v1109 = vpop.f32.mrf.mxu0
        %v1110 = vadd.f32 %v958, %v1109
        %1111 = vmatmul.bf16.gmra.mxu0 %v927
        %v1112 = vpop.f32.mrf.mxu0
        %v1113 = vadd.f32 %v958, %v1112
        %v1114 = vpop.f32.mrf.mxu0
        %v1115 = vadd.f32 %v958, %v1114
        %1116 = vmatmul.bf16.gmra.mxu0 %v928
        %v1117 = vpop.f32.mrf.mxu0
        %v1118 = vadd.f32 %v958, %v1117
        %v1119 = vpop.f32.mrf.mxu0
        %v1120 = vadd.f32 %v958, %v1119
        %1121 = vmatmul.bf16.gmra.mxu0 %v929
        %v1122 = vpop.f32.mrf.mxu0
        %v1123 = vadd.f32 %v958, %v1122
        %v1124 = vpop.f32.mrf.mxu0
        %v1125 = vadd.f32 %v958, %v1124
        %1126 = vmatmul.bf16.gmra.mxu0 %v930
        %v1127 = vpop.f32.mrf.mxu0
        %v1128 = vadd.f32 %v958, %v1127
        %v1129 = vpop.f32.mrf.mxu0
        %v1130 = vadd.f32 %v958, %v1129
        %1131 = vmatmul.bf16.gmra.mxu0 %v931
        %v1132 = vpop.f32.mrf.mxu0
        %v1133 = vadd.f32 %v958, %v1132
        %v1134 = vpop.f32.mrf.mxu0
        %v1135 = vadd.f32 %v958, %v1134
        %1136 = vmatmul.bf16.gmra.mxu0 %v932
        %v1137 = vpop.f32.mrf.mxu0
        %v1138 = vadd.f32 %v958, %v1137
        %v1139 = vpop.f32.mrf.mxu0
        %v1140 = vadd.f32 %v958, %v1139
        %1141 = vmatmul.bf16.gmra.mxu0 %v933
        %v1142 = vpop.f32.mrf.mxu0
        %v1143 = vadd.f32 %v958, %v1142
        %v1144 = vpop.f32.mrf.mxu0
        %v1145 = vadd.f32 %v958, %v1144
        %1146 = vmatmul.bf16.gmra.mxu0 %v934
        %v1147 = vpop.f32.mrf.mxu0
        %v1148 = vadd.f32 %v958, %v1147
        %v1149 = vpop.f32.mrf.mxu0
        %v1150 = vadd.f32 %v958, %v1149
        %1151 = vmatmul.bf16.gmra.mxu0 %v935
        %v1152 = vpop.f32.mrf.mxu0
        %v1153 = vadd.f32 %v958, %v1152
        %v1154 = vpop.f32.mrf.mxu0
        %v1155 = vadd.f32 %v958, %v1154
        %1156 = vmatmul.bf16.gmra.mxu0 %v936
        %v1157 = vpop.f32.mrf.mxu0
        %v1158 = vadd.f32 %v958, %v1157
        %v1159 = vpop.f32.mrf.mxu0
        %v1160 = vadd.f32 %v958, %v1159
        %1161 = vmatmul.bf16.gmra.mxu0 %v937
        %v1162 = vpop.f32.mrf.mxu0
        %v1163 = vadd.f32 %v958, %v1162
        %v1164 = vpop.f32.mrf.mxu0
        %v1165 = vadd.f32 %v958, %v1164
        %1166 = vmatmul.bf16.gmra.mxu0 %v938
        %v1167 = vpop.f32.mrf.mxu0
        %v1168 = vadd.f32 %v958, %v1167
        %v1169 = vpop.f32.mrf.mxu0
        %v1170 = vadd.f32 %v958, %v1169
        %1171 = vmatmul.bf16.gmra.mxu0 %v939
        %v1172 = vpop.f32.mrf.mxu0
        %v1173 = vadd.f32 %v958, %v1172
        %v1174 = vpop.f32.mrf.mxu0
        %v1175 = vadd.f32 %v958, %v1174
        %1176 = vdwg.mxu0
        %v1177 = vmax.f32 %v1018, 0.0
        %v1178 = vmax.f32 %v1020, 0.0
        %v1179 = vmax.f32 %v1023, 0.0
        %v1180 = vmax.f32 %v1025, 0.0
        %v1181 = vmax.f32 %v1028, 0.0
        %v1182 = vmax.f32 %v1030, 0.0
        %v1183 = vmax.f32 %v1033, 0.0
        %v1184 = vmax.f32 %v1035, 0.0
        %v1185 = vmax.f32 %v1038, 0.0
        %v1186 = vmax.f32 %v1040, 0.0
        %v1187 = vmax.f32 %v1043, 0.0
        %v1188 = vmax.f32 %v1045, 0.0
        %v1189 = vmax.f32 %v1048, 0.0
        %v1190 = vmax.f32 %v1050, 0.0
        %v1191 = vmax.f32 %v1053, 0.0
        %v1192 = vmax.f32 %v1055, 0.0
        %v1193 = vmax.f32 %v1058, 0.0
        %v1194 = vmax.f32 %v1060, 0.0
        %v1195 = vmax.f32 %v1063, 0.0
        %v1196 = vmax.f32 %v1065, 0.0
        %v1197 = vmax.f32 %v1068, 0.0
        %v1198 = vmax.f32 %v1070, 0.0
        %v1199 = vmax.f32 %v1073, 0.0
        %v1200 = vmax.f32 %v1075, 0.0
        %v1201 = vmax.f32 %v1078, 0.0
        %v1202 = vmax.f32 %v1080, 0.0
        %v1203 = vmax.f32 %v1083, 0.0
        %v1204 = vmax.f32 %v1085, 0.0
        %v1205 = vmax.f32 %v1088, 0.0
        %v1206 = vmax.f32 %v1090, 0.0
        %v1207 = vmax.f32 %v1093, 0.0
        %v1208 = vmax.f32 %v1095, 0.0
        %v1209 = vmax.f32 %v1098, 0.0
        %v1210 = vmax.f32 %v1100, 0.0
        %v1211 = vmax.f32 %v1103, 0.0
        %v1212 = vmax.f32 %v1105, 0.0
        %v1213 = vmax.f32 %v1108, 0.0
        %v1214 = vmax.f32 %v1110, 0.0
        %v1215 = vmax.f32 %v1113, 0.0
        %v1216 = vmax.f32 %v1115, 0.0
        %v1217 = vmax.f32 %v1118, 0.0
        %v1218 = vmax.f32 %v1120, 0.0
        %v1219 = vmax.f32 %v1123, 0.0
        %v1220 = vmax.f32 %v1125, 0.0
        %v1221 = vmax.f32 %v1128, 0.0
        %v1222 = vmax.f32 %v1130, 0.0
        %v1223 = vmax.f32 %v1133, 0.0
        %v1224 = vmax.f32 %v1135, 0.0
        %v1225 = vmax.f32 %v1138, 0.0
        %v1226 = vmax.f32 %v1140, 0.0
        %v1227 = vmax.f32 %v1143, 0.0
        %v1228 = vmax.f32 %v1145, 0.0
        %v1229 = vmax.f32 %v1148, 0.0
        %v1230 = vmax.f32 %v1150, 0.0
        %v1231 = vmax.f32 %v1153, 0.0
        %v1232 = vmax.f32 %v1155, 0.0
        %v1233 = vmax.f32 %v1158, 0.0
        %v1234 = vmax.f32 %v1160, 0.0
        %v1235 = vmax.f32 %v1163, 0.0
        %v1236 = vmax.f32 %v1165, 0.0
        %v1237 = vmax.f32 %v1168, 0.0
        %v1238 = vmax.f32 %v1170, 0.0
        %v1239 = vmax.f32 %v1173, 0.0
        %v1240 = vmax.f32 %v1175, 0.0
        %v1241 = vpack.c.bf16 %v1178, %v1177
        %v1242 = vpack.c.bf16 %v1180, %v1179
        %v1243 = vpack.c.bf16 %v1182, %v1181
        %v1244 = vpack.c.bf16 %v1184, %v1183
        %v1245 = vpack.c.bf16 %v1186, %v1185
        %v1246 = vpack.c.bf16 %v1188, %v1187
        %v1247 = vpack.c.bf16 %v1190, %v1189
        %v1248 = vpack.c.bf16 %v1192, %v1191
        %v1249 = vpack.c.bf16 %v1194, %v1193
        %v1250 = vpack.c.bf16 %v1196, %v1195
        %v1251 = vpack.c.bf16 %v1198, %v1197
        %v1252 = vpack.c.bf16 %v1200, %v1199
        %v1253 = vpack.c.bf16 %v1202, %v1201
        %v1254 = vpack.c.bf16 %v1204, %v1203
        %v1255 = vpack.c.bf16 %v1206, %v1205
        %v1256 = vpack.c.bf16 %v1208, %v1207
        %v1257 = vpack.c.bf16 %v1210, %v1209
        %v1258 = vpack.c.bf16 %v1212, %v1211
        %v1259 = vpack.c.bf16 %v1214, %v1213
        %v1260 = vpack.c.bf16 %v1216, %v1215
        %v1261 = vpack.c.bf16 %v1218, %v1217
        %v1262 = vpack.c.bf16 %v1220, %v1219
        %v1263 = vpack.c.bf16 %v1222, %v1221
        %v1264 = vpack.c.bf16 %v1224, %v1223
        %v1265 = vpack.c.bf16 %v1226, %v1225
        %v1266 = vpack.c.bf16 %v1228, %v1227
        %v1267 = vpack.c.bf16 %v1230, %v1229
        %v1268 = vpack.c.bf16 %v1232, %v1231
        %v1269 = vpack.c.bf16 %v1234, %v1233
        %v1270 = vpack.c.bf16 %v1236, %v1235
        %v1271 = vpack.c.bf16 %v1238, %v1237
        %v1272 = vpack.c.bf16 %v1240, %v1239
        %v1273 = vld [vmem:[#allocation8] sm:$0xf]
        %v1274 = vld [vmem:[#allocation8 + $0x4] sm:$0xf]
        %v1275 = vld [vmem:[#allocation8 + $0x8] sm:$0xf]
        %v1276 = vld [vmem:[#allocation8 + $0xc] sm:$0xf]
        %v1277 = vld [vmem:[#allocation8 + $0x10] sm:$0xf]
        %v1278 = vld [vmem:[#allocation8 + $0x14] sm:$0xf]
        %v1279 = vld [vmem:[#allocation8 + $0x18] sm:$0xf]
        %v1280 = vld [vmem:[#allocation8 + $0x1c] sm:$0xf]
        %v1281 = vld [vmem:[#allocation8 + $0x20] sm:$0xf]
        %v1282 = vld [vmem:[#allocation8 + $0x24] sm:$0xf]
        %v1283 = vld [vmem:[#allocation8 + $0x28] sm:$0xf]
        %v1284 = vld [vmem:[#allocation8 + $0x2c] sm:$0xf]
        %v1285 = vld [vmem:[#allocation8 + $0x30] sm:$0xf]
        %v1286 = vld [vmem:[#allocation8 + $0x34] sm:$0xf]
        %v1287 = vld [vmem:[#allocation8 + $0x38] sm:$0xf]
        %v1288 = vld [vmem:[#allocation8 + $0x3c] sm:$0xf]
        %v1289 = vld [vmem:[%s6] sm:$0x1]
        %v1291 = vperm.slane %v1289, 0
        %v1309 = vunpack.c.l.b16 %v1273
        %v1310 = vunpack.c.l.b16 %v1274
        %v1311 = vunpack.c.l.b16 %v1275
        %v1312 = vunpack.c.l.b16 %v1276
        %v1313 = vunpack.c.l.b16 %v1277
        %v1314 = vunpack.c.l.b16 %v1278
        %v1315 = vunpack.c.l.b16 %v1279
        %v1316 = vunpack.c.l.b16 %v1280
        %v1317 = vunpack.c.l.b16 %v1281
        %v1318 = vunpack.c.l.b16 %v1282
        %v1319 = vunpack.c.l.b16 %v1283
        %v1320 = vunpack.c.l.b16 %v1284
        %v1321 = vunpack.c.l.b16 %v1285
        %v1322 = vunpack.c.l.b16 %v1286
        %v1323 = vunpack.c.l.b16 %v1287
        %v1324 = vunpack.c.l.b16 %v1288
        %v1325 = vpack.c.b16 %v1310, %v1309
        %v1326 = vpack.c.b16 %v1312, %v1311
        %v1327 = vpack.c.b16 %v1314, %v1313
        %v1328 = vpack.c.b16 %v1316, %v1315
        %v1329 = vpack.c.b16 %v1318, %v1317
        %v1330 = vpack.c.b16 %v1320, %v1319
        %v1331 = vpack.c.b16 %v1322, %v1321
        %v1332 = vpack.c.b16 %v1324, %v1323
        %1341 = vmatpush.bf16.msra.mxu0 %v1332
        %1342 = vmatpush.bf16.msra.mxu0 %v1331
        %1343 = vmatpush.bf16.msra.mxu0 %v1330
        %1344 = vmatpush.bf16.msra.mxu0 %v1329
        %1345 = vmatpush.bf16.msra.mxu0 %v1328
        %1346 = vmatpush.bf16.msra.mxu0 %v1327
        %1347 = vmatpush.bf16.msra.mxu0 %v1326
        %1348 = vmatpush.bf16.msra.mxu0 %v1325
        %1349 = vmatmul.bf16.gmra.mxu0 %v1241
        %v1350 = vpop.f32.mrf.mxu0
        %v1351 = vadd.f32 %v1291, %v1350
        %v1352 = vpop.f32.mrf.mxu0
        %v1353 = vadd.f32 %v1291, %v1352
        %1354 = vmatmul.bf16.gmra.mxu0 %v1242
        %v1355 = vpop.f32.mrf.mxu0
        %v1356 = vadd.f32 %v1291, %v1355
        %v1357 = vpop.f32.mrf.mxu0
        %v1358 = vadd.f32 %v1291, %v1357
        %1359 = vmatmul.bf16.gmra.mxu0 %v1243
        %v1360 = vpop.f32.mrf.mxu0
        %v1361 = vadd.f32 %v1291, %v1360
        %v1362 = vpop.f32.mrf.mxu0
        %v1363 = vadd.f32 %v1291, %v1362
        %1364 = vmatmul.bf16.gmra.mxu0 %v1244
        %v1365 = vpop.f32.mrf.mxu0
        %v1366 = vadd.f32 %v1291, %v1365
        %v1367 = vpop.f32.mrf.mxu0
        %v1368 = vadd.f32 %v1291, %v1367
        %1369 = vmatmul.bf16.gmra.mxu0 %v1245
        %v1370 = vpop.f32.mrf.mxu0
        %v1371 = vadd.f32 %v1291, %v1370
        %v1372 = vpop.f32.mrf.mxu0
        %v1373 = vadd.f32 %v1291, %v1372
        %1374 = vmatmul.bf16.gmra.mxu0 %v1246
        %v1375 = vpop.f32.mrf.mxu0
        %v1376 = vadd.f32 %v1291, %v1375
        %v1377 = vpop.f32.mrf.mxu0
        %v1378 = vadd.f32 %v1291, %v1377
        %1379 = vmatmul.bf16.gmra.mxu0 %v1247
        %v1380 = vpop.f32.mrf.mxu0
        %v1381 = vadd.f32 %v1291, %v1380
        %v1382 = vpop.f32.mrf.mxu0
        %v1383 = vadd.f32 %v1291, %v1382
        %1384 = vmatmul.bf16.gmra.mxu0 %v1248
        %v1385 = vpop.f32.mrf.mxu0
        %v1386 = vadd.f32 %v1291, %v1385
        %v1387 = vpop.f32.mrf.mxu0
        %v1388 = vadd.f32 %v1291, %v1387
        %1389 = vmatmul.bf16.gmra.mxu0 %v1249
        %v1390 = vpop.f32.mrf.mxu0
        %v1391 = vadd.f32 %v1291, %v1390
        %v1392 = vpop.f32.mrf.mxu0
        %v1393 = vadd.f32 %v1291, %v1392
        %1394 = vmatmul.bf16.gmra.mxu0 %v1250
        %v1395 = vpop.f32.mrf.mxu0
        %v1396 = vadd.f32 %v1291, %v1395
        %v1397 = vpop.f32.mrf.mxu0
        %v1398 = vadd.f32 %v1291, %v1397
        %1399 = vmatmul.bf16.gmra.mxu0 %v1251
        %v1400 = vpop.f32.mrf.mxu0
        %v1401 = vadd.f32 %v1291, %v1400
        %v1402 = vpop.f32.mrf.mxu0
        %v1403 = vadd.f32 %v1291, %v1402
        %1404 = vmatmul.bf16.gmra.mxu0 %v1252
        %v1405 = vpop.f32.mrf.mxu0
        %v1406 = vadd.f32 %v1291, %v1405
        %v1407 = vpop.f32.mrf.mxu0
        %v1408 = vadd.f32 %v1291, %v1407
        %1409 = vmatmul.bf16.gmra.mxu0 %v1253
        %v1410 = vpop.f32.mrf.mxu0
        %v1411 = vadd.f32 %v1291, %v1410
        %v1412 = vpop.f32.mrf.mxu0
        %v1413 = vadd.f32 %v1291, %v1412
        %1414 = vmatmul.bf16.gmra.mxu0 %v1254
        %v1415 = vpop.f32.mrf.mxu0
        %v1416 = vadd.f32 %v1291, %v1415
        %v1417 = vpop.f32.mrf.mxu0
        %v1418 = vadd.f32 %v1291, %v1417
        %1419 = vmatmul.bf16.gmra.mxu0 %v1255
        %v1420 = vpop.f32.mrf.mxu0
        %v1421 = vadd.f32 %v1291, %v1420
        %v1422 = vpop.f32.mrf.mxu0
        %v1423 = vadd.f32 %v1291, %v1422
        %1424 = vmatmul.bf16.gmra.mxu0 %v1256
        %v1425 = vpop.f32.mrf.mxu0
        %v1426 = vadd.f32 %v1291, %v1425
        %v1427 = vpop.f32.mrf.mxu0
        %v1428 = vadd.f32 %v1291, %v1427
        %1429 = vmatmul.bf16.gmra.mxu0 %v1257
        %v1430 = vpop.f32.mrf.mxu0
        %v1431 = vadd.f32 %v1291, %v1430
        %v1432 = vpop.f32.mrf.mxu0
        %v1433 = vadd.f32 %v1291, %v1432
        %1434 = vmatmul.bf16.gmra.mxu0 %v1258
        %v1435 = vpop.f32.mrf.mxu0
        %v1436 = vadd.f32 %v1291, %v1435
        %v1437 = vpop.f32.mrf.mxu0
        %v1438 = vadd.f32 %v1291, %v1437
        %1439 = vmatmul.bf16.gmra.mxu0 %v1259
        %v1440 = vpop.f32.mrf.mxu0
        %v1441 = vadd.f32 %v1291, %v1440
        %v1442 = vpop.f32.mrf.mxu0
        %v1443 = vadd.f32 %v1291, %v1442
        %1444 = vmatmul.bf16.gmra.mxu0 %v1260
        %v1445 = vpop.f32.mrf.mxu0
        %v1446 = vadd.f32 %v1291, %v1445
        %v1447 = vpop.f32.mrf.mxu0
        %v1448 = vadd.f32 %v1291, %v1447
        %1449 = vmatmul.bf16.gmra.mxu0 %v1261
        %v1450 = vpop.f32.mrf.mxu0
        %v1451 = vadd.f32 %v1291, %v1450
        %v1452 = vpop.f32.mrf.mxu0
        %v1453 = vadd.f32 %v1291, %v1452
        %1454 = vmatmul.bf16.gmra.mxu0 %v1262
        %v1455 = vpop.f32.mrf.mxu0
        %v1456 = vadd.f32 %v1291, %v1455
        %v1457 = vpop.f32.mrf.mxu0
        %v1458 = vadd.f32 %v1291, %v1457
        %1459 = vmatmul.bf16.gmra.mxu0 %v1263
        %v1460 = vpop.f32.mrf.mxu0
        %v1461 = vadd.f32 %v1291, %v1460
        %v1462 = vpop.f32.mrf.mxu0
        %v1463 = vadd.f32 %v1291, %v1462
        %1464 = vmatmul.bf16.gmra.mxu0 %v1264
        %v1465 = vpop.f32.mrf.mxu0
        %v1466 = vadd.f32 %v1291, %v1465
        %v1467 = vpop.f32.mrf.mxu0
        %v1468 = vadd.f32 %v1291, %v1467
        %1469 = vmatmul.bf16.gmra.mxu0 %v1265
        %v1470 = vpop.f32.mrf.mxu0
        %v1471 = vadd.f32 %v1291, %v1470
        %v1472 = vpop.f32.mrf.mxu0
        %v1473 = vadd.f32 %v1291, %v1472
        %1474 = vmatmul.bf16.gmra.mxu0 %v1266
        %v1475 = vpop.f32.mrf.mxu0
        %v1476 = vadd.f32 %v1291, %v1475
        %v1477 = vpop.f32.mrf.mxu0
        %v1478 = vadd.f32 %v1291, %v1477
        %1479 = vmatmul.bf16.gmra.mxu0 %v1267
        %v1480 = vpop.f32.mrf.mxu0
        %v1481 = vadd.f32 %v1291, %v1480
        %v1482 = vpop.f32.mrf.mxu0
        %v1483 = vadd.f32 %v1291, %v1482
        %1484 = vmatmul.bf16.gmra.mxu0 %v1268
        %v1485 = vpop.f32.mrf.mxu0
        %v1486 = vadd.f32 %v1291, %v1485
        %v1487 = vpop.f32.mrf.mxu0
        %v1488 = vadd.f32 %v1291, %v1487
        %1489 = vmatmul.bf16.gmra.mxu0 %v1269
        %v1490 = vpop.f32.mrf.mxu0
        %v1491 = vadd.f32 %v1291, %v1490
        %v1492 = vpop.f32.mrf.mxu0
        %v1493 = vadd.f32 %v1291, %v1492
        %1494 = vmatmul.bf16.gmra.mxu0 %v1270
        %v1495 = vpop.f32.mrf.mxu0
        %v1496 = vadd.f32 %v1291, %v1495
        %v1497 = vpop.f32.mrf.mxu0
        %v1498 = vadd.f32 %v1291, %v1497
        %1499 = vmatmul.bf16.gmra.mxu0 %v1271
        %v1500 = vpop.f32.mrf.mxu0
        %v1501 = vadd.f32 %v1291, %v1500
        %v1502 = vpop.f32.mrf.mxu0
        %v1503 = vadd.f32 %v1291, %v1502
        %1504 = vmatmul.bf16.gmra.mxu0 %v1272
        %v1505 = vpop.f32.mrf.mxu0
        %v1506 = vadd.f32 %v1291, %v1505
        %v1507 = vpop.f32.mrf.mxu0
        %v1508 = vadd.f32 %v1291, %v1507
        %1509 = vdwg.mxu0
        %1510 = vst [vmem:[%s348] sm:$0xff] %v1351
        %1511 = vst [vmem:[%s348 + $0x8] sm:$0xff] %v1353
        %1512 = vst [vmem:[%s348 + $0x10] sm:$0xff] %v1356
        %1513 = vst [vmem:[%s348 + $0x18] sm:$0xff] %v1358
        %1514 = vst [vmem:[%s348 + $0x20] sm:$0xff] %v1361
        %1515 = vst [vmem:[%s348 + $0x28] sm:$0xff] %v1363
        %1516 = vst [vmem:[%s348 + $0x30] sm:$0xff] %v1366
        %1517 = vst [vmem:[%s348 + $0x38] sm:$0xff] %v1368
        %1518 = vst [vmem:[%s348 + $0x40] sm:$0xff] %v1371
        %1519 = vst [vmem:[%s348 + $0x48] sm:$0xff] %v1373
        %1520 = vst [vmem:[%s348 + $0x50] sm:$0xff] %v1376
        %1521 = vst [vmem:[%s348 + $0x58] sm:$0xff] %v1378
        %1522 = vst [vmem:[%s348 + $0x60] sm:$0xff] %v1381
        %1523 = vst [vmem:[%s348 + $0x68] sm:$0xff] %v1383
        %1524 = vst [vmem:[%s348 + $0x70] sm:$0xff] %v1386
        %1525 = vst [vmem:[%s348 + $0x78] sm:$0xff] %v1388
        %1526 = vst [vmem:[%s348 + $0x80] sm:$0xff] %v1391
        %1527 = vst [vmem:[%s348 + $0x88] sm:$0xff] %v1393
        %1528 = vst [vmem:[%s348 + $0x90] sm:$0xff] %v1396
        %1529 = vst [vmem:[%s348 + $0x98] sm:$0xff] %v1398
        %1530 = vst [vmem:[%s348 + $0xa0] sm:$0xff] %v1401
        %1531 = vst [vmem:[%s348 + $0xa8] sm:$0xff] %v1403
        %1532 = vst [vmem:[%s348 + $0xb0] sm:$0xff] %v1406
        %1533 = vst [vmem:[%s348 + $0xb8] sm:$0xff] %v1408
        %1534 = vst [vmem:[%s348 + $0xc0] sm:$0xff] %v1411
        %1535 = vst [vmem:[%s348 + $0xc8] sm:$0xff] %v1413
        %1536 = vst [vmem:[%s348 + $0xd0] sm:$0xff] %v1416
        %1537 = vst [vmem:[%s348 + $0xd8] sm:$0xff] %v1418
        %1538 = vst [vmem:[%s348 + $0xe0] sm:$0xff] %v1421
        %1539 = vst [vmem:[%s348 + $0xe8] sm:$0xff] %v1423
        %1540 = vst [vmem:[%s348 + $0xf0] sm:$0xff] %v1426
        %1541 = vst [vmem:[%s348 + $0xf8] sm:$0xff] %v1428
        %1542 = vst [vmem:[%s348 + $0x100] sm:$0xff] %v1431
        %1543 = vst [vmem:[%s348 + $0x108] sm:$0xff] %v1433
        %1544 = vst [vmem:[%s348 + $0x110] sm:$0xff] %v1436
        %1545 = vst [vmem:[%s348 + $0x118] sm:$0xff] %v1438
        %1546 = vst [vmem:[%s348 + $0x120] sm:$0xff] %v1441
        %1547 = vst [vmem:[%s348 + $0x128] sm:$0xff] %v1443
        %1548 = vst [vmem:[%s348 + $0x130] sm:$0xff] %v1446
        %1549 = vst [vmem:[%s348 + $0x138] sm:$0xff] %v1448
        %1550 = vst [vmem:[%s348 + $0x140] sm:$0xff] %v1451
        %1551 = vst [vmem:[%s348 + $0x148] sm:$0xff] %v1453
        %1552 = vst [vmem:[%s348 + $0x150] sm:$0xff] %v1456
        %1553 = vst [vmem:[%s348 + $0x158] sm:$0xff] %v1458
        %1554 = vst [vmem:[%s348 + $0x160] sm:$0xff] %v1461
        %1555 = vst [vmem:[%s348 + $0x168] sm:$0xff] %v1463
        %1556 = vst [vmem:[%s348 + $0x170] sm:$0xff] %v1466
        %1557 = vst [vmem:[%s348 + $0x178] sm:$0xff] %v1468
        %1558 = vst [vmem:[%s348 + $0x180] sm:$0xff] %v1471
        %1559 = vst [vmem:[%s348 + $0x188] sm:$0xff] %v1473
        %1560 = vst [vmem:[%s348 + $0x190] sm:$0xff] %v1476
        %1561 = vst [vmem:[%s348 + $0x198] sm:$0xff] %v1478
        %1562 = vst [vmem:[%s348 + $0x1a0] sm:$0xff] %v1481
        %1563 = vst [vmem:[%s348 + $0x1a8] sm:$0xff] %v1483
        %1564 = vst [vmem:[%s348 + $0x1b0] sm:$0xff] %v1486
        %1565 = vst [vmem:[%s348 + $0x1b8] sm:$0xff] %v1488
        %1566 = vst [vmem:[%s348 + $0x1c0] sm:$0xff] %v1491
        %1567 = vst [vmem:[%s348 + $0x1c8] sm:$0xff] %v1493
        %1568 = vst [vmem:[%s348 + $0x1d0] sm:$0xff] %v1496
        %1569 = vst [vmem:[%s348 + $0x1d8] sm:$0xff] %v1498
        %1570 = vst [vmem:[%s348 + $0x1e0] sm:$0xff] %v1501
        %1571 = vst [vmem:[%s348 + $0x1e8] sm:$0xff] %v1503
        %1572 = vst [vmem:[%s348 + $0x1f0] sm:$0xff] %v1506
        %1573 = vst [vmem:[%s348 + $0x1f8] sm:$0xff] %v1508
        %s1574 = sand.u32 %s186, 1
        %s1575 = scalar_lea.sflag [#allocation4], %s1574
        %s1576 = sand.u32 %s186, 1
        %s1577 = smul.addr %s1576, 512
        %s1578 = scalar_lea.vmem [#allocation10], %s1577
        // Predicated region
        $region65: #{tpu_custom_call.1} parent=47 // pred_check
          %p1579 = pneg %p196
        $region66: #{tpu_custom_call.1} parent=47 // pred_check_branch
          %1581 = sbr.rel (%p1579) target = $region68
        $region67: #{tpu_custom_call.1} parent=47 // pred_region
          %s1582 = smul.u32 64, %s26
          %1584 = vsyncadd %s1575, 0
          %s1585 = smul.addr %s1582, 8
          %s1586 = scalar_lea.hbm %s7, %s1585
          %s1587 = sshll.u32 %s1578, 4
          %s1588 = int_to_ptr.vmem [resolvable:$true] %s1587
          %s1589 = sshll.u32 %s1586, 4
          %s1590 = int_to_ptr.hbm [resolvable:$true] %s1589
          %1595 = dma.vmem_to_hbm [thread:$0]  %s1588, 8192, %s1590, %s1575, 128, 128, 8
        $region68: #{tpu_custom_call.1} parent=47 // pred_fallthru
          _
      $region48: #{tpu_custom_call.1} parent=5 // pred_fallthru
        _
      %p1596 = scmp.le.s32.totalorder 2, %s21
      // Predicated region
      $region69: #{tpu_custom_call.1} parent=5 // pred_check
        %p1597 = pneg %p1596
      $region70: #{tpu_custom_call.1} parent=5 // pred_check_branch
        %1599 = sbr.rel (%p1597) target = $region72
      $region71: #{tpu_custom_call.1} parent=5 // pred_region
        %s1600 = ssub.s32 %s21, 2
        // Predicated region
        $region73: #{tpu_custom_call.1} parent=71 // pred_check
          %p1601 = pneg %p202
        $region74: #{tpu_custom_call.1} parent=71 // pred_check_branch
          %1603 = sbr.rel (%p1601) target = $region76
        $region75: #{tpu_custom_call.1} parent=71 // pred_region
          %s1604 = sand.u32 %s187, 1
          %s1605 = scalar_lea.sflag [#allocation4], %s1604
          %s1606 = sand.u32 %s187, 1
          %s1607 = smul.addr %s1606, 512
          %s1608 = scalar_lea.vmem [#allocation10], %s1607
          %1610 = dma.done %s1605, 8192
        $region76: #{tpu_custom_call.1} parent=71 // pred_fallthru
          _
      $region72: #{tpu_custom_call.1} parent=5 // pred_fallthru
        _
    $region6: #{tpu_custom_call.1} parent=1 // loop_footer
      %s25 = sadd.s32 1, %s21
    $region7: #{tpu_custom_call.1} parent=1 // loop_footer_branch
      %20 = sbr.rel target = $region3
    $region8: #{tpu_custom_call.1} parent=1 // loop_exit
      _
    %1611 = vsyncpa [#allocation3], 1
    %s1612 = scalar_lea.sflag [#allocation3], 1
    %1613 = vsyncpa %s1612, 1
    %1614 = vsyncpa [#allocation6], 1
    %1615 = vsyncpa [#allocation9], 1
    %1616 = vsyncpa [#allocation4], 1
    %s1617 = scalar_lea.sflag [#allocation4], 1
    %1618 = vsyncpa %s1617, 1

// kernel: tpu_custom_call.1
$region0: #{tpu_custom_call.1}
  #allocation0 [shape = 'u32[]', space=smem, size = 0x4, offset = 0x4, fixed_abs, tag = 'smem constant byte address 0x4 - core index']
  #allocation1 [shape = 'u32[72,128]{1,0:T(1,128)}', space=vmem, size = 0x9000, scoped, tag = 'internal scratch']
  %s0 = inlined_call_operand.hbm [shape: bf16[2048,128], index: 0, kind: input, shape index: {}]
  %s1 = inlined_call_operand.hbm [shape: bf16[128,128], index: 1, kind: input, shape index: {}]
  %s2 = inlined_call_operand.vmem [shape: f32[1,128], index: 2, kind: input, shape index: {}]
  %s3 = inlined_call_operand.hbm [shape: bf16[128,128], index: 3, kind: input, shape index: {}]
  %s4 = inlined_call_operand.vmem [shape: f32[1,128], index: 4, kind: input, shape index: {}]
  %s5 = inlined_call_operand.hbm [shape: bf16[128,128], index: 5, kind: input, shape index: {}]
  %s6 = inlined_call_operand.vmem [shape: f32[1,128], index: 6, kind: input, shape index: {}]
  %s7 = inlined_call_operand.hbm [shape: f32[2048,128], index: 7, kind: output, shape index: {}]
  %s8 = sld [smem:[#allocation0]]
  $region77: #{tpu_custom_call.1} parent=0
    _
  %s10 = ssub.s32 1, %s8
  %s11 = scalar_select 0, %s10, %s8
  $region1: #{tpu_custom_call.1} parent=0
    #allocation2 [shape = 'u8[262144]{0}', space=vmem, size = 0x40000, scoped, tag = 'input window, operand 0']
    #allocation3 [shape = 's32[2]{0}', space=sflag, size = 0x8, scoped, tag = 'scoped memory for tpu_custom_call.1']
    #allocation4 [shape = 's32[2]{0}', space=sflag, size = 0x8, scoped, tag = 'scoped memory for tpu_custom_call.1']
    #allocation5 [shape = 'u8[32768]{0}', space=vmem, size = 0x8000, scoped, tag = 'input window, operand 1, single buffered']
    #allocation6 [shape = 's32[1]{0}', space=sflag, size = 0x4, scoped, tag = 'scoped memory for tpu_custom_call.1']
    #allocation7 [shape = 'u8[32768]{0}', space=vmem, size = 0x8000, scoped, tag = 'input window, operand 3, single buffered']
    #allocation8 [shape = 'u8[32768]{0}', space=vmem, size = 0x8000, scoped, tag = 'input window, operand 5, single buffered']
    #allocation9 [shape = 's32[1]{0}', space=sflag, size = 0x4, scoped, tag = 'scoped memory for tpu_custom_call.1']
    #allocation10 [shape = 'u8[524288]{0}', space=vmem, size = 0x80000, scoped, tag = 'output window, operand 0']
    %12 = vsyncpa [#allocation3], 0
    %s13 = scalar_lea.sflag [#allocation3], 1
    %14 = vsyncpa %s13, 0
    %15 = vsyncpa [#allocation6], 0
    %16 = vsyncpa [#allocation9], 0
    %17 = vsyncpa [#allocation4], 0
    %s18 = scalar_lea.sflag [#allocation4], 1
    %19 = vsyncpa %s18, 0
    loop: start=0, step=1, limit=6
    $region2: #{tpu_custom_call.1} parent=1 // loop_pre_header
      _
    $region3: #{tpu_custom_call.1} parent=1 // loop_header
      %s21 = sphi 0, %s25
      %p22 = scmp.ge.s32.totalorder %s21, 6
      %s31 = sphi 0, %s33
      %s34 = sphi 0, %s31
      %s35 = sphi 0, %s34
      %s51 = sphi 0, %s35
      %s55 = sphi 0, %s55
      %s57 = sphi 0, %s55
      %s58 = sphi 0, %s57
      %s72 = sphi 0, %s58
      %s76 = sphi 0, %s76
      %s78 = sphi 0, %s76
      %s79 = sphi 0, %s78
      %s93 = sphi 0, %s79
      %s97 = sphi 0, %s97
      %s99 = sphi 0, %s97
      %s100 = sphi 0, %s99
      %s114 = sphi 0, %s100
      %s118 = sphi 0, %s118
      %s120 = sphi 0, %s118
      %s121 = sphi 0, %s120
      %s135 = sphi 0, %s121
      %s139 = sphi 0, %s139
      %s141 = sphi 0, %s139
      %s142 = sphi 0, %s141
      %s156 = sphi 0, %s142
      %s160 = sphi 0, %s160
      %s162 = sphi 0, %s160
      %s163 = sphi 0, %s162
      %s177 = sphi 0, %s163
      %s183 = sphi 0, %s185
      %s186 = sphi 0, %s183
      %s187 = sphi 0, %s186
      %s203 = sphi 0, %s187
    $region4: #{tpu_custom_call.1} parent=1 // loop_header_branch
      %24 = sbr.rel (%p22) target = $region8
    $region5: #{tpu_custom_call.1} parent=1 // loop_body
      %s26 = ssub.s32 %s21, 1
      %s27 = ssub.s32 %s21, 2
      %s28 = sadd.s32 %s21, 1
      %s29 = ssub.s32 %s21, %s28
      %p30 = scmp.eq.s32.totalorder %s29, 0
      %s32 = sadd.s32 %s31, 1
      %s33 = scalar_select %p30, %s31, %s32
      %p36 = pneg %p30
      %p37 = scmp.eq.s32.totalorder %s21, 3
      %p38 = por %p36, %p37
      %p39 = scmp.ne.s32.totalorder %s31, %s34
      %p40 = scmp.eq.s32.totalorder %s21, 0
      %p41 = por %p39, %p40
      %p42 = scmp.ne.s32.totalorder %s31, %s34
      %p43 = scmp.eq.s32.totalorder %s26, 3
      %p44 = por %p42, %p43
      %p45 = scmp.ne.s32.totalorder %s34, %s35
      %p46 = scmp.eq.s32.totalorder %s26, 0
      %p47 = por %p45, %p46
      %p48 = scmp.ne.s32.totalorder %s34, %s35
      %p49 = scmp.eq.s32.totalorder %s27, 3
      %p50 = por %p48, %p49
      %p52 = scmp.ne.s32.totalorder %s35, %s51
      %p53 = scmp.eq.s32.totalorder %s27, 0
      %p54 = por %p52, %p53
      %s56 = sadd.s32 %s55, 1
      %p59 = scmp.eq.s32.totalorder %s21, 3
      %p60 = scmp.ne.s32.totalorder %s55, %s57
      %p61 = scmp.eq.s32.totalorder %s21, 0
      %p62 = por %p60, %p61
      %p63 = scmp.ne.s32.totalorder %s55, %s57
      %p64 = scmp.eq.s32.totalorder %s26, 3
      %p65 = por %p63, %p64
      %p66 = scmp.ne.s32.totalorder %s57, %s58
      %p67 = scmp.eq.s32.totalorder %s26, 0
      %p68 = por %p66, %p67
      %p69 = scmp.ne.s32.totalorder %s57, %s58
      %p70 = scmp.eq.s32.totalorder %s27, 3
      %p71 = por %p69, %p70
      %p73 = scmp.ne.s32.totalorder %s58, %s72
      %p74 = scmp.eq.s32.totalorder %s27, 0
      %p75 = por %p73, %p74
      %s77 = sadd.s32 %s76, 1
      %p80 = scmp.eq.s32.totalorder %s21, 3
      %p81 = scmp.ne.s32.totalorder %s76, %s78
      %p82 = scmp.eq.s32.totalorder %s21, 0
      %p83 = por %p81, %p82
      %p84 = scmp.ne.s32.totalorder %s76, %s78
      %p85 = scmp.eq.s32.totalorder %s26, 3
      %p86 = por %p84, %p85
      %p87 = scmp.ne.s32.totalorder %s78, %s79
      %p88 = scmp.eq.s32.totalorder %s26, 0
      %p89 = por %p87, %p88
      %p90 = scmp.ne.s32.totalorder %s78, %s79
      %p91 = scmp.eq.s32.totalorder %s27, 3
      %p92 = por %p90, %p91
      %p94 = scmp.ne.s32.totalorder %s79, %s93
      %p95 = scmp.eq.s32.totalorder %s27, 0
      %p96 = por %p94, %p95
      %s98 = sadd.s32 %s97, 1
      %p101 = scmp.eq.s32.totalorder %s21, 3
      %p102 = scmp.ne.s32.totalorder %s97, %s99
      %p103 = scmp.eq.s32.totalorder %s21, 0
      %p104 = por %p102, %p103
      %p105 = scmp.ne.s32.totalorder %s97, %s99
      %p106 = scmp.eq.s32.totalorder %s26, 3
      %p107 = por %p105, %p106
      %p108 = scmp.ne.s32.totalorder %s99, %s100
      %p109 = scmp.eq.s32.totalorder %s26, 0
      %p110 = por %p108, %p109
      %p111 = scmp.ne.s32.totalorder %s99, %s100
      %p112 = scmp.eq.s32.totalorder %s27, 3
      %p113 = por %p111, %p112
      %p115 = scmp.ne.s32.totalorder %s100, %s114
      %p116 = scmp.eq.s32.totalorder %s27, 0
      %p117 = por %p115, %p116
      %s119 = sadd.s32 %s118, 1
      %p122 = scmp.eq.s32.totalorder %s21, 3
      %p123 = scmp.ne.s32.totalorder %s118, %s120
      %p124 = scmp.eq.s32.totalorder %s21, 0
      %p125 = por %p123, %p124
      %p126 = scmp.ne.s32.totalorder %s118, %s120
      %p127 = scmp.eq.s32.totalorder %s26, 3
      %p128 = por %p126, %p127
      %p129 = scmp.ne.s32.totalorder %s120, %s121
      %p130 = scmp.eq.s32.totalorder %s26, 0
      %p131 = por %p129, %p130
      %p132 = scmp.ne.s32.totalorder %s120, %s121
      %p133 = scmp.eq.s32.totalorder %s27, 3
      %p134 = por %p132, %p133
      %p136 = scmp.ne.s32.totalorder %s121, %s135
      %p137 = scmp.eq.s32.totalorder %s27, 0
      %p138 = por %p136, %p137
      %s140 = sadd.s32 %s139, 1
      %p143 = scmp.eq.s32.totalorder %s21, 3
      %p144 = scmp.ne.s32.totalorder %s139, %s141
      %p145 = scmp.eq.s32.totalorder %s21, 0
      %p146 = por %p144, %p145
      %p147 = scmp.ne.s32.totalorder %s139, %s141
      %p148 = scmp.eq.s32.totalorder %s26, 3
      %p149 = por %p147, %p148
      %p150 = scmp.ne.s32.totalorder %s141, %s142
      %p151 = scmp.eq.s32.totalorder %s26, 0
      %p152 = por %p150, %p151
      %p153 = scmp.ne.s32.totalorder %s141, %s142
      %p154 = scmp.eq.s32.totalorder %s27, 3
      %p155 = por %p153, %p154
      %p157 = scmp.ne.s32.totalorder %s142, %s156
      %p158 = scmp.eq.s32.totalorder %s27, 0
      %p159 = por %p157, %p158
      %s161 = sadd.s32 %s160, 1
      %p164 = scmp.eq.s32.totalorder %s21, 3
      %p165 = scmp.ne.s32.totalorder %s160, %s162
      %p166 = scmp.eq.s32.totalorder %s21, 0
      %p167 = por %p165, %p166
      %p168 = scmp.ne.s32.totalorder %s160, %s162
      %p169 = scmp.eq.s32.totalorder %s26, 3
      %p170 = por %p168, %p169
      %p171 = scmp.ne.s32.totalorder %s162, %s163
      %p172 = scmp.eq.s32.totalorder %s26, 0
      %p173 = por %p171, %p172
      %p174 = scmp.ne.s32.totalorder %s162, %s163
      %p175 = scmp.eq.s32.totalorder %s27, 3
      %p176 = por %p174, %p175
      %p178 = scmp.ne.s32.totalorder %s163, %s177
      %p179 = scmp.eq.s32.totalorder %s27, 0
      %p180 = por %p178, %p179
      %s181 = ssub.s32 %s21, %s28
      %p182 = scmp.eq.s32.totalorder %s181, 0
      %s184 = sadd.s32 %s183, 1
      %s185 = scalar_select %p182, %s183, %s184
      %p188 = pneg %p182
      %p189 = scmp.eq.s32.totalorder %s21, 3
      %p190 = por %p188, %p189
      %p191 = scmp.ne.s32.totalorder %s183, %s186
      %p192 = scmp.eq.s32.totalorder %s21, 0
      %p193 = por %p191, %p192
      %p194 = scmp.ne.s32.totalorder %s183, %s186
      %p195 = scmp.eq.s32.totalorder %s26, 3
      %p196 = por %p194, %p195
      %p197 = scmp.ne.s32.totalorder %s186, %s187
      %p198 = scmp.eq.s32.totalorder %s26, 0
      %p199 = por %p197, %p198
      %p200 = scmp.ne.s32.totalorder %s186, %s187
      %p201 = scmp.eq.s32.totalorder %s27, 3
      %p202 = por %p200, %p201
      %p204 = scmp.ne.s32.totalorder %s187, %s203
      %p205 = scmp.eq.s32.totalorder %s27, 0
      %p206 = por %p204, %p205
      %p207 = scmp.le.s32.totalorder 1, %s21
      %p208 = scmp.lt.s32.totalorder %s21, 5
      %p209 = pnand %p207, %p208
      %p210 = pneg %p209
      // Predicated region
      $region9: #{tpu_custom_call.1} parent=5 // pred_check
        _
      $region10: #{tpu_custom_call.1} parent=5 // pred_check_branch
        %212 = sbr.rel (%p209) target = $region12
      $region11: #{tpu_custom_call.1} parent=5 // pred_region
        %s213 = ssub.s32 %s21, 1
        // Predicated region
        $region13: #{tpu_custom_call.1} parent=11 // pred_check
          %p214 = pneg %p68
        $region14: #{tpu_custom_call.1} parent=11 // pred_check_branch
          %216 = sbr.rel (%p214) target = $region16
        $region15: #{tpu_custom_call.1} parent=11 // pred_region
          %218 = vsyncadd [#allocation6], 0
          %s219 = sshll.u32 %s1, 4
          %s220 = int_to_ptr.hbm [resolvable:$true] %s219
          %s221 = sshll.u32 [#allocation5], 4
          %s222 = int_to_ptr.vmem [resolvable:$true] %s221
          %227 = dma.hbm_to_vmem [thread:$0]  %s220, 1024, %s222, [#allocation6], 64, 64, 4
        $region16: #{tpu_custom_call.1} parent=11 // pred_fallthru
          _
        // Predicated region
        $region17: #{tpu_custom_call.1} parent=11 // pred_check
          %p228 = pneg %p89
        $region18: #{tpu_custom_call.1} parent=11 // pred_check_branch
          %230 = sbr.rel (%p228) target = $region20
        $region19: #{tpu_custom_call.1} parent=11 // pred_region
          _
        $region20: #{tpu_custom_call.1} parent=11 // pred_fallthru
          _
        // Predicated region
        $region21: #{tpu_custom_call.1} parent=11 // pred_check
          %p231 = pneg %p110
        $region22: #{tpu_custom_call.1} parent=11 // pred_check_branch
          %233 = sbr.rel (%p231) target = $region24
        $region23: #{tpu_custom_call.1} parent=11 // pred_region
          %235 = vsyncadd [#allocation6], 0
          %s236 = sshll.u32 %s3, 4
          %s237 = int_to_ptr.hbm [resolvable:$true] %s236
          %s238 = sshll.u32 [#allocation7], 4
          %s239 = int_to_ptr.vmem [resolvable:$true] %s238
          %244 = dma.hbm_to_vmem [thread:$0]  %s237, 1024, %s239, [#allocation6], 64, 64, 4
        $region24: #{tpu_custom_call.1} parent=11 // pred_fallthru
          _
        // Predicated region
        $region25: #{tpu_custom_call.1} parent=11 // pred_check
          %p245 = pneg %p131
        $region26: #{tpu_custom_call.1} parent=11 // pred_check_branch
          %247 = sbr.rel (%p245) target = $region28
        $region27: #{tpu_custom_call.1} parent=11 // pred_region
          _
        $region28: #{tpu_custom_call.1} parent=11 // pred_fallthru
          _
        // Predicated region
        $region29: #{tpu_custom_call.1} parent=11 // pred_check
          %p248 = pneg %p152
        $region30: #{tpu_custom_call.1} parent=11 // pred_check_branch
          %250 = sbr.rel (%p248) target = $region32
        $region31: #{tpu_custom_call.1} parent=11 // pred_region
          %252 = vsyncadd [#allocation9], 0
          %s253 = sshll.u32 %s5, 4
          %s254 = int_to_ptr.hbm [resolvable:$true] %s253
          %s255 = sshll.u32 [#allocation8], 4
          %s256 = int_to_ptr.vmem [resolvable:$true] %s255
          %261 = dma.hbm_to_vmem [thread:$0]  %s254, 1024, %s256, [#allocation9], 64, 64, 4
        $region32: #{tpu_custom_call.1} parent=11 // pred_fallthru
          _
        // Predicated region
        $region33: #{tpu_custom_call.1} parent=11 // pred_check
          %p262 = pneg %p173
        $region34: #{tpu_custom_call.1} parent=11 // pred_check_branch
          %264 = sbr.rel (%p262) target = $region36
        $region35: #{tpu_custom_call.1} parent=11 // pred_region
          _
        $region36: #{tpu_custom_call.1} parent=11 // pred_fallthru
          _
      $region12: #{tpu_custom_call.1} parent=5 // pred_fallthru
        _
      %p265 = scmp.lt.s32.totalorder %s21, 4
      // Predicated region
      $region37: #{tpu_custom_call.1} parent=5 // pred_check
        %p266 = pneg %p265
      $region38: #{tpu_custom_call.1} parent=5 // pred_check_branch
        %268 = sbr.rel (%p266) target = $region40
      $region39: #{tpu_custom_call.1} parent=5 // pred_region
        // Predicated region
        $region41: #{tpu_custom_call.1} parent=39 // pred_check
          %p269 = pneg %p41
        $region42: #{tpu_custom_call.1} parent=39 // pred_check_branch
          %271 = sbr.rel (%p269) target = $region44
        $region43: #{tpu_custom_call.1} parent=39 // pred_region
          %s272 = sand.u32 %s31, 1
          %s273 = scalar_lea.sflag [#allocation3], %s272
          %s274 = sand.u32 %s31, 1
          %s275 = smul.addr %s274, 256
          %s276 = scalar_lea.vmem [#allocation2], %s275
          %s277 = smul.u32 64, %s21
          %279 = vsyncadd %s273, 0
          %s280 = smul.addr %s277, 4
          %s281 = scalar_lea.hbm %s0, %s280
          %s282 = sshll.u32 %s281, 4
          %s283 = int_to_ptr.hbm [resolvable:$true] %s282
          %s284 = sshll.u32 %s276, 4
          %s285 = int_to_ptr.vmem [resolvable:$true] %s284
          %290 = dma.hbm_to_vmem [thread:$0]  %s283, 4096, %s285, %s273, 64, 64, 4
        $region44: #{tpu_custom_call.1} parent=39 // pred_fallthru
          _
      $region40: #{tpu_custom_call.1} parent=5 // pred_fallthru
        _
      %p291 = scmp.le.s32.totalorder 1, %s21
      %p292 = scmp.lt.s32.totalorder %s21, 5
      %p293 = pnand %p291, %p292
      %p294 = pneg %p293
      // Predicated region
      $region45: #{tpu_custom_call.1} parent=5 // pred_check
        _
      $region46: #{tpu_custom_call.1} parent=5 // pred_check_branch
        %296 = sbr.rel (%p293) target = $region48
      $region47: #{tpu_custom_call.1} parent=5 // pred_region
        %s297 = ssub.s32 %s21, 1
        %s298 = sand.u32 %s34, 1
        %s299 = scalar_lea.sflag [#allocation3], %s298
        %s300 = sand.u32 %s34, 1
        %s301 = smul.addr %s300, 256
        %s302 = scalar_lea.vmem [#allocation2], %s301
        // Predicated region
        $region49: #{tpu_custom_call.1} parent=47 // pred_check
          %p303 = pneg %p47
        $region50: #{tpu_custom_call.1} parent=47 // pred_check_branch
          %305 = sbr.rel (%p303) target = $region52
        $region51: #{tpu_custom_call.1} parent=47 // pred_region
          %307 = dma.done %s299, 4096
        $region52: #{tpu_custom_call.1} parent=47 // pred_fallthru
          _
        // Predicated region
        $region53: #{tpu_custom_call.1} parent=47 // pred_check
          %p308 = pneg %p68
        $region54: #{tpu_custom_call.1} parent=47 // pred_check_branch
          %310 = sbr.rel (%p308) target = $region56
        $region55: #{tpu_custom_call.1} parent=47 // pred_region
          %312 = dma.done [#allocation6], 1024
        $region56: #{tpu_custom_call.1} parent=47 // pred_fallthru
          _
        // Predicated region
        $region57: #{tpu_custom_call.1} parent=47 // pred_check
          %p313 = pneg %p110
        $region58: #{tpu_custom_call.1} parent=47 // pred_check_branch
          %315 = sbr.rel (%p313) target = $region60
        $region59: #{tpu_custom_call.1} parent=47 // pred_region
          %317 = dma.done [#allocation6], 1024
        $region60: #{tpu_custom_call.1} parent=47 // pred_fallthru
          _
        // Predicated region
        $region61: #{tpu_custom_call.1} parent=47 // pred_check
          %p318 = pneg %p152
        $region62: #{tpu_custom_call.1} parent=47 // pred_check_branch
          %320 = sbr.rel (%p318) target = $region64
        $region63: #{tpu_custom_call.1} parent=47 // pred_region
          %322 = dma.done [#allocation9], 1024
        $region64: #{tpu_custom_call.1} parent=47 // pred_fallthru
          _
        %s323 = sand.u32 %s34, 1
        %s324 = scalar_lea.sflag [#allocation3], %s323
        %s325 = sand.u32 %s34, 1
        %s326 = smul.addr %s325, 256
        %s327 = scalar_lea.vmem [#allocation2], %s326
        %p328 = pneg %p47
        %p329 = pneg %p44
        %p330 = pneg %p68
        %p331 = pneg %p65
        %p332 = pneg %p89
        %p333 = pneg %p86
        %p334 = pneg %p110
        %p335 = pneg %p107
        %p336 = pneg %p131
        %p337 = pneg %p128
        %p338 = pneg %p152
        %p339 = pneg %p149
        %p340 = pneg %p173
        %p341 = pneg %p170
        %p342 = pneg %p199
        %p343 = pneg %p196
        %s344 = sand.u32 %s186, 1
        %s345 = scalar_lea.sflag [#allocation4], %s344
        %s346 = sand.u32 %s186, 1
        %s347 = smul.addr %s346, 512
        %s348 = scalar_lea.vmem [#allocation10], %s347
        %s349 = smul.u32 64, %s26
        %s350 = smul.u32 64, %s26
        %v351 = vld [vmem:[%s302] sm:$0xf]
        %v352 = vld [vmem:[%s302 + $0x4] sm:$0xf]
        %v353 = vld [vmem:[%s302 + $0x8] sm:$0xf]
        %v354 = vld [vmem:[%s302 + $0xc] sm:$0xf]
        %v355 = vld [vmem:[%s302 + $0x10] sm:$0xf]
        %v356 = vld [vmem:[%s302 + $0x14] sm:$0xf]
        %v357 = vld [vmem:[%s302 + $0x18] sm:$0xf]
        %v358 = vld [vmem:[%s302 + $0x1c] sm:$0xf]
        %v359 = vld [vmem:[%s302 + $0x20] sm:$0xf]
        %v360 = vld [vmem:[%s302 + $0x24] sm:$0xf]
        %v361 = vld [vmem:[%s302 + $0x28] sm:$0xf]
        %v362 = vld [vmem:[%s302 + $0x2c] sm:$0xf]
        %v363 = vld [vmem:[%s302 + $0x30] sm:$0xf]
        %v364 = vld [vmem:[%s302 + $0x34] sm:$0xf]
        %v365 = vld [vmem:[%s302 + $0x38] sm:$0xf]
        %v366 = vld [vmem:[%s302 + $0x3c] sm:$0xf]
        %v367 = vld [vmem:[%s302 + $0x40] sm:$0xf]
        %v368 = vld [vmem:[%s302 + $0x44] sm:$0xf]
        %v369 = vld [vmem:[%s302 + $0x48] sm:$0xf]
        %v370 = vld [vmem:[%s302 + $0x4c] sm:$0xf]
        %v371 = vld [vmem:[%s302 + $0x50] sm:$0xf]
        %v372 = vld [vmem:[%s302 + $0x54] sm:$0xf]
        %v373 = vld [vmem:[%s302 + $0x58] sm:$0xf]
        %v374 = vld [vmem:[%s302 + $0x5c] sm:$0xf]
        %v375 = vld [vmem:[%s302 + $0x60] sm:$0xf]
        %v376 = vld [vmem:[%s302 + $0x64] sm:$0xf]
        %v377 = vld [vmem:[%s302 + $0x68] sm:$0xf]
        %v378 = vld [vmem:[%s302 + $0x6c] sm:$0xf]
        %v379 = vld [vmem:[%s302 + $0x70] sm:$0xf]
        %v380 = vld [vmem:[%s302 + $0x74] sm:$0xf]
        %v381 = vld [vmem:[%s302 + $0x78] sm:$0xf]
        %v382 = vld [vmem:[%s302 + $0x7c] sm:$0xf]
        %v383 = vld [vmem:[%s302 + $0x80] sm:$0xf]
        %v384 = vld [vmem:[%s302 + $0x84] sm:$0xf]
        %v385 = vld [vmem:[%s302 + $0x88] sm:$0xf]
        %v386 = vld [vmem:[%s302 + $0x8c] sm:$0xf]
        %v387 = vld [vmem:[%s302 + $0x90] sm:$0xf]
        %v388 = vld [vmem:[%s302 + $0x94] sm:$0xf]
        %v389 = vld [vmem:[%s302 + $0x98] sm:$0xf]
        %v390 = vld [vmem:[%s302 + $0x9c] sm:$0xf]
        %v391 = vld [vmem:[%s302 + $0xa0] sm:$0xf]
        %v392 = vld [vmem:[%s302 + $0xa4] sm:$0xf]
        %v393 = vld [vmem:[%s302 + $0xa8] sm:$0xf]
        %v394 = vld [vmem:[%s302 + $0xac] sm:$0xf]
        %v395 = vld [vmem:[%s302 + $0xb0] sm:$0xf]
        %v396 = vld [vmem:[%s302 + $0xb4] sm:$0xf]
        %v397 = vld [vmem:[%s302 + $0xb8] sm:$0xf]
        %v398 = vld [vmem:[%s302 + $0xbc] sm:$0xf]
        %v399 = vld [vmem:[%s302 + $0xc0] sm:$0xf]
        %v400 = vld [vmem:[%s302 + $0xc4] sm:$0xf]
        %v401 = vld [vmem:[%s302 + $0xc8] sm:$0xf]
        %v402 = vld [vmem:[%s302 + $0xcc] sm:$0xf]
        %v403 = vld [vmem:[%s302 + $0xd0] sm:$0xf]
        %v404 = vld [vmem:[%s302 + $0xd4] sm:$0xf]
        %v405 = vld [vmem:[%s302 + $0xd8] sm:$0xf]
        %v406 = vld [vmem:[%s302 + $0xdc] sm:$0xf]
        %v407 = vld [vmem:[%s302 + $0xe0] sm:$0xf]
        %v408 = vld [vmem:[%s302 + $0xe4] sm:$0xf]
        %v409 = vld [vmem:[%s302 + $0xe8] sm:$0xf]
        %v410 = vld [vmem:[%s302 + $0xec] sm:$0xf]
        %v411 = vld [vmem:[%s302 + $0xf0] sm:$0xf]
        %v412 = vld [vmem:[%s302 + $0xf4] sm:$0xf]
        %v413 = vld [vmem:[%s302 + $0xf8] sm:$0xf]
        %v414 = vld [vmem:[%s302 + $0xfc] sm:$0xf]
        %v415 = vld [vmem:[#allocation5] sm:$0xf]
        %v416 = vld [vmem:[#allocation5 + $0x4] sm:$0xf]
        %v417 = vld [vmem:[#allocation5 + $0x8] sm:$0xf]
        %v418 = vld [vmem:[#allocation5 + $0xc] sm:$0xf]
        %v419 = vld [vmem:[#allocation5 + $0x10] sm:$0xf]
        %v420 = vld [vmem:[#allocation5 + $0x14] sm:$0xf]
        %v421 = vld [vmem:[#allocation5 + $0x18] sm:$0xf]
        %v422 = vld [vmem:[#allocation5 + $0x1c] sm:$0xf]
        %v423 = vld [vmem:[#allocation5 + $0x20] sm:$0xf]
        %v424 = vld [vmem:[#allocation5 + $0x24] sm:$0xf]
        %v425 = vld [vmem:[#allocation5 + $0x28] sm:$0xf]
        %v426 = vld [vmem:[#allocation5 + $0x2c] sm:$0xf]
        %v427 = vld [vmem:[#allocation5 + $0x30] sm:$0xf]
        %v428 = vld [vmem:[#allocation5 + $0x34] sm:$0xf]
        %v429 = vld [vmem:[#allocation5 + $0x38] sm:$0xf]
        %v430 = vld [vmem:[#allocation5 + $0x3c] sm:$0xf]
        %v431 = vld [vmem:[%s2] sm:$0x1]
        %v433 = vperm.slane %v431, 0
        %v499 = vunpack.c.l.b16 %v351
        %v500 = vunpack.c.l.b16 %v352
        %v501 = vunpack.c.l.b16 %v353
        %v502 = vunpack.c.l.b16 %v354
        %v503 = vunpack.c.l.b16 %v355
        %v504 = vunpack.c.l.b16 %v356
        %v505 = vunpack.c.l.b16 %v357
        %v506 = vunpack.c.l.b16 %v358
        %v507 = vunpack.c.l.b16 %v359
        %v508 = vunpack.c.l.b16 %v360
        %v509 = vunpack.c.l.b16 %v361
        %v510 = vunpack.c.l.b16 %v362
        %v511 = vunpack.c.l.b16 %v363
        %v512 = vunpack.c.l.b16 %v364
        %v513 = vunpack.c.l.b16 %v365
        %v514 = vunpack.c.l.b16 %v366
        %v515 = vunpack.c.l.b16 %v367
        %v516 = vunpack.c.l.b16 %v368
        %v517 = vunpack.c.l.b16 %v369
        %v518 = vunpack.c.l.b16 %v370
        %v519 = vunpack.c.l.b16 %v371
        %v520 = vunpack.c.l.b16 %v372
        %v521 = vunpack.c.l.b16 %v373
        %v522 = vunpack.c.l.b16 %v374
        %v523 = vunpack.c.l.b16 %v375
        %v524 = vunpack.c.l.b16 %v376
        %v525 = vunpack.c.l.b16 %v377
        %v526 = vunpack.c.l.b16 %v378
        %v527 = vunpack.c.l.b16 %v379
        %v528 = vunpack.c.l.b16 %v380
        %v529 = vunpack.c.l.b16 %v381
        %v530 = vunpack.c.l.b16 %v382
        %v531 = vunpack.c.l.b16 %v383
        %v532 = vunpack.c.l.b16 %v384
        %v533 = vunpack.c.l.b16 %v385
        %v534 = vunpack.c.l.b16 %v386
        %v535 = vunpack.c.l.b16 %v387
        %v536 = vunpack.c.l.b16 %v388
        %v537 = vunpack.c.l.b16 %v389
        %v538 = vunpack.c.l.b16 %v390
        %v539 = vunpack.c.l.b16 %v391
        %v540 = vunpack.c.l.b16 %v392
        %v541 = vunpack.c.l.b16 %v393
        %v542 = vunpack.c.l.b16 %v394
        %v543 = vunpack.c.l.b16 %v395
        %v544 = vunpack.c.l.b16 %v396
        %v545 = vunpack.c.l.b16 %v397
        %v546 = vunpack.c.l.b16 %v398
        %v547 = vunpack.c.l.b16 %v399
        %v548 = vunpack.c.l.b16 %v400
        %v549 = vunpack.c.l.b16 %v401
        %v550 = vunpack.c.l.b16 %v402
        %v551 = vunpack.c.l.b16 %v403
        %v552 = vunpack.c.l.b16 %v404
        %v553 = vunpack.c.l.b16 %v405
        %v554 = vunpack.c.l.b16 %v406
        %v555 = vunpack.c.l.b16 %v407
        %v556 = vunpack.c.l.b16 %v408
        %v557 = vunpack.c.l.b16 %v409
        %v558 = vunpack.c.l.b16 %v410
        %v559 = vunpack.c.l.b16 %v411
        %v560 = vunpack.c.l.b16 %v412
        %v561 = vunpack.c.l.b16 %v413
        %v562 = vunpack.c.l.b16 %v414
        %v563 = vpack.c.b16 %v500, %v499
        %v564 = vpack.c.b16 %v502, %v501
        %v565 = vpack.c.b16 %v504, %v503
        %v566 = vpack.c.b16 %v506, %v505
        %v567 = vpack.c.b16 %v508, %v507
        %v568 = vpack.c.b16 %v510, %v509
        %v569 = vpack.c.b16 %v512, %v511
        %v570 = vpack.c.b16 %v514, %v513
        %v571 = vpack.c.b16 %v516, %v515
        %v572 = vpack.c.b16 %v518, %v517
        %v573 = vpack.c.b16 %v520, %v519
        %v574 = vpack.c.b16 %v522, %v521
        %v575 = vpack.c.b16 %v524, %v523
        %v576 = vpack.c.b16 %v526, %v525
        %v577 = vpack.c.b16 %v528, %v527
        %v578 = vpack.c.b16 %v530, %v529
        %v579 = vpack.c.b16 %v532, %v531
        %v580 = vpack.c.b16 %v534, %v533
        %v581 = vpack.c.b16 %v536, %v535
        %v582 = vpack.c.b16 %v538, %v537
        %v583 = vpack.c.b16 %v540, %v539
        %v584 = vpack.c.b16 %v542, %v541
        %v585 = vpack.c.b16 %v544, %v543
        %v586 = vpack.c.b16 %v546, %v545
        %v587 = vpack.c.b16 %v548, %v547
        %v588 = vpack.c.b16 %v550, %v549
        %v589 = vpack.c.b16 %v552, %v551
        %v590 = vpack.c.b16 %v554, %v553
        %v591 = vpack.c.b16 %v556, %v555
        %v592 = vpack.c.b16 %v558, %v557
        %v593 = vpack.c.b16 %v560, %v559
        %v594 = vpack.c.b16 %v562, %v561
        %v643 = vunpack.c.l.b16 %v415
        %v644 = vunpack.c.l.b16 %v416
        %v645 = vunpack.c.l.b16 %v417
        %v646 = vunpack.c.l.b16 %v418
        %v647 = vunpack.c.l.b16 %v419
        %v648 = vunpack.c.l.b16 %v420
        %v649 = vunpack.c.l.b16 %v421
        %v650 = vunpack.c.l.b16 %v422
        %v651 = vunpack.c.l.b16 %v423
        %v652 = vunpack.c.l.b16 %v424
        %v653 = vunpack.c.l.b16 %v425
        %v654 = vunpack.c.l.b16 %v426
        %v655 = vunpack.c.l.b16 %v427
        %v656 = vunpack.c.l.b16 %v428
        %v657 = vunpack.c.l.b16 %v429
        %v658 = vunpack.c.l.b16 %v430
        %v659 = vpack.c.b16 %v644, %v643
        %v660 = vpack.c.b16 %v646, %v645
        %v661 = vpack.c.b16 %v648, %v647
        %v662 = vpack.c.b16 %v650, %v649
        %v663 = vpack.c.b16 %v652, %v651
        %v664 = vpack.c.b16 %v654, %v653
        %v665 = vpack.c.b16 %v656, %v655
        %v666 = vpack.c.b16 %v658, %v657
        %675 = vmatpush.bf16.msra.mxu0 %v666
        %676 = vmatpush.bf16.msra.mxu0 %v665
        %677 = vmatpush.bf16.msra.mxu0 %v664
        %678 = vmatpush.bf16.msra.mxu0 %v663
        %679 = vmatpush.bf16.msra.mxu0 %v662
        %680 = vmatpush.bf16.msra.mxu0 %v661
        %681 = vmatpush.bf16.msra.mxu0 %v660
        %682 = vmatpush.bf16.msra.mxu0 %v659
        %683 = vmatmul.bf16.gmra.mxu0 %v563
        %v684 = vpop.f32.mrf.mxu0
        %v685 = vadd.f32 %v433, %v684
        %v686 = vpop.f32.mrf.mxu0
        %v687 = vadd.f32 %v433, %v686
        %688 = vmatmul.bf16.gmra.mxu0 %v564
        %v689 = vpop.f32.mrf.mxu0
        %v690 = vadd.f32 %v433, %v689
        %v691 = vpop.f32.mrf.mxu0
        %v692 = vadd.f32 %v433, %v691
        %693 = vmatmul.bf16.gmra.mxu0 %v565
        %v694 = vpop.f32.mrf.mxu0
        %v695 = vadd.f32 %v433, %v694
        %v696 = vpop.f32.mrf.mxu0
        %v697 = vadd.f32 %v433, %v696
        %698 = vmatmul.bf16.gmra.mxu0 %v566
        %v699 = vpop.f32.mrf.mxu0
        %v700 = vadd.f32 %v433, %v699
        %v701 = vpop.f32.mrf.mxu0
        %v702 = vadd.f32 %v433, %v701
        %703 = vmatmul.bf16.gmra.mxu0 %v567
        %v704 = vpop.f32.mrf.mxu0
        %v705 = vadd.f32 %v433, %v704
        %v706 = vpop.f32.mrf.mxu0
        %v707 = vadd.f32 %v433, %v706
        %708 = vmatmul.bf16.gmra.mxu0 %v568
        %v709 = vpop.f32.mrf.mxu0
        %v710 = vadd.f32 %v433, %v709
        %v711 = vpop.f32.mrf.mxu0
        %v712 = vadd.f32 %v433, %v711
        %713 = vmatmul.bf16.gmra.mxu0 %v569
        %v714 = vpop.f32.mrf.mxu0
        %v715 = vadd.f32 %v433, %v714
        %v716 = vpop.f32.mrf.mxu0
        %v717 = vadd.f32 %v433, %v716
        %718 = vmatmul.bf16.gmra.mxu0 %v570
        %v719 = vpop.f32.mrf.mxu0
        %v720 = vadd.f32 %v433, %v719
        %v721 = vpop.f32.mrf.mxu0
        %v722 = vadd.f32 %v433, %v721
        %723 = vmatmul.bf16.gmra.mxu0 %v571
        %v724 = vpop.f32.mrf.mxu0
        %v725 = vadd.f32 %v433, %v724
        %v726 = vpop.f32.mrf.mxu0
        %v727 = vadd.f32 %v433, %v726
        %728 = vmatmul.bf16.gmra.mxu0 %v572
        %v729 = vpop.f32.mrf.mxu0
        %v730 = vadd.f32 %v433, %v729
        %v731 = vpop.f32.mrf.mxu0
        %v732 = vadd.f32 %v433, %v731
        %733 = vmatmul.bf16.gmra.mxu0 %v573
        %v734 = vpop.f32.mrf.mxu0
        %v735 = vadd.f32 %v433, %v734
        %v736 = vpop.f32.mrf.mxu0
        %v737 = vadd.f32 %v433, %v736
        %738 = vmatmul.bf16.gmra.mxu0 %v574
        %v739 = vpop.f32.mrf.mxu0
        %v740 = vadd.f32 %v433, %v739
        %v741 = vpop.f32.mrf.mxu0
        %v742 = vadd.f32 %v433, %v741
        %743 = vmatmul.bf16.gmra.mxu0 %v575
        %v744 = vpop.f32.mrf.mxu0
        %v745 = vadd.f32 %v433, %v744
        %v746 = vpop.f32.mrf.mxu0
        %v747 = vadd.f32 %v433, %v746
        %748 = vmatmul.bf16.gmra.mxu0 %v576
        %v749 = vpop.f32.mrf.mxu0
        %v750 = vadd.f32 %v433, %v749
        %v751 = vpop.f32.mrf.mxu0
        %v752 = vadd.f32 %v433, %v751
        %753 = vmatmul.bf16.gmra.mxu0 %v577
        %v754 = vpop.f32.mrf.mxu0
        %v755 = vadd.f32 %v433, %v754
        %v756 = vpop.f32.mrf.mxu0
        %v757 = vadd.f32 %v433, %v756
        %758 = vmatmul.bf16.gmra.mxu0 %v578
        %v759 = vpop.f32.mrf.mxu0
        %v760 = vadd.f32 %v433, %v759
        %v761 = vpop.f32.mrf.mxu0
        %v762 = vadd.f32 %v433, %v761
        %763 = vmatmul.bf16.gmra.mxu0 %v579
        %v764 = vpop.f32.mrf.mxu0
        %v765 = vadd.f32 %v433, %v764
        %v766 = vpop.f32.mrf.mxu0
        %v767 = vadd.f32 %v433, %v766
        %768 = vmatmul.bf16.gmra.mxu0 %v580
        %v769 = vpop.f32.mrf.mxu0
        %v770 = vadd.f32 %v433, %v769
        %v771 = vpop.f32.mrf.mxu0
        %v772 = vadd.f32 %v433, %v771
        %773 = vmatmul.bf16.gmra.mxu0 %v581
        %v774 = vpop.f32.mrf.mxu0
        %v775 = vadd.f32 %v433, %v774
        %v776 = vpop.f32.mrf.mxu0
        %v777 = vadd.f32 %v433, %v776
        %778 = vmatmul.bf16.gmra.mxu0 %v582
        %v779 = vpop.f32.mrf.mxu0
        %v780 = vadd.f32 %v433, %v779
        %v781 = vpop.f32.mrf.mxu0
        %v782 = vadd.f32 %v433, %v781
        %783 = vmatmul.bf16.gmra.mxu0 %v583
        %v784 = vpop.f32.mrf.mxu0
        %v785 = vadd.f32 %v433, %v784
        %v786 = vpop.f32.mrf.mxu0
        %v787 = vadd.f32 %v433, %v786
        %788 = vmatmul.bf16.gmra.mxu0 %v584
        %v789 = vpop.f32.mrf.mxu0
        %v790 = vadd.f32 %v433, %v789
        %v791 = vpop.f32.mrf.mxu0
        %v792 = vadd.f32 %v433, %v791
        %793 = vmatmul.bf16.gmra.mxu0 %v585
        %v794 = vpop.f32.mrf.mxu0
        %v795 = vadd.f32 %v433, %v794
        %v796 = vpop.f32.mrf.mxu0
        %v797 = vadd.f32 %v433, %v796
        %798 = vmatmul.bf16.gmra.mxu0 %v586
        %v799 = vpop.f32.mrf.mxu0
        %v800 = vadd.f32 %v433, %v799
        %v801 = vpop.f32.mrf.mxu0
        %v802 = vadd.f32 %v433, %v801
        %803 = vmatmul.bf16.gmra.mxu0 %v587
        %v804 = vpop.f32.mrf.mxu0
        %v805 = vadd.f32 %v433, %v804
        %v806 = vpop.f32.mrf.mxu0
        %v807 = vadd.f32 %v433, %v806
        %808 = vmatmul.bf16.gmra.mxu0 %v588
        %v809 = vpop.f32.mrf.mxu0
        %v810 = vadd.f32 %v433, %v809
        %v811 = vpop.f32.mrf.mxu0
        %v812 = vadd.f32 %v433, %v811
        %813 = vmatmul.bf16.gmra.mxu0 %v589
        %v814 = vpop.f32.mrf.mxu0
        %v815 = vadd.f32 %v433, %v814
        %v816 = vpop.f32.mrf.mxu0
        %v817 = vadd.f32 %v433, %v816
        %818 = vmatmul.bf16.gmra.mxu0 %v590
        %v819 = vpop.f32.mrf.mxu0
        %v820 = vadd.f32 %v433, %v819
        %v821 = vpop.f32.mrf.mxu0
        %v822 = vadd.f32 %v433, %v821
        %823 = vmatmul.bf16.gmra.mxu0 %v591
        %v824 = vpop.f32.mrf.mxu0
        %v825 = vadd.f32 %v433, %v824
        %v826 = vpop.f32.mrf.mxu0
        %v827 = vadd.f32 %v433, %v826
        %828 = vmatmul.bf16.gmra.mxu0 %v592
        %v829 = vpop.f32.mrf.mxu0
        %v830 = vadd.f32 %v433, %v829
        %v831 = vpop.f32.mrf.mxu0
        %v832 = vadd.f32 %v433, %v831
        %833 = vmatmul.bf16.gmra.mxu0 %v593
        %v834 = vpop.f32.mrf.mxu0
        %v835 = vadd.f32 %v433, %v834
        %v836 = vpop.f32.mrf.mxu0
        %v837 = vadd.f32 %v433, %v836
        %838 = vmatmul.bf16.gmra.mxu0 %v594
        %v839 = vpop.f32.mrf.mxu0
        %v840 = vadd.f32 %v433, %v839
        %v841 = vpop.f32.mrf.mxu0
        %v842 = vadd.f32 %v433, %v841
        %843 = vdwg.mxu0
        %v844 = vmax.f32 %v685, 0.0
        %v845 = vmax.f32 %v687, 0.0
        %v846 = vmax.f32 %v690, 0.0
        %v847 = vmax.f32 %v692, 0.0
        %v848 = vmax.f32 %v695, 0.0
        %v849 = vmax.f32 %v697, 0.0
        %v850 = vmax.f32 %v700, 0.0
        %v851 = vmax.f32 %v702, 0.0
        %v852 = vmax.f32 %v705, 0.0
        %v853 = vmax.f32 %v707, 0.0
        %v854 = vmax.f32 %v710, 0.0
        %v855 = vmax.f32 %v712, 0.0
        %v856 = vmax.f32 %v715, 0.0
        %v857 = vmax.f32 %v717, 0.0
        %v858 = vmax.f32 %v720, 0.0
        %v859 = vmax.f32 %v722, 0.0
        %v860 = vmax.f32 %v725, 0.0
        %v861 = vmax.f32 %v727, 0.0
        %v862 = vmax.f32 %v730, 0.0
        %v863 = vmax.f32 %v732, 0.0
        %v864 = vmax.f32 %v735, 0.0
        %v865 = vmax.f32 %v737, 0.0
        %v866 = vmax.f32 %v740, 0.0
        %v867 = vmax.f32 %v742, 0.0
        %v868 = vmax.f32 %v745, 0.0
        %v869 = vmax.f32 %v747, 0.0
        %v870 = vmax.f32 %v750, 0.0
        %v871 = vmax.f32 %v752, 0.0
        %v872 = vmax.f32 %v755, 0.0
        %v873 = vmax.f32 %v757, 0.0
        %v874 = vmax.f32 %v760, 0.0
        %v875 = vmax.f32 %v762, 0.0
        %v876 = vmax.f32 %v765, 0.0
        %v877 = vmax.f32 %v767, 0.0
        %v878 = vmax.f32 %v770, 0.0
        %v879 = vmax.f32 %v772, 0.0
        %v880 = vmax.f32 %v775, 0.0
        %v881 = vmax.f32 %v777, 0.0
        %v882 = vmax.f32 %v780, 0.0
        %v883 = vmax.f32 %v782, 0.0
        %v884 = vmax.f32 %v785, 0.0
        %v885 = vmax.f32 %v787, 0.0
        %v886 = vmax.f32 %v790, 0.0
        %v887 = vmax.f32 %v792, 0.0
        %v888 = vmax.f32 %v795, 0.0
        %v889 = vmax.f32 %v797, 0.0
        %v890 = vmax.f32 %v800, 0.0
        %v891 = vmax.f32 %v802, 0.0
        %v892 = vmax.f32 %v805, 0.0
        %v893 = vmax.f32 %v807, 0.0
        %v894 = vmax.f32 %v810, 0.0
        %v895 = vmax.f32 %v812, 0.0
        %v896 = vmax.f32 %v815, 0.0
        %v897 = vmax.f32 %v817, 0.0
        %v898 = vmax.f32 %v820, 0.0
        %v899 = vmax.f32 %v822, 0.0
        %v900 = vmax.f32 %v825, 0.0
        %v901 = vmax.f32 %v827, 0.0
        %v902 = vmax.f32 %v830, 0.0
        %v903 = vmax.f32 %v832, 0.0
        %v904 = vmax.f32 %v835, 0.0
        %v905 = vmax.f32 %v837, 0.0
        %v906 = vmax.f32 %v840, 0.0
        %v907 = vmax.f32 %v842, 0.0
        %v908 = vpack.c.bf16 %v845, %v844
        %v909 = vpack.c.bf16 %v847, %v846
        %v910 = vpack.c.bf16 %v849, %v848
        %v911 = vpack.c.bf16 %v851, %v850
        %v912 = vpack.c.bf16 %v853, %v852
        %v913 = vpack.c.bf16 %v855, %v854
        %v914 = vpack.c.bf16 %v857, %v856
        %v915 = vpack.c.bf16 %v859, %v858
        %v916 = vpack.c.bf16 %v861, %v860
        %v917 = vpack.c.bf16 %v863, %v862
        %v918 = vpack.c.bf16 %v865, %v864
        %v919 = vpack.c.bf16 %v867, %v866
        %v920 = vpack.c.bf16 %v869, %v868
        %v921 = vpack.c.bf16 %v871, %v870
        %v922 = vpack.c.bf16 %v873, %v872
        %v923 = vpack.c.bf16 %v875, %v874
        %v924 = vpack.c.bf16 %v877, %v876
        %v925 = vpack.c.bf16 %v879, %v878
        %v926 = vpack.c.bf16 %v881, %v880
        %v927 = vpack.c.bf16 %v883, %v882
        %v928 = vpack.c.bf16 %v885, %v884
        %v929 = vpack.c.bf16 %v887, %v886
        %v930 = vpack.c.bf16 %v889, %v888
        %v931 = vpack.c.bf16 %v891, %v890
        %v932 = vpack.c.bf16 %v893, %v892
        %v933 = vpack.c.bf16 %v895, %v894
        %v934 = vpack.c.bf16 %v897, %v896
        %v935 = vpack.c.bf16 %v899, %v898
        %v936 = vpack.c.bf16 %v901, %v900
        %v937 = vpack.c.bf16 %v903, %v902
        %v938 = vpack.c.bf16 %v905, %v904
        %v939 = vpack.c.bf16 %v907, %v906
        %v940 = vld [vmem:[#allocation7] sm:$0xf]
        %v941 = vld [vmem:[#allocation7 + $0x4] sm:$0xf]
        %v942 = vld [vmem:[#allocation7 + $0x8] sm:$0xf]
        %v943 = vld [vmem:[#allocation7 + $0xc] sm:$0xf]
        %v944 = vld [vmem:[#allocation7 + $0x10] sm:$0xf]
        %v945 = vld [vmem:[#allocation7 + $0x14] sm:$0xf]
        %v946 = vld [vmem:[#allocation7 + $0x18] sm:$0xf]
        %v947 = vld [vmem:[#allocation7 + $0x1c] sm:$0xf]
        %v948 = vld [vmem:[#allocation7 + $0x20] sm:$0xf]
        %v949 = vld [vmem:[#allocation7 + $0x24] sm:$0xf]
        %v950 = vld [vmem:[#allocation7 + $0x28] sm:$0xf]
        %v951 = vld [vmem:[#allocation7 + $0x2c] sm:$0xf]
        %v952 = vld [vmem:[#allocation7 + $0x30] sm:$0xf]
        %v953 = vld [vmem:[#allocation7 + $0x34] sm:$0xf]
        %v954 = vld [vmem:[#allocation7 + $0x38] sm:$0xf]
        %v955 = vld [vmem:[#allocation7 + $0x3c] sm:$0xf]
        %v956 = vld [vmem:[%s4] sm:$0x1]
        %v958 = vperm.slane %v956, 0
        %v976 = vunpack.c.l.b16 %v940
        %v977 = vunpack.c.l.b16 %v941
        %v978 = vunpack.c.l.b16 %v942
        %v979 = vunpack.c.l.b16 %v943
        %v980 = vunpack.c.l.b16 %v944
        %v981 = vunpack.c.l.b16 %v945
        %v982 = vunpack.c.l.b16 %v946
        %v983 = vunpack.c.l.b16 %v947
        %v984 = vunpack.c.l.b16 %v948
        %v985 = vunpack.c.l.b16 %v949
        %v986 = vunpack.c.l.b16 %v950
        %v987 = vunpack.c.l.b16 %v951
        %v988 = vunpack.c.l.b16 %v952
        %v989 = vunpack.c.l.b16 %v953
        %v990 = vunpack.c.l.b16 %v954
        %v991 = vunpack.c.l.b16 %v955
        %v992 = vpack.c.b16 %v977, %v976
        %v993 = vpack.c.b16 %v979, %v978
        %v994 = vpack.c.b16 %v981, %v980
        %v995 = vpack.c.b16 %v983, %v982
        %v996 = vpack.c.b16 %v985, %v984
        %v997 = vpack.c.b16 %v987, %v986
        %v998 = vpack.c.b16 %v989, %v988
        %v999 = vpack.c.b16 %v991, %v990
        %1008 = vmatpush.bf16.msra.mxu0 %v999
        %1009 = vmatpush.bf16.msra.mxu0 %v998
        %1010 = vmatpush.bf16.msra.mxu0 %v997
        %1011 = vmatpush.bf16.msra.mxu0 %v996
        %1012 = vmatpush.bf16.msra.mxu0 %v995
        %1013 = vmatpush.bf16.msra.mxu0 %v994
        %1014 = vmatpush.bf16.msra.mxu0 %v993
        %1015 = vmatpush.bf16.msra.mxu0 %v992
        %1016 = vmatmul.bf16.gmra.mxu0 %v908
        %v1017 = vpop.f32.mrf.mxu0
        %v1018 = vadd.f32 %v958, %v1017
        %v1019 = vpop.f32.mrf.mxu0
        %v1020 = vadd.f32 %v958, %v1019
        %1021 = vmatmul.bf16.gmra.mxu0 %v909
        %v1022 = vpop.f32.mrf.mxu0
        %v1023 = vadd.f32 %v958, %v1022
        %v1024 = vpop.f32.mrf.mxu0
        %v1025 = vadd.f32 %v958, %v1024
        %1026 = vmatmul.bf16.gmra.mxu0 %v910
        %v1027 = vpop.f32.mrf.mxu0
        %v1028 = vadd.f32 %v958, %v1027
        %v1029 = vpop.f32.mrf.mxu0
        %v1030 = vadd.f32 %v958, %v1029
        %1031 = vmatmul.bf16.gmra.mxu0 %v911
        %v1032 = vpop.f32.mrf.mxu0
        %v1033 = vadd.f32 %v958, %v1032
        %v1034 = vpop.f32.mrf.mxu0
        %v1035 = vadd.f32 %v958, %v1034
        %1036 = vmatmul.bf16.gmra.mxu0 %v912
        %v1037 = vpop.f32.mrf.mxu0
        %v1038 = vadd.f32 %v958, %v1037
        %v1039 = vpop.f32.mrf.mxu0
        %v1040 = vadd.f32 %v958, %v1039
        %1041 = vmatmul.bf16.gmra.mxu0 %v913
        %v1042 = vpop.f32.mrf.mxu0
        %v1043 = vadd.f32 %v958, %v1042
        %v1044 = vpop.f32.mrf.mxu0
        %v1045 = vadd.f32 %v958, %v1044
        %1046 = vmatmul.bf16.gmra.mxu0 %v914
        %v1047 = vpop.f32.mrf.mxu0
        %v1048 = vadd.f32 %v958, %v1047
        %v1049 = vpop.f32.mrf.mxu0
        %v1050 = vadd.f32 %v958, %v1049
        %1051 = vmatmul.bf16.gmra.mxu0 %v915
        %v1052 = vpop.f32.mrf.mxu0
        %v1053 = vadd.f32 %v958, %v1052
        %v1054 = vpop.f32.mrf.mxu0
        %v1055 = vadd.f32 %v958, %v1054
        %1056 = vmatmul.bf16.gmra.mxu0 %v916
        %v1057 = vpop.f32.mrf.mxu0
        %v1058 = vadd.f32 %v958, %v1057
        %v1059 = vpop.f32.mrf.mxu0
        %v1060 = vadd.f32 %v958, %v1059
        %1061 = vmatmul.bf16.gmra.mxu0 %v917
        %v1062 = vpop.f32.mrf.mxu0
        %v1063 = vadd.f32 %v958, %v1062
        %v1064 = vpop.f32.mrf.mxu0
        %v1065 = vadd.f32 %v958, %v1064
        %1066 = vmatmul.bf16.gmra.mxu0 %v918
        %v1067 = vpop.f32.mrf.mxu0
        %v1068 = vadd.f32 %v958, %v1067
        %v1069 = vpop.f32.mrf.mxu0
        %v1070 = vadd.f32 %v958, %v1069
        %1071 = vmatmul.bf16.gmra.mxu0 %v919
        %v1072 = vpop.f32.mrf.mxu0
        %v1073 = vadd.f32 %v958, %v1072
        %v1074 = vpop.f32.mrf.mxu0
        %v1075 = vadd.f32 %v958, %v1074
        %1076 = vmatmul.bf16.gmra.mxu0 %v920
        %v1077 = vpop.f32.mrf.mxu0
        %v1078 = vadd.f32 %v958, %v1077
        %v1079 = vpop.f32.mrf.mxu0
        %v1080 = vadd.f32 %v958, %v1079
        %1081 = vmatmul.bf16.gmra.mxu0 %v921
        %v1082 = vpop.f32.mrf.mxu0
        %v1083 = vadd.f32 %v958, %v1082
        %v1084 = vpop.f32.mrf.mxu0
        %v1085 = vadd.f32 %v958, %v1084
        %1086 = vmatmul.bf16.gmra.mxu0 %v922
        %v1087 = vpop.f32.mrf.mxu0
        %v1088 = vadd.f32 %v958, %v1087
        %v1089 = vpop.f32.mrf.mxu0
        %v1090 = vadd.f32 %v958, %v1089
        %1091 = vmatmul.bf16.gmra.mxu0 %v923
        %v1092 = vpop.f32.mrf.mxu0
        %v1093 = vadd.f32 %v958, %v1092
        %v1094 = vpop.f32.mrf.mxu0
        %v1095 = vadd.f32 %v958, %v1094
        %1096 = vmatmul.bf16.gmra.mxu0 %v924
        %v1097 = vpop.f32.mrf.mxu0
        %v1098 = vadd.f32 %v958, %v1097
        %v1099 = vpop.f32.mrf.mxu0
        %v1100 = vadd.f32 %v958, %v1099
        %1101 = vmatmul.bf16.gmra.mxu0 %v925
        %v1102 = vpop.f32.mrf.mxu0
        %v1103 = vadd.f32 %v958, %v1102
        %v1104 = vpop.f32.mrf.mxu0
        %v1105 = vadd.f32 %v958, %v1104
        %1106 = vmatmul.bf16.gmra.mxu0 %v926
        %v1107 = vpop.f32.mrf.mxu0
        %v1108 = vadd.f32 %v958, %v1107
        %v1109 = vpop.f32.mrf.mxu0
        %v1110 = vadd.f32 %v958, %v1109
        %1111 = vmatmul.bf16.gmra.mxu0 %v927
        %v1112 = vpop.f32.mrf.mxu0
        %v1113 = vadd.f32 %v958, %v1112
        %v1114 = vpop.f32.mrf.mxu0
        %v1115 = vadd.f32 %v958, %v1114
        %1116 = vmatmul.bf16.gmra.mxu0 %v928
        %v1117 = vpop.f32.mrf.mxu0
        %v1118 = vadd.f32 %v958, %v1117
        %v1119 = vpop.f32.mrf.mxu0
        %v1120 = vadd.f32 %v958, %v1119
        %1121 = vmatmul.bf16.gmra.mxu0 %v929
        %v1122 = vpop.f32.mrf.mxu0
        %v1123 = vadd.f32 %v958, %v1122
        %v1124 = vpop.f32.mrf.mxu0
        %v1125 = vadd.f32 %v958, %v1124
        %1126 = vmatmul.bf16.gmra.mxu0 %v930
        %v1127 = vpop.f32.mrf.mxu0
        %v1128 = vadd.f32 %v958, %v1127
        %v1129 = vpop.f32.mrf.mxu0
        %v1130 = vadd.f32 %v958, %v1129
        %1131 = vmatmul.bf16.gmra.mxu0 %v931
        %v1132 = vpop.f32.mrf.mxu0
        %v1133 = vadd.f32 %v958, %v1132
        %v1134 = vpop.f32.mrf.mxu0
        %v1135 = vadd.f32 %v958, %v1134
        %1136 = vmatmul.bf16.gmra.mxu0 %v932
        %v1137 = vpop.f32.mrf.mxu0
        %v1138 = vadd.f32 %v958, %v1137
        %v1139 = vpop.f32.mrf.mxu0
        %v1140 = vadd.f32 %v958, %v1139
        %1141 = vmatmul.bf16.gmra.mxu0 %v933
        %v1142 = vpop.f32.mrf.mxu0
        %v1143 = vadd.f32 %v958, %v1142
        %v1144 = vpop.f32.mrf.mxu0
        %v1145 = vadd.f32 %v958, %v1144
        %1146 = vmatmul.bf16.gmra.mxu0 %v934
        %v1147 = vpop.f32.mrf.mxu0
        %v1148 = vadd.f32 %v958, %v1147
        %v1149 = vpop.f32.mrf.mxu0
        %v1150 = vadd.f32 %v958, %v1149
        %1151 = vmatmul.bf16.gmra.mxu0 %v935
        %v1152 = vpop.f32.mrf.mxu0
        %v1153 = vadd.f32 %v958, %v1152
        %v1154 = vpop.f32.mrf.mxu0
        %v1155 = vadd.f32 %v958, %v1154
        %1156 = vmatmul.bf16.gmra.mxu0 %v936
        %v1157 = vpop.f32.mrf.mxu0
        %v1158 = vadd.f32 %v958, %v1157
        %v1159 = vpop.f32.mrf.mxu0
        %v1160 = vadd.f32 %v958, %v1159
        %1161 = vmatmul.bf16.gmra.mxu0 %v937
        %v1162 = vpop.f32.mrf.mxu0
        %v1163 = vadd.f32 %v958, %v1162
        %v1164 = vpop.f32.mrf.mxu0
        %v1165 = vadd.f32 %v958, %v1164
        %1166 = vmatmul.bf16.gmra.mxu0 %v938
        %v1167 = vpop.f32.mrf.mxu0
        %v1168 = vadd.f32 %v958, %v1167
        %v1169 = vpop.f32.mrf.mxu0
        %v1170 = vadd.f32 %v958, %v1169
        %1171 = vmatmul.bf16.gmra.mxu0 %v939
        %v1172 = vpop.f32.mrf.mxu0
        %v1173 = vadd.f32 %v958, %v1172
        %v1174 = vpop.f32.mrf.mxu0
        %v1175 = vadd.f32 %v958, %v1174
        %1176 = vdwg.mxu0
        %v1177 = vmax.f32 %v1018, 0.0
        %v1178 = vmax.f32 %v1020, 0.0
        %v1179 = vmax.f32 %v1023, 0.0
        %v1180 = vmax.f32 %v1025, 0.0
        %v1181 = vmax.f32 %v1028, 0.0
        %v1182 = vmax.f32 %v1030, 0.0
        %v1183 = vmax.f32 %v1033, 0.0
        %v1184 = vmax.f32 %v1035, 0.0
        %v1185 = vmax.f32 %v1038, 0.0
        %v1186 = vmax.f32 %v1040, 0.0
        %v1187 = vmax.f32 %v1043, 0.0
        %v1188 = vmax.f32 %v1045, 0.0
        %v1189 = vmax.f32 %v1048, 0.0
        %v1190 = vmax.f32 %v1050, 0.0
        %v1191 = vmax.f32 %v1053, 0.0
        %v1192 = vmax.f32 %v1055, 0.0
        %v1193 = vmax.f32 %v1058, 0.0
        %v1194 = vmax.f32 %v1060, 0.0
        %v1195 = vmax.f32 %v1063, 0.0
        %v1196 = vmax.f32 %v1065, 0.0
        %v1197 = vmax.f32 %v1068, 0.0
        %v1198 = vmax.f32 %v1070, 0.0
        %v1199 = vmax.f32 %v1073, 0.0
        %v1200 = vmax.f32 %v1075, 0.0
        %v1201 = vmax.f32 %v1078, 0.0
        %v1202 = vmax.f32 %v1080, 0.0
        %v1203 = vmax.f32 %v1083, 0.0
        %v1204 = vmax.f32 %v1085, 0.0
        %v1205 = vmax.f32 %v1088, 0.0
        %v1206 = vmax.f32 %v1090, 0.0
        %v1207 = vmax.f32 %v1093, 0.0
        %v1208 = vmax.f32 %v1095, 0.0
        %v1209 = vmax.f32 %v1098, 0.0
        %v1210 = vmax.f32 %v1100, 0.0
        %v1211 = vmax.f32 %v1103, 0.0
        %v1212 = vmax.f32 %v1105, 0.0
        %v1213 = vmax.f32 %v1108, 0.0
        %v1214 = vmax.f32 %v1110, 0.0
        %v1215 = vmax.f32 %v1113, 0.0
        %v1216 = vmax.f32 %v1115, 0.0
        %v1217 = vmax.f32 %v1118, 0.0
        %v1218 = vmax.f32 %v1120, 0.0
        %v1219 = vmax.f32 %v1123, 0.0
        %v1220 = vmax.f32 %v1125, 0.0
        %v1221 = vmax.f32 %v1128, 0.0
        %v1222 = vmax.f32 %v1130, 0.0
        %v1223 = vmax.f32 %v1133, 0.0
        %v1224 = vmax.f32 %v1135, 0.0
        %v1225 = vmax.f32 %v1138, 0.0
        %v1226 = vmax.f32 %v1140, 0.0
        %v1227 = vmax.f32 %v1143, 0.0
        %v1228 = vmax.f32 %v1145, 0.0
        %v1229 = vmax.f32 %v1148, 0.0
        %v1230 = vmax.f32 %v1150, 0.0
        %v1231 = vmax.f32 %v1153, 0.0
        %v1232 = vmax.f32 %v1155, 0.0
        %v1233 = vmax.f32 %v1158, 0.0
        %v1234 = vmax.f32 %v1160, 0.0
        %v1235 = vmax.f32 %v1163, 0.0
        %v1236 = vmax.f32 %v1165, 0.0
        %v1237 = vmax.f32 %v1168, 0.0
        %v1238 = vmax.f32 %v1170, 0.0
        %v1239 = vmax.f32 %v1173, 0.0
        %v1240 = vmax.f32 %v1175, 0.0
        %v1241 = vpack.c.bf16 %v1178, %v1177
        %v1242 = vpack.c.bf16 %v1180, %v1179
        %v1243 = vpack.c.bf16 %v1182, %v1181
        %v1244 = vpack.c.bf16 %v1184, %v1183
        %v1245 = vpack.c.bf16 %v1186, %v1185
        %v1246 = vpack.c.bf16 %v1188, %v1187
        %v1247 = vpack.c.bf16 %v1190, %v1189
        %v1248 = vpack.c.bf16 %v1192, %v1191
        %v1249 = vpack.c.bf16 %v1194, %v1193
        %v1250 = vpack.c.bf16 %v1196, %v1195
        %v1251 = vpack.c.bf16 %v1198, %v1197
        %v1252 = vpack.c.bf16 %v1200, %v1199
        %v1253 = vpack.c.bf16 %v1202, %v1201
        %v1254 = vpack.c.bf16 %v1204, %v1203
        %v1255 = vpack.c.bf16 %v1206, %v1205
        %v1256 = vpack.c.bf16 %v1208, %v1207
        %v1257 = vpack.c.bf16 %v1210, %v1209
        %v1258 = vpack.c.bf16 %v1212, %v1211
        %v1259 = vpack.c.bf16 %v1214, %v1213
        %v1260 = vpack.c.bf16 %v1216, %v1215
        %v1261 = vpack.c.bf16 %v1218, %v1217
        %v1262 = vpack.c.bf16 %v1220, %v1219
        %v1263 = vpack.c.bf16 %v1222, %v1221
        %v1264 = vpack.c.bf16 %v1224, %v1223
        %v1265 = vpack.c.bf16 %v1226, %v1225
        %v1266 = vpack.c.bf16 %v1228, %v1227
        %v1267 = vpack.c.bf16 %v1230, %v1229
        %v1268 = vpack.c.bf16 %v1232, %v1231
        %v1269 = vpack.c.bf16 %v1234, %v1233
        %v1270 = vpack.c.bf16 %v1236, %v1235
        %v1271 = vpack.c.bf16 %v1238, %v1237
        %v1272 = vpack.c.bf16 %v1240, %v1239
        %v1273 = vld [vmem:[#allocation8] sm:$0xf]
        %v1274 = vld [vmem:[#allocation8 + $0x4] sm:$0xf]
        %v1275 = vld [vmem:[#allocation8 + $0x8] sm:$0xf]
        %v1276 = vld [vmem:[#allocation8 + $0xc] sm:$0xf]
        %v1277 = vld [vmem:[#allocation8 + $0x10] sm:$0xf]
        %v1278 = vld [vmem:[#allocation8 + $0x14] sm:$0xf]
        %v1279 = vld [vmem:[#allocation8 + $0x18] sm:$0xf]
        %v1280 = vld [vmem:[#allocation8 + $0x1c] sm:$0xf]
        %v1281 = vld [vmem:[#allocation8 + $0x20] sm:$0xf]
        %v1282 = vld [vmem:[#allocation8 + $0x24] sm:$0xf]
        %v1283 = vld [vmem:[#allocation8 + $0x28] sm:$0xf]
        %v1284 = vld [vmem:[#allocation8 + $0x2c] sm:$0xf]
        %v1285 = vld [vmem:[#allocation8 + $0x30] sm:$0xf]
        %v1286 = vld [vmem:[#allocation8 + $0x34] sm:$0xf]
        %v1287 = vld [vmem:[#allocation8 + $0x38] sm:$0xf]
        %v1288 = vld [vmem:[#allocation8 + $0x3c] sm:$0xf]
        %v1289 = vld [vmem:[%s6] sm:$0x1]
        %v1291 = vperm.slane %v1289, 0
        %v1309 = vunpack.c.l.b16 %v1273
        %v1310 = vunpack.c.l.b16 %v1274
        %v1311 = vunpack.c.l.b16 %v1275
        %v1312 = vunpack.c.l.b16 %v1276
        %v1313 = vunpack.c.l.b16 %v1277
        %v1314 = vunpack.c.l.b16 %v1278
        %v1315 = vunpack.c.l.b16 %v1279
        %v1316 = vunpack.c.l.b16 %v1280
        %v1317 = vunpack.c.l.b16 %v1281
        %v1318 = vunpack.c.l.b16 %v1282
        %v1319 = vunpack.c.l.b16 %v1283
        %v1320 = vunpack.c.l.b16 %v1284
        %v1321 = vunpack.c.l.b16 %v1285
        %v1322 = vunpack.c.l.b16 %v1286
        %v1323 = vunpack.c.l.b16 %v1287
        %v1324 = vunpack.c.l.b16 %v1288
        %v1325 = vpack.c.b16 %v1310, %v1309
        %v1326 = vpack.c.b16 %v1312, %v1311
        %v1327 = vpack.c.b16 %v1314, %v1313
        %v1328 = vpack.c.b16 %v1316, %v1315
        %v1329 = vpack.c.b16 %v1318, %v1317
        %v1330 = vpack.c.b16 %v1320, %v1319
        %v1331 = vpack.c.b16 %v1322, %v1321
        %v1332 = vpack.c.b16 %v1324, %v1323
        %1341 = vmatpush.bf16.msra.mxu0 %v1332
        %1342 = vmatpush.bf16.msra.mxu0 %v1331
        %1343 = vmatpush.bf16.msra.mxu0 %v1330
        %1344 = vmatpush.bf16.msra.mxu0 %v1329
        %1345 = vmatpush.bf16.msra.mxu0 %v1328
        %1346 = vmatpush.bf16.msra.mxu0 %v1327
        %1347 = vmatpush.bf16.msra.mxu0 %v1326
        %1348 = vmatpush.bf16.msra.mxu0 %v1325
        %1349 = vmatmul.bf16.gmra.mxu0 %v1241
        %v1350 = vpop.f32.mrf.mxu0
        %v1351 = vadd.f32 %v1291, %v1350
        %v1352 = vpop.f32.mrf.mxu0
        %v1353 = vadd.f32 %v1291, %v1352
        %1354 = vmatmul.bf16.gmra.mxu0 %v1242
        %v1355 = vpop.f32.mrf.mxu0
        %v1356 = vadd.f32 %v1291, %v1355
        %v1357 = vpop.f32.mrf.mxu0
        %v1358 = vadd.f32 %v1291, %v1357
        %1359 = vmatmul.bf16.gmra.mxu0 %v1243
        %v1360 = vpop.f32.mrf.mxu0
        %v1361 = vadd.f32 %v1291, %v1360
        %v1362 = vpop.f32.mrf.mxu0
        %v1363 = vadd.f32 %v1291, %v1362
        %1364 = vmatmul.bf16.gmra.mxu0 %v1244
        %v1365 = vpop.f32.mrf.mxu0
        %v1366 = vadd.f32 %v1291, %v1365
        %v1367 = vpop.f32.mrf.mxu0
        %v1368 = vadd.f32 %v1291, %v1367
        %1369 = vmatmul.bf16.gmra.mxu0 %v1245
        %v1370 = vpop.f32.mrf.mxu0
        %v1371 = vadd.f32 %v1291, %v1370
        %v1372 = vpop.f32.mrf.mxu0
        %v1373 = vadd.f32 %v1291, %v1372
        %1374 = vmatmul.bf16.gmra.mxu0 %v1246
        %v1375 = vpop.f32.mrf.mxu0
        %v1376 = vadd.f32 %v1291, %v1375
        %v1377 = vpop.f32.mrf.mxu0
        %v1378 = vadd.f32 %v1291, %v1377
        %1379 = vmatmul.bf16.gmra.mxu0 %v1247
        %v1380 = vpop.f32.mrf.mxu0
        %v1381 = vadd.f32 %v1291, %v1380
        %v1382 = vpop.f32.mrf.mxu0
        %v1383 = vadd.f32 %v1291, %v1382
        %1384 = vmatmul.bf16.gmra.mxu0 %v1248
        %v1385 = vpop.f32.mrf.mxu0
        %v1386 = vadd.f32 %v1291, %v1385
        %v1387 = vpop.f32.mrf.mxu0
        %v1388 = vadd.f32 %v1291, %v1387
        %1389 = vmatmul.bf16.gmra.mxu0 %v1249
        %v1390 = vpop.f32.mrf.mxu0
        %v1391 = vadd.f32 %v1291, %v1390
        %v1392 = vpop.f32.mrf.mxu0
        %v1393 = vadd.f32 %v1291, %v1392
        %1394 = vmatmul.bf16.gmra.mxu0 %v1250
        %v1395 = vpop.f32.mrf.mxu0
        %v1396 = vadd.f32 %v1291, %v1395
        %v1397 = vpop.f32.mrf.mxu0
        %v1398 = vadd.f32 %v1291, %v1397
        %1399 = vmatmul.bf16.gmra.mxu0 %v1251
        %v1400 = vpop.f32.mrf.mxu0
        %v1401 = vadd.f32 %v1291, %v1400
        %v1402 = vpop.f32.mrf.mxu0
        %v1403 = vadd.f32 %v1291, %v1402
        %1404 = vmatmul.bf16.gmra.mxu0 %v1252
        %v1405 = vpop.f32.mrf.mxu0
        %v1406 = vadd.f32 %v1291, %v1405
        %v1407 = vpop.f32.mrf.mxu0
        %v1408 = vadd.f32 %v1291, %v1407
        %1409 = vmatmul.bf16.gmra.mxu0 %v1253
        %v1410 = vpop.f32.mrf.mxu0
        %v1411 = vadd.f32 %v1291, %v1410
        %v1412 = vpop.f32.mrf.mxu0
        %v1413 = vadd.f32 %v1291, %v1412
        %1414 = vmatmul.bf16.gmra.mxu0 %v1254
        %v1415 = vpop.f32.mrf.mxu0
        %v1416 = vadd.f32 %v1291, %v1415
        %v1417 = vpop.f32.mrf.mxu0
        %v1418 = vadd.f32 %v1291, %v1417
        %1419 = vmatmul.bf16.gmra.mxu0 %v1255
        %v1420 = vpop.f32.mrf.mxu0
        %v1421 = vadd.f32 %v1291, %v1420
        %v1422 = vpop.f32.mrf.mxu0
        %v1423 = vadd.f32 %v1291, %v1422
        %1424 = vmatmul.bf16.gmra.mxu0 %v1256
        %v1425 = vpop.f32.mrf.mxu0
        %v1426 = vadd.f32 %v1291, %v1425
        %v1427 = vpop.f32.mrf.mxu0
        %v1428 = vadd.f32 %v1291, %v1427
        %1429 = vmatmul.bf16.gmra.mxu0 %v1257
        %v1430 = vpop.f32.mrf.mxu0
        %v1431 = vadd.f32 %v1291, %v1430
        %v1432 = vpop.f32.mrf.mxu0
        %v1433 = vadd.f32 %v1291, %v1432
        %1434 = vmatmul.bf16.gmra.mxu0 %v1258
        %v1435 = vpop.f32.mrf.mxu0
        %v1436 = vadd.f32 %v1291, %v1435
        %v1437 = vpop.f32.mrf.mxu0
        %v1438 = vadd.f32 %v1291, %v1437
        %1439 = vmatmul.bf16.gmra.mxu0 %v1259
        %v1440 = vpop.f32.mrf.mxu0
        %v1441 = vadd.f32 %v1291, %v1440
        %v1442 = vpop.f32.mrf.mxu0
        %v1443 = vadd.f32 %v1291, %v1442
        %1444 = vmatmul.bf16.gmra.mxu0 %v1260
        %v1445 = vpop.f32.mrf.mxu0
        %v1446 = vadd.f32 %v1291, %v1445
        %v1447 = vpop.f32.mrf.mxu0
        %v1448 = vadd.f32 %v1291, %v1447
        %1449 = vmatmul.bf16.gmra.mxu0 %v1261
        %v1450 = vpop.f32.mrf.mxu0
        %v1451 = vadd.f32 %v1291, %v1450
        %v1452 = vpop.f32.mrf.mxu0
        %v1453 = vadd.f32 %v1291, %v1452
        %1454 = vmatmul.bf16.gmra.mxu0 %v1262
        %v1455 = vpop.f32.mrf.mxu0
        %v1456 = vadd.f32 %v1291, %v1455
        %v1457 = vpop.f32.mrf.mxu0
        %v1458 = vadd.f32 %v1291, %v1457
        %1459 = vmatmul.bf16.gmra.mxu0 %v1263
        %v1460 = vpop.f32.mrf.mxu0
        %v1461 = vadd.f32 %v1291, %v1460
        %v1462 = vpop.f32.mrf.mxu0
        %v1463 = vadd.f32 %v1291, %v1462
        %1464 = vmatmul.bf16.gmra.mxu0 %v1264
        %v1465 = vpop.f32.mrf.mxu0
        %v1466 = vadd.f32 %v1291, %v1465
        %v1467 = vpop.f32.mrf.mxu0
        %v1468 = vadd.f32 %v1291, %v1467
        %1469 = vmatmul.bf16.gmra.mxu0 %v1265
        %v1470 = vpop.f32.mrf.mxu0
        %v1471 = vadd.f32 %v1291, %v1470
        %v1472 = vpop.f32.mrf.mxu0
        %v1473 = vadd.f32 %v1291, %v1472
        %1474 = vmatmul.bf16.gmra.mxu0 %v1266
        %v1475 = vpop.f32.mrf.mxu0
        %v1476 = vadd.f32 %v1291, %v1475
        %v1477 = vpop.f32.mrf.mxu0
        %v1478 = vadd.f32 %v1291, %v1477
        %1479 = vmatmul.bf16.gmra.mxu0 %v1267
        %v1480 = vpop.f32.mrf.mxu0
        %v1481 = vadd.f32 %v1291, %v1480
        %v1482 = vpop.f32.mrf.mxu0
        %v1483 = vadd.f32 %v1291, %v1482
        %1484 = vmatmul.bf16.gmra.mxu0 %v1268
        %v1485 = vpop.f32.mrf.mxu0
        %v1486 = vadd.f32 %v1291, %v1485
        %v1487 = vpop.f32.mrf.mxu0
        %v1488 = vadd.f32 %v1291, %v1487
        %1489 = vmatmul.bf16.gmra.mxu0 %v1269
        %v1490 = vpop.f32.mrf.mxu0
        %v1491 = vadd.f32 %v1291, %v1490
        %v1492 = vpop.f32.mrf.mxu0
        %v1493 = vadd.f32 %v1291, %v1492
        %1494 = vmatmul.bf16.gmra.mxu0 %v1270
        %v1495 = vpop.f32.mrf.mxu0
        %v1496 = vadd.f32 %v1291, %v1495
        %v1497 = vpop.f32.mrf.mxu0
        %v1498 = vadd.f32 %v1291, %v1497
        %1499 = vmatmul.bf16.gmra.mxu0 %v1271
        %v1500 = vpop.f32.mrf.mxu0
        %v1501 = vadd.f32 %v1291, %v1500
        %v1502 = vpop.f32.mrf.mxu0
        %v1503 = vadd.f32 %v1291, %v1502
        %1504 = vmatmul.bf16.gmra.mxu0 %v1272
        %v1505 = vpop.f32.mrf.mxu0
        %v1506 = vadd.f32 %v1291, %v1505
        %v1507 = vpop.f32.mrf.mxu0
        %v1508 = vadd.f32 %v1291, %v1507
        %1509 = vdwg.mxu0
        %1510 = vst [vmem:[%s348] sm:$0xff] %v1351
        %1511 = vst [vmem:[%s348 + $0x8] sm:$0xff] %v1353
        %1512 = vst [vmem:[%s348 + $0x10] sm:$0xff] %v1356
        %1513 = vst [vmem:[%s348 + $0x18] sm:$0xff] %v1358
        %1514 = vst [vmem:[%s348 + $0x20] sm:$0xff] %v1361
        %1515 = vst [vmem:[%s348 + $0x28] sm:$0xff] %v1363
        %1516 = vst [vmem:[%s348 + $0x30] sm:$0xff] %v1366
        %1517 = vst [vmem:[%s348 + $0x38] sm:$0xff] %v1368
        %1518 = vst [vmem:[%s348 + $0x40] sm:$0xff] %v1371
        %1519 = vst [vmem:[%s348 + $0x48] sm:$0xff] %v1373
        %1520 = vst [vmem:[%s348 + $0x50] sm:$0xff] %v1376
        %1521 = vst [vmem:[%s348 + $0x58] sm:$0xff] %v1378
        %1522 = vst [vmem:[%s348 + $0x60] sm:$0xff] %v1381
        %1523 = vst [vmem:[%s348 + $0x68] sm:$0xff] %v1383
        %1524 = vst [vmem:[%s348 + $0x70] sm:$0xff] %v1386
        %1525 = vst [vmem:[%s348 + $0x78] sm:$0xff] %v1388
        %1526 = vst [vmem:[%s348 + $0x80] sm:$0xff] %v1391
        %1527 = vst [vmem:[%s348 + $0x88] sm:$0xff] %v1393
        %1528 = vst [vmem:[%s348 + $0x90] sm:$0xff] %v1396
        %1529 = vst [vmem:[%s348 + $0x98] sm:$0xff] %v1398
        %1530 = vst [vmem:[%s348 + $0xa0] sm:$0xff] %v1401
        %1531 = vst [vmem:[%s348 + $0xa8] sm:$0xff] %v1403
        %1532 = vst [vmem:[%s348 + $0xb0] sm:$0xff] %v1406
        %1533 = vst [vmem:[%s348 + $0xb8] sm:$0xff] %v1408
        %1534 = vst [vmem:[%s348 + $0xc0] sm:$0xff] %v1411
        %1535 = vst [vmem:[%s348 + $0xc8] sm:$0xff] %v1413
        %1536 = vst [vmem:[%s348 + $0xd0] sm:$0xff] %v1416
        %1537 = vst [vmem:[%s348 + $0xd8] sm:$0xff] %v1418
        %1538 = vst [vmem:[%s348 + $0xe0] sm:$0xff] %v1421
        %1539 = vst [vmem:[%s348 + $0xe8] sm:$0xff] %v1423
        %1540 = vst [vmem:[%s348 + $0xf0] sm:$0xff] %v1426
        %1541 = vst [vmem:[%s348 + $0xf8] sm:$0xff] %v1428
        %1542 = vst [vmem:[%s348 + $0x100] sm:$0xff] %v1431
        %1543 = vst [vmem:[%s348 + $0x108] sm:$0xff] %v1433
        %1544 = vst [vmem:[%s348 + $0x110] sm:$0xff] %v1436
        %1545 = vst [vmem:[%s348 + $0x118] sm:$0xff] %v1438
        %1546 = vst [vmem:[%s348 + $0x120] sm:$0xff] %v1441
        %1547 = vst [vmem:[%s348 + $0x128] sm:$0xff] %v1443
        %1548 = vst [vmem:[%s348 + $0x130] sm:$0xff] %v1446
        %1549 = vst [vmem:[%s348 + $0x138] sm:$0xff] %v1448
        %1550 = vst [vmem:[%s348 + $0x140] sm:$0xff] %v1451
        %1551 = vst [vmem:[%s348 + $0x148] sm:$0xff] %v1453
        %1552 = vst [vmem:[%s348 + $0x150] sm:$0xff] %v1456
        %1553 = vst [vmem:[%s348 + $0x158] sm:$0xff] %v1458
        %1554 = vst [vmem:[%s348 + $0x160] sm:$0xff] %v1461
        %1555 = vst [vmem:[%s348 + $0x168] sm:$0xff] %v1463
        %1556 = vst [vmem:[%s348 + $0x170] sm:$0xff] %v1466
        %1557 = vst [vmem:[%s348 + $0x178] sm:$0xff] %v1468
        %1558 = vst [vmem:[%s348 + $0x180] sm:$0xff] %v1471
        %1559 = vst [vmem:[%s348 + $0x188] sm:$0xff] %v1473
        %1560 = vst [vmem:[%s348 + $0x190] sm:$0xff] %v1476
        %1561 = vst [vmem:[%s348 + $0x198] sm:$0xff] %v1478
        %1562 = vst [vmem:[%s348 + $0x1a0] sm:$0xff] %v1481
        %1563 = vst [vmem:[%s348 + $0x1a8] sm:$0xff] %v1483
        %1564 = vst [vmem:[%s348 + $0x1b0] sm:$0xff] %v1486
        %1565 = vst [vmem:[%s348 + $0x1b8] sm:$0xff] %v1488
        %1566 = vst [vmem:[%s348 + $0x1c0] sm:$0xff] %v1491
        %1567 = vst [vmem:[%s348 + $0x1c8] sm:$0xff] %v1493
        %1568 = vst [vmem:[%s348 + $0x1d0] sm:$0xff] %v1496
        %1569 = vst [vmem:[%s348 + $0x1d8] sm:$0xff] %v1498
        %1570 = vst [vmem:[%s348 + $0x1e0] sm:$0xff] %v1501
        %1571 = vst [vmem:[%s348 + $0x1e8] sm:$0xff] %v1503
        %1572 = vst [vmem:[%s348 + $0x1f0] sm:$0xff] %v1506
        %1573 = vst [vmem:[%s348 + $0x1f8] sm:$0xff] %v1508
        %s1574 = sand.u32 %s186, 1
        %s1575 = scalar_lea.sflag [#allocation4], %s1574
        %s1576 = sand.u32 %s186, 1
        %s1577 = smul.addr %s1576, 512
        %s1578 = scalar_lea.vmem [#allocation10], %s1577
        // Predicated region
        $region65: #{tpu_custom_call.1} parent=47 // pred_check
          %p1579 = pneg %p196
        $region66: #{tpu_custom_call.1} parent=47 // pred_check_branch
          %1581 = sbr.rel (%p1579) target = $region68
        $region67: #{tpu_custom_call.1} parent=47 // pred_region
          %s1582 = smul.u32 64, %s26
          %1584 = vsyncadd %s1575, 0
          %s1585 = smul.addr %s1582, 8
          %s1586 = scalar_lea.hbm %s7, %s1585
          %s1587 = sshll.u32 %s1578, 4
          %s1588 = int_to_ptr.vmem [resolvable:$true] %s1587
          %s1589 = sshll.u32 %s1586, 4
          %s1590 = int_to_ptr.hbm [resolvable:$true] %s1589
          %1595 = dma.vmem_to_hbm [thread:$0]  %s1588, 8192, %s1590, %s1575, 128, 128, 8
        $region68: #{tpu_custom_call.1} parent=47 // pred_fallthru
          _
      $region48: #{tpu_custom_call.1} parent=5 // pred_fallthru
        _
      %p1596 = scmp.le.s32.totalorder 2, %s21
      // Predicated region
      $region69: #{tpu_custom_call.1} parent=5 // pred_check
        %p1597 = pneg %p1596
      $region70: #{tpu_custom_call.1} parent=5 // pred_check_branch
        %1599 = sbr.rel (%p1597) target = $region72
      $region71: #{tpu_custom_call.1} parent=5 // pred_region
        %s1600 = ssub.s32 %s21, 2
        // Predicated region
        $region73: #{tpu_custom_call.1} parent=71 // pred_check
          %p1601 = pneg %p202
        $region74: #{tpu_custom_call.1} parent=71 // pred_check_branch
          %1603 = sbr.rel (%p1601) target = $region76
        $region75: #{tpu_custom_call.1} parent=71 // pred_region
          %s1604 = sand.u32 %s187, 1
          %s1605 = scalar_lea.sflag [#allocation4], %s1604
          %s1606 = sand.u32 %s187, 1
          %s1607 = smul.addr %s1606, 512
          %s1608 = scalar_lea.vmem [#allocation10], %s1607
          %1610 = dma.done %s1605, 8192
        $region76: #{tpu_custom_call.1} parent=71 // pred_fallthru
          _
      $region72: #{tpu_custom_call.1} parent=5 // pred_fallthru
        _
    $region6: #{tpu_custom_call.1} parent=1 // loop_footer
      %s25 = sadd.s32 1, %s21
    $region7: #{tpu_custom_call.1} parent=1 // loop_footer_branch
      %20 = sbr.rel target = $region3
    $region8: #{tpu_custom_call.1} parent=1 // loop_exit
      _
    %1611 = vsyncpa [#allocation3], 1
    %s1612 = scalar_lea.sflag [#allocation3], 1
    %1613 = vsyncpa %s1612, 1
    %1614 = vsyncpa [#allocation6], 1
    %1615 = vsyncpa [#allocation9], 1
    %1616 = vsyncpa [#allocation4], 1
    %s1617 = scalar_lea.sflag [#allocation4], 1
    %1618 = vsyncpa %s1617, 1

</llo_original>
